<compile_context>
chip_gen: v7x
topology: tpu7x:2x2x1
jax: 0.10.0
libtpu: 0.0.40
codegen_flags: <defaults>
</compile_context>

<pallas_src>
import numpy as np
import jax
import jax.numpy as jnp
from jax.experimental import pallas as pl
from jax.experimental.pallas import tpu as pltpu


def _shifted_dft_mats(n):
    """Complex (A, Ainv) such that along a length-n axis:
         A    @ x == fftshift(fft(ifftshift(x), norm='ortho'))
         Ainv @ k == ifftshift(ifft(fftshift(k), norm='ortho'))
    """
    j = np.arange(n)
    F = np.exp(-2j * np.pi * np.outer(j, j) / n) / np.sqrt(n)     # ortho DFT
    Fi = np.exp(+2j * np.pi * np.outer(j, j) / n) / np.sqrt(n)    # ortho IDFT
    S = np.fft.fftshift(np.eye(n), axes=0)                        # fftshift permutation
    Si = np.fft.ifftshift(np.eye(n), axes=0)                      # ifftshift permutation
    A = S @ F @ Si
    Ainv = Si @ Fi @ S
    return A.astype(np.complex64), Ainv.astype(np.complex64)


def _packed_right_mat(T):
    """Real (2n,2n) block matrix Tb such that [Xr | Xi] @ Tb == [Re(X@T) | Im(X@T)]."""
    Tr, Ti = np.real(T), np.imag(T)
    return np.block([[Tr, Ti], [-Ti, Tr]]).astype(np.float32)


def _pick_tb(B, H, W):
    """Slices per block: divisor of B, big enough to fill MXU rows (TB*H>=~256),
    small enough that the double-buffered tiled blocks stay under ~8 MiB, and
    keeping >=2 grid steps for megacore / dual-TC sharding when possible."""
    slice_bytes = 3 * (2 * H * W) * 4                  # xp + bpt + out tiles, f32
    cap = max(1, (8 << 20) // (2 * slice_bytes))       # double-buffered block <= ~8 MiB
    divs = [d for d in range(1, B + 1) if B % d == 0 and d <= cap] or [1]
    pool = [d for d in divs if B // d >= 2] or divs
    target = -(-256 // max(H, 1))
    good = [d for d in pool if d >= target]
    return min(good) if good else max(pool)


def _dot(a, b):
    return jnp.dot(a, b, preferred_element_type=jnp.float32,
                   precision=jax.lax.Precision.HIGHEST)


def _transpose_packed(s, n_in, tb):
    """(TB, R, 2*n_in) packed [re | im] -> (TB*n_in, 2*R) packed, per-slice transposed."""
    return jnp.concatenate(
        [jnp.concatenate([s[t, :, :n_in].T, s[t, :, n_in:].T], axis=-1)
         for t in range(tb)],
        axis=0)


def _prox_body(xp_ref, bpt_ref, mt_ref, yp_ref, mwf_ref, mhf_ref, mhi_ref, mwi_ref):
    TB, H, W2 = xp_ref.shape
    W = W2 // 2

    # (1) forward transform along W: one (TB*H, 2W) @ (2W, 2W) matmul
    s1 = _dot(xp_ref[...].reshape(TB * H, 2 * W), mwf_ref[...]).reshape(TB, H, 2 * W)

    # (2) per-slice 2-D transposes (XLU): put H on the contracted / lane axis
    s1t = _transpose_packed(s1, W, TB)                              # (TB*W, 2H)

    # (3) forward transform along H: one (TB*W, 2H) @ (2H, 2H) matmul -> K^T packed
    kt = _dot(s1t, mhf_ref[...]).reshape(TB, W, 2 * H)

    # (4) data consistency: replace sampled k-space locations with measured b
    samp = (mt_ref[...] > 0.5)[None]                                # (1, W, 2H)
    kt = jnp.where(samp, bpt_ref[...], kt)

    # (5) inverse transform along H
    z = _dot(kt.reshape(TB * W, 2 * H), mhi_ref[...]).reshape(TB, W, 2 * H)

    # (6) transpose back to image (H, W) layout
    z2 = _transpose_packed(z, H, TB)                                # (TB*H, 2W)

    # (7) inverse transform along W; packed lane-dense store
    yp_ref[...] = _dot(z2, mwi_ref[...]).reshape(TB, H, 2 * W)


def _prox_kernel_square(xp_ref, bpt_ref, mt_ref, mf_ref, mi_ref, yp_ref):
    # H == W: one shared forward matrix and one shared inverse matrix.
    _prox_body(xp_ref, bpt_ref, mt_ref, yp_ref, mf_ref, mf_ref, mi_ref, mi_ref)


def _prox_kernel_rect(xp_ref, bpt_ref, mt_ref, mwf_ref, mhf_ref, mhi_ref, mwi_ref, yp_ref):
    _prox_body(xp_ref, bpt_ref, mt_ref, yp_ref, mwf_ref, mhf_ref, mhi_ref, mwi_ref)


def prox_block_sc(x, mask, b):
    """x, b: complex64 (N, C, H, W); mask: bool (H, W). Returns complex64 (N, C, H, W)."""
    N, C, H, W = x.shape
    B = N * C
    TB = _pick_tb(B, H, W)
    G = B // TB

    A_w, Ainv_w = _shifted_dft_mats(W)
    # Right-multiply block matrices (complex arithmetic folded in):
    mwf = jnp.asarray(_packed_right_mat(A_w.T))          # forward along W : X @ A_w^T
    mwi = jnp.asarray(_packed_right_mat(Ainv_w.T))       # inverse along W
    if H == W:
        mats = (mwf, mwi)                                # share matrices between axes
        kernel = _prox_kernel_square
    else:
        A_h, Ainv_h = _shifted_dft_mats(H)
        mhf = jnp.asarray(_packed_right_mat(A_h.T))      # forward along H (transposed view)
        mhi = jnp.asarray(_packed_right_mat(Ainv_h.T))   # inverse along H
        mats = (mwf, mhf, mhi, mwi)
        kernel = _prox_kernel_rect

    f32 = jnp.float32
    xr = jnp.real(x).reshape(B, H, W).astype(f32)
    xi = jnp.imag(x).reshape(B, H, W).astype(f32)
    xp = jnp.concatenate([xr, xi], axis=-1)                          # (B, H, 2W)

    br = jnp.real(b).reshape(B, H, W).astype(f32)
    bi = jnp.imag(b).reshape(B, H, W).astype(f32)
    bpt = jnp.concatenate([jnp.swapaxes(br, 1, 2),
                           jnp.swapaxes(bi, 1, 2)], axis=-1)         # (B, W, 2H) k-space^T

    mt = jnp.tile(jnp.asarray(mask, f32).T, (1, 2))                  # (W, 2H)

    blk_img = pl.BlockSpec((TB, H, 2 * W), lambda i: (i, 0, 0))
    blk_ksp = pl.BlockSpec((TB, W, 2 * H), lambda i: (i, 0, 0))
    const2d = lambda a: pl.BlockSpec(a.shape, lambda i: (0, 0))      # mask / constants

    flops = 16 * B * H * W * (H + W)                                 # 4 packed matmuls
    bytes_accessed = 4 * (3 * B * H * 2 * W + W * 2 * H) \
        + 4 * sum(int(np.prod(m.shape)) for m in mats)

    yp = pl.pallas_call(
        kernel,
        out_shape=jax.ShapeDtypeStruct((B, H, 2 * W), f32),
        grid_spec=pltpu.PrefetchScalarGridSpec(
            num_scalar_prefetch=0,
            grid=(G,),
            in_specs=[blk_img, blk_ksp, const2d(mt)] + [const2d(m) for m in mats],
            out_specs=blk_img,
        ),
        compiler_params=pltpu.CompilerParams(
            dimension_semantics=("parallel",),
            vmem_limit_bytes=32 * 1024 * 1024),
        cost_estimate=pl.CostEstimate(flops=flops, transcendentals=0,
                                      bytes_accessed=bytes_accessed),
    )(xp, bpt, mt, *mats)

    out = (yp[..., :W] + 1j * yp[..., W:]).astype(jnp.complex64)
    return out.reshape(N, C, H, W)


def _reference(x, mask, b):
    k = jnp.fft.fftshift(
        jnp.fft.fftn(jnp.fft.ifftshift(x, axes=(2, 3)), axes=(2, 3), norm='ortho'),
        axes=(2, 3))
    k = jnp.where(mask[None, None, :, :], b, k)
    return jnp.fft.ifftshift(
        jnp.fft.ifftn(jnp.fft.fftshift(k, axes=(2, 3)), axes=(2, 3), norm='ortho'),
        axes=(2, 3))


if __name__ == "__main__":
    key = jax.random.PRNGKey(0)
    N, Cc, H, W = 2, 4, 16, 16
    k1, k2, k3, k4, k5 = jax.random.split(key, 5)

    x = (jax.random.normal(k1, (N, Cc, H, W), jnp.float32)
         + 1j * jax.random.normal(k2, (N, Cc, H, W), jnp.float32)).astype(jnp.complex64)
    b = (jax.random.normal(k3, (N, Cc, H, W), jnp.float32)
         + 1j * jax.random.normal(k4, (N, Cc, H, W), jnp.float32)).astype(jnp.complex64)
    mask = jax.random.uniform(k5, (H, W)) < 0.3   # boolean sampling mask over (H, W)

    out = jax.block_until_ready(prox_block_sc(x, mask, b))

    ref = _reference(x, mask, b)
    assert jnp.allclose(out, ref, atol=1e-3, rtol=1e-3), "mismatch vs FFT reference"

    print("KERNEL_OK")
</pallas_src>

<mosaic_0001>
module attributes {stable_mosaic.version = 11 : i64} {
  func.func @_prox_kernel_square(%arg0: i32, %arg1: memref<4x16x32xf32, #tpu.memory_space<vmem>>, %arg2: memref<4x16x32xf32, #tpu.memory_space<vmem>>, %arg3: memref<16x32xf32, #tpu.memory_space<vmem>>, %arg4: memref<32x32xf32, #tpu.memory_space<vmem>>, %arg5: memref<32x32xf32, #tpu.memory_space<vmem>>, %arg6: memref<4x16x32xf32, #tpu.memory_space<vmem>>) attributes {dimension_semantics = [#tpu.dimension_semantics<parallel>], iteration_bounds = array<i64: 2>, scalar_prefetch = 0 : i64, scratch_operands = 0 : i64, tpu.core_type = #tpu.core_type<tc>, window_params = [{transform_indices = @transform_0, window_bounds = array<i64: 4, 16, 32>}, {transform_indices = @transform_1, window_bounds = array<i64: 4, 16, 32>}, {pipeline_mode = #tpu.pipeline_mode<synchronous>, transform_indices = @transform_2, window_bounds = array<i64: 16, 32>}, {pipeline_mode = #tpu.pipeline_mode<synchronous>, transform_indices = @transform_3, window_bounds = array<i64: 32, 32>}, {pipeline_mode = #tpu.pipeline_mode<synchronous>, transform_indices = @transform_4, window_bounds = array<i64: 32, 32>}, {transform_indices = @transform_5, window_bounds = array<i64: 4, 16, 32>}]} {
    %c0 = arith.constant 0 : index
    %c0_0 = arith.constant 0 : index
    %c0_1 = arith.constant 0 : index
    %0 = vector.load %arg1[%c0, %c0_0, %c0_1] : memref<4x16x32xf32, #tpu.memory_space<vmem>>, vector<4x16x32xf32>
    %1 = vector.shape_cast %0 : vector<4x16x32xf32> to vector<64x32xf32>
    %c0_2 = arith.constant 0 : index
    %c0_3 = arith.constant 0 : index
    %2 = vector.load %arg4[%c0_2, %c0_3] : memref<32x32xf32, #tpu.memory_space<vmem>>, vector<32x32xf32>
    %cst = arith.constant dense<0.000000e+00> : vector<64x32xf32>
    %3 = tpu.matmul %1, %2, %cst {dimension_numbers = #tpu.dot_dimension_numbers<[1], [0], [0], [1], [0, 0, 1, 1], [], []>, precision = #tpu.contract_precision<fp32>} : vector<64x32xf32>, vector<32x32xf32>, vector<64x32xf32> -> vector<64x32xf32>
    %4 = vector.shape_cast %3 : vector<64x32xf32> to vector<4x16x32xf32>
    %5 = vector.extract_strided_slice %4 {offsets = [0, 0, 0], sizes = [1, 16, 16], strides = [1, 1, 1]} : vector<4x16x32xf32> to vector<1x16x16xf32>
    %6 = vector.shape_cast %5 : vector<1x16x16xf32> to vector<16x16xf32>
    %7 = tpu.transpose %6, [1, 0] : vector<16x16xf32> -> vector<16x16xf32>
    %8 = vector.extract_strided_slice %4 {offsets = [0, 0, 16], sizes = [1, 16, 16], strides = [1, 1, 1]} : vector<4x16x32xf32> to vector<1x16x16xf32>
    %9 = vector.shape_cast %8 : vector<1x16x16xf32> to vector<16x16xf32>
    %10 = tpu.transpose %9, [1, 0] : vector<16x16xf32> -> vector<16x16xf32>
    %11 = tpu.concatenate %7, %10 in 1 : vector<16x16xf32>, vector<16x16xf32> -> vector<16x32xf32>
    %12 = vector.extract_strided_slice %4 {offsets = [1, 0, 0], sizes = [1, 16, 16], strides = [1, 1, 1]} : vector<4x16x32xf32> to vector<1x16x16xf32>
    %13 = vector.shape_cast %12 : vector<1x16x16xf32> to vector<16x16xf32>
    %14 = tpu.transpose %13, [1, 0] : vector<16x16xf32> -> vector<16x16xf32>
    %15 = vector.extract_strided_slice %4 {offsets = [1, 0, 16], sizes = [1, 16, 16], strides = [1, 1, 1]} : vector<4x16x32xf32> to vector<1x16x16xf32>
    %16 = vector.shape_cast %15 : vector<1x16x16xf32> to vector<16x16xf32>
    %17 = tpu.transpose %16, [1, 0] : vector<16x16xf32> -> vector<16x16xf32>
    %18 = tpu.concatenate %14, %17 in 1 : vector<16x16xf32>, vector<16x16xf32> -> vector<16x32xf32>
    %19 = vector.extract_strided_slice %4 {offsets = [2, 0, 0], sizes = [1, 16, 16], strides = [1, 1, 1]} : vector<4x16x32xf32> to vector<1x16x16xf32>
    %20 = vector.shape_cast %19 : vector<1x16x16xf32> to vector<16x16xf32>
    %21 = tpu.transpose %20, [1, 0] : vector<16x16xf32> -> vector<16x16xf32>
    %22 = vector.extract_strided_slice %4 {offsets = [2, 0, 16], sizes = [1, 16, 16], strides = [1, 1, 1]} : vector<4x16x32xf32> to vector<1x16x16xf32>
    %23 = vector.shape_cast %22 : vector<1x16x16xf32> to vector<16x16xf32>
    %24 = tpu.transpose %23, [1, 0] : vector<16x16xf32> -> vector<16x16xf32>
    %25 = tpu.concatenate %21, %24 in 1 : vector<16x16xf32>, vector<16x16xf32> -> vector<16x32xf32>
    %26 = vector.extract_strided_slice %4 {offsets = [3, 0, 0], sizes = [1, 16, 16], strides = [1, 1, 1]} : vector<4x16x32xf32> to vector<1x16x16xf32>
    %27 = vector.shape_cast %26 : vector<1x16x16xf32> to vector<16x16xf32>
    %28 = tpu.transpose %27, [1, 0] : vector<16x16xf32> -> vector<16x16xf32>
    %29 = vector.extract_strided_slice %4 {offsets = [3, 0, 16], sizes = [1, 16, 16], strides = [1, 1, 1]} : vector<4x16x32xf32> to vector<1x16x16xf32>
    %30 = vector.shape_cast %29 : vector<1x16x16xf32> to vector<16x16xf32>
    %31 = tpu.transpose %30, [1, 0] : vector<16x16xf32> -> vector<16x16xf32>
    %32 = tpu.concatenate %28, %31 in 1 : vector<16x16xf32>, vector<16x16xf32> -> vector<16x32xf32>
    %33 = tpu.concatenate %11, %18, %25, %32 in 0 : vector<16x32xf32>, vector<16x32xf32>, vector<16x32xf32>, vector<16x32xf32> -> vector<64x32xf32>
    %c0_4 = arith.constant 0 : index
    %c0_5 = arith.constant 0 : index
    %34 = vector.load %arg4[%c0_4, %c0_5] : memref<32x32xf32, #tpu.memory_space<vmem>>, vector<32x32xf32>
    %cst_6 = arith.constant dense<0.000000e+00> : vector<64x32xf32>
    %35 = tpu.matmul %33, %34, %cst_6 {dimension_numbers = #tpu.dot_dimension_numbers<[1], [0], [0], [1], [0, 0, 1, 1], [], []>, precision = #tpu.contract_precision<fp32>} : vector<64x32xf32>, vector<32x32xf32>, vector<64x32xf32> -> vector<64x32xf32>
    %36 = vector.shape_cast %35 : vector<64x32xf32> to vector<4x16x32xf32>
    %c0_7 = arith.constant 0 : index
    %c0_8 = arith.constant 0 : index
    %37 = vector.load %arg3[%c0_7, %c0_8] : memref<16x32xf32, #tpu.memory_space<vmem>>, vector<16x32xf32>
    %cst_9 = arith.constant 5.000000e-01 : f32
    %38 = vector.broadcast %cst_9 : f32 to vector<16x32xf32>
    %39 = arith.cmpf ogt, %37, %38 : vector<16x32xf32>
    %40 = vector.shape_cast %39 : vector<16x32xi1> to vector<1x16x32xi1>
    %c0_10 = arith.constant 0 : index
    %c0_11 = arith.constant 0 : index
    %c0_12 = arith.constant 0 : index
    %41 = vector.load %arg2[%c0_10, %c0_11, %c0_12] : memref<4x16x32xf32, #tpu.memory_space<vmem>>, vector<4x16x32xf32>
    %42 = vector.shape_cast %40 : vector<1x16x32xi1> to vector<1x16x32xi1>
    %43 = vector.broadcast %42 : vector<1x16x32xi1> to vector<4x16x32xi1>
    %44 = arith.select %43, %41, %36 : vector<4x16x32xi1>, vector<4x16x32xf32>
    %45 = vector.shape_cast %44 : vector<4x16x32xf32> to vector<64x32xf32>
    %c0_13 = arith.constant 0 : index
    %c0_14 = arith.constant 0 : index
    %46 = vector.load %arg5[%c0_13, %c0_14] : memref<32x32xf32, #tpu.memory_space<vmem>>, vector<32x32xf32>
    %cst_15 = arith.constant dense<0.000000e+00> : vector<64x32xf32>
    %47 = tpu.matmul %45, %46, %cst_15 {dimension_numbers = #tpu.dot_dimension_numbers<[1], [0], [0], [1], [0, 0, 1, 1], [], []>, precision = #tpu.contract_precision<fp32>} : vector<64x32xf32>, vector<32x32xf32>, vector<64x32xf32> -> vector<64x32xf32>
    %48 = vector.shape_cast %47 : vector<64x32xf32> to vector<4x16x32xf32>
    %49 = vector.extract_strided_slice %48 {offsets = [0, 0, 0], sizes = [1, 16, 16], strides = [1, 1, 1]} : vector<4x16x32xf32> to vector<1x16x16xf32>
    %50 = vector.shape_cast %49 : vector<1x16x16xf32> to vector<16x16xf32>
    %51 = tpu.transpose %50, [1, 0] : vector<16x16xf32> -> vector<16x16xf32>
    %52 = vector.extract_strided_slice %48 {offsets = [0, 0, 16], sizes = [1, 16, 16], strides = [1, 1, 1]} : vector<4x16x32xf32> to vector<1x16x16xf32>
    %53 = vector.shape_cast %52 : vector<1x16x16xf32> to vector<16x16xf32>
    %54 = tpu.transpose %53, [1, 0] : vector<16x16xf32> -> vector<16x16xf32>
    %55 = tpu.concatenate %51, %54 in 1 : vector<16x16xf32>, vector<16x16xf32> -> vector<16x32xf32>
    %56 = vector.extract_strided_slice %48 {offsets = [1, 0, 0], sizes = [1, 16, 16], strides = [1, 1, 1]} : vector<4x16x32xf32> to vector<1x16x16xf32>
    %57 = vector.shape_cast %56 : vector<1x16x16xf32> to vector<16x16xf32>
    %58 = tpu.transpose %57, [1, 0] : vector<16x16xf32> -> vector<16x16xf32>
    %59 = vector.extract_strided_slice %48 {offsets = [1, 0, 16], sizes = [1, 16, 16], strides = [1, 1, 1]} : vector<4x16x32xf32> to vector<1x16x16xf32>
    %60 = vector.shape_cast %59 : vector<1x16x16xf32> to vector<16x16xf32>
    %61 = tpu.transpose %60, [1, 0] : vector<16x16xf32> -> vector<16x16xf32>
    %62 = tpu.concatenate %58, %61 in 1 : vector<16x16xf32>, vector<16x16xf32> -> vector<16x32xf32>
    %63 = vector.extract_strided_slice %48 {offsets = [2, 0, 0], sizes = [1, 16, 16], strides = [1, 1, 1]} : vector<4x16x32xf32> to vector<1x16x16xf32>
    %64 = vector.shape_cast %63 : vector<1x16x16xf32> to vector<16x16xf32>
    %65 = tpu.transpose %64, [1, 0] : vector<16x16xf32> -> vector<16x16xf32>
    %66 = vector.extract_strided_slice %48 {offsets = [2, 0, 16], sizes = [1, 16, 16], strides = [1, 1, 1]} : vector<4x16x32xf32> to vector<1x16x16xf32>
    %67 = vector.shape_cast %66 : vector<1x16x16xf32> to vector<16x16xf32>
    %68 = tpu.transpose %67, [1, 0] : vector<16x16xf32> -> vector<16x16xf32>
    %69 = tpu.concatenate %65, %68 in 1 : vector<16x16xf32>, vector<16x16xf32> -> vector<16x32xf32>
    %70 = vector.extract_strided_slice %48 {offsets = [3, 0, 0], sizes = [1, 16, 16], strides = [1, 1, 1]} : vector<4x16x32xf32> to vector<1x16x16xf32>
    %71 = vector.shape_cast %70 : vector<1x16x16xf32> to vector<16x16xf32>
    %72 = tpu.transpose %71, [1, 0] : vector<16x16xf32> -> vector<16x16xf32>
    %73 = vector.extract_strided_slice %48 {offsets = [3, 0, 16], sizes = [1, 16, 16], strides = [1, 1, 1]} : vector<4x16x32xf32> to vector<1x16x16xf32>
    %74 = vector.shape_cast %73 : vector<1x16x16xf32> to vector<16x16xf32>
    %75 = tpu.transpose %74, [1, 0] : vector<16x16xf32> -> vector<16x16xf32>
    %76 = tpu.concatenate %72, %75 in 1 : vector<16x16xf32>, vector<16x16xf32> -> vector<16x32xf32>
    %77 = tpu.concatenate %55, %62, %69, %76 in 0 : vector<16x32xf32>, vector<16x32xf32>, vector<16x32xf32>, vector<16x32xf32> -> vector<64x32xf32>
    %c0_16 = arith.constant 0 : index
    %c0_17 = arith.constant 0 : index
    %78 = vector.load %arg5[%c0_16, %c0_17] : memref<32x32xf32, #tpu.memory_space<vmem>>, vector<32x32xf32>
    %cst_18 = arith.constant dense<0.000000e+00> : vector<64x32xf32>
    %79 = tpu.matmul %77, %78, %cst_18 {dimension_numbers = #tpu.dot_dimension_numbers<[1], [0], [0], [1], [0, 0, 1, 1], [], []>, precision = #tpu.contract_precision<fp32>} : vector<64x32xf32>, vector<32x32xf32>, vector<64x32xf32> -> vector<64x32xf32>
    %80 = vector.shape_cast %79 : vector<64x32xf32> to vector<4x16x32xf32>
    %c0_19 = arith.constant 0 : index
    %c0_20 = arith.constant 0 : index
    %c0_21 = arith.constant 0 : index
    %81 = vector.load %arg6[%c0_19, %c0_20, %c0_21] : memref<4x16x32xf32, #tpu.memory_space<vmem>>, vector<4x16x32xf32>
    tpu.vector_store %arg6[%c0_19, %c0_20, %c0_21], %80 {strides = array<i32>} : memref<4x16x32xf32, #tpu.memory_space<vmem>>, vector<4x16x32xf32>,
    return
  }
  func.func @transform_0(%arg0: i32) -> (i32, i32, i32) {
    %c0_i32 = arith.constant 0 : i32
    %c0_i32_0 = arith.constant 0 : i32
    %c0_i32_1 = arith.constant 0 : i32
    return %arg0, %c0_i32, %c0_i32_0 : i32, i32, i32
  }
  func.func @transform_1(%arg0: i32) -> (i32, i32, i32) {
    %c0_i32 = arith.constant 0 : i32
    %c0_i32_0 = arith.constant 0 : i32
    %c0_i32_1 = arith.constant 0 : i32
    return %arg0, %c0_i32, %c0_i32_0 : i32, i32, i32
  }
  func.func @transform_2(%arg0: i32) -> (i32, i32) {
    %c0_i32 = arith.constant 0 : i32
    %c0_i32_0 = arith.constant 0 : i32
    %c0_i32_1 = arith.constant 0 : i32
    return %c0_i32, %c0_i32_0 : i32, i32
  }
  func.func @transform_3(%arg0: i32) -> (i32, i32) {
    %c0_i32 = arith.constant 0 : i32
    %c0_i32_0 = arith.constant 0 : i32
    %c0_i32_1 = arith.constant 0 : i32
    return %c0_i32, %c0_i32_0 : i32, i32
  }
  func.func @transform_4(%arg0: i32) -> (i32, i32) {
    %c0_i32 = arith.constant 0 : i32
    %c0_i32_0 = arith.constant 0 : i32
    %c0_i32_1 = arith.constant 0 : i32
    return %c0_i32, %c0_i32_0 : i32, i32
  }
  func.func @transform_5(%arg0: i32) -> (i32, i32, i32) {
    %c0_i32 = arith.constant 0 : i32
    %c0_i32_0 = arith.constant 0 : i32
    %c0_i32_1 = arith.constant 0 : i32
    return %arg0, %c0_i32, %c0_i32_0 : i32, i32, i32
  }
}

</mosaic_0001>

<llo_original>
// kernel: tpu_custom_call.1
$region0: #{tpu_custom_call.1}
  #allocation0 [shape = 'u32[]', space=smem, size = 0x4, offset = 0x4, fixed_abs, tag = 'smem constant byte address 0x4 - core index']
  #allocation1 [shape = 'u32[144,128]{1,0:T(1,128)}', space=vmem, size = 0x12000, scoped, tag = 'internal scratch']
  %s0 = inlined_call_operand.hbm [shape: f32[8,16,32], index: 0, kind: input, shape index: {}]
  %s1 = inlined_call_operand.hbm [shape: f32[8,16,32], index: 1, kind: input, shape index: {}]
  %s2 = inlined_call_operand.hbm [shape: f32[16,32], index: 2, kind: input, shape index: {}]
  %s3 = inlined_call_operand.hbm [shape: f32[32,32], index: 3, kind: input, shape index: {}]
  %s4 = inlined_call_operand.hbm [shape: f32[32,32], index: 4, kind: input, shape index: {}]
  %s5 = inlined_call_operand.hbm [shape: f32[8,16,32], index: 5, kind: output, shape index: {}]
  %s6 = sld [smem:[#allocation0]]
  $region73: #{tpu_custom_call.1} parent=0
    _
  %s8 = ssub.s32 1, %s6
  %s9 = scalar_select 0, %s8, %s6
  $region1: #{tpu_custom_call.1} parent=0
    #allocation2 [shape = 'u8[65536]{0}', space=vmem, size = 0x10000, scoped, tag = 'input window, operand 0']
    #allocation3 [shape = 's32[2]{0}', space=sflag, size = 0x8, scoped, tag = 'scoped memory for tpu_custom_call.1']
    #allocation4 [shape = 's32[2]{0}', space=sflag, size = 0x8, scoped, tag = 'scoped memory for tpu_custom_call.1']
    #allocation5 [shape = 'u8[65536]{0}', space=vmem, size = 0x10000, scoped, tag = 'input window, operand 1']
    #allocation6 [shape = 's32[2]{0}', space=sflag, size = 0x8, scoped, tag = 'scoped memory for tpu_custom_call.1']
    #allocation7 [shape = 'u8[8192]{0}', space=vmem, size = 0x2000, scoped, tag = 'input window, operand 2, single buffered']
    #allocation8 [shape = 'u8[16384]{0}', space=vmem, size = 0x4000, scoped, tag = 'input window, operand 3, single buffered']
    #allocation9 [shape = 's32[1]{0}', space=sflag, size = 0x4, scoped, tag = 'scoped memory for tpu_custom_call.1']
    #allocation10 [shape = 'u8[16384]{0}', space=vmem, size = 0x4000, scoped, tag = 'input window, operand 4, single buffered']
    #allocation11 [shape = 'u8[65536]{0}', space=vmem, size = 0x10000, scoped, tag = 'output window, operand 0']
    %10 = vsyncpa [#allocation3], 0
    %s11 = scalar_lea.sflag [#allocation3], 1
    %12 = vsyncpa %s11, 0
    %13 = vsyncpa [#allocation6], 0
    %s14 = scalar_lea.sflag [#allocation6], 1
    %15 = vsyncpa %s14, 0
    %16 = vsyncpa [#allocation9], 0
    %17 = vsyncpa [#allocation4], 0
    %s18 = scalar_lea.sflag [#allocation4], 1
    %19 = vsyncpa %s18, 0
    loop: start=0, step=1, limit=4
    $region2: #{tpu_custom_call.1} parent=1 // loop_pre_header
      _
    $region3: #{tpu_custom_call.1} parent=1 // loop_header
      %s21 = sphi 0, %s25
      %p22 = scmp.ge.s32.totalorder %s21, 4
      %s31 = sphi 0, %s33
      %s34 = sphi 0, %s31
      %s35 = sphi 0, %s34
      %s51 = sphi 0, %s35
      %s57 = sphi 0, %s59
      %s60 = sphi 0, %s57
      %s61 = sphi 0, %s60
      %s77 = sphi 0, %s61
      %s81 = sphi 0, %s81
      %s83 = sphi 0, %s81
      %s84 = sphi 0, %s83
      %s98 = sphi 0, %s84
      %s102 = sphi 0, %s102
      %s104 = sphi 0, %s102
      %s105 = sphi 0, %s104
      %s119 = sphi 0, %s105
      %s123 = sphi 0, %s123
      %s125 = sphi 0, %s123
      %s126 = sphi 0, %s125
      %s140 = sphi 0, %s126
      %s146 = sphi 0, %s148
      %s149 = sphi 0, %s146
      %s150 = sphi 0, %s149
      %s166 = sphi 0, %s150
    $region4: #{tpu_custom_call.1} parent=1 // loop_header_branch
      %24 = sbr.rel (%p22) target = $region8
    $region5: #{tpu_custom_call.1} parent=1 // loop_body
      %s26 = ssub.s32 %s21, 1
      %s27 = ssub.s32 %s21, 2
      %s28 = sadd.s32 %s21, 1
      %s29 = ssub.s32 %s21, %s28
      %p30 = scmp.eq.s32.totalorder %s29, 0
      %s32 = sadd.s32 %s31, 1
      %s33 = scalar_select %p30, %s31, %s32
      %p36 = pneg %p30
      %p37 = scmp.eq.s32.totalorder %s21, 1
      %p38 = por %p36, %p37
      %p39 = scmp.ne.s32.totalorder %s31, %s34
      %p40 = scmp.eq.s32.totalorder %s21, 0
      %p41 = por %p39, %p40
      %p42 = scmp.ne.s32.totalorder %s31, %s34
      %p43 = scmp.eq.s32.totalorder %s26, 1
      %p44 = por %p42, %p43
      %p45 = scmp.ne.s32.totalorder %s34, %s35
      %p46 = scmp.eq.s32.totalorder %s26, 0
      %p47 = por %p45, %p46
      %p48 = scmp.ne.s32.totalorder %s34, %s35
      %p49 = scmp.eq.s32.totalorder %s27, 1
      %p50 = por %p48, %p49
      %p52 = scmp.ne.s32.totalorder %s35, %s51
      %p53 = scmp.eq.s32.totalorder %s27, 0
      %p54 = por %p52, %p53
      %s55 = ssub.s32 %s21, %s28
      %p56 = scmp.eq.s32.totalorder %s55, 0
      %s58 = sadd.s32 %s57, 1
      %s59 = scalar_select %p56, %s57, %s58
      %p62 = pneg %p56
      %p63 = scmp.eq.s32.totalorder %s21, 1
      %p64 = por %p62, %p63
      %p65 = scmp.ne.s32.totalorder %s57, %s60
      %p66 = scmp.eq.s32.totalorder %s21, 0
      %p67 = por %p65, %p66
      %p68 = scmp.ne.s32.totalorder %s57, %s60
      %p69 = scmp.eq.s32.totalorder %s26, 1
      %p70 = por %p68, %p69
      %p71 = scmp.ne.s32.totalorder %s60, %s61
      %p72 = scmp.eq.s32.totalorder %s26, 0
      %p73 = por %p71, %p72
      %p74 = scmp.ne.s32.totalorder %s60, %s61
      %p75 = scmp.eq.s32.totalorder %s27, 1
      %p76 = por %p74, %p75
      %p78 = scmp.ne.s32.totalorder %s61, %s77
      %p79 = scmp.eq.s32.totalorder %s27, 0
      %p80 = por %p78, %p79
      %s82 = sadd.s32 %s81, 1
      %p85 = scmp.eq.s32.totalorder %s21, 1
      %p86 = scmp.ne.s32.totalorder %s81, %s83
      %p87 = scmp.eq.s32.totalorder %s21, 0
      %p88 = por %p86, %p87
      %p89 = scmp.ne.s32.totalorder %s81, %s83
      %p90 = scmp.eq.s32.totalorder %s26, 1
      %p91 = por %p89, %p90
      %p92 = scmp.ne.s32.totalorder %s83, %s84
      %p93 = scmp.eq.s32.totalorder %s26, 0
      %p94 = por %p92, %p93
      %p95 = scmp.ne.s32.totalorder %s83, %s84
      %p96 = scmp.eq.s32.totalorder %s27, 1
      %p97 = por %p95, %p96
      %p99 = scmp.ne.s32.totalorder %s84, %s98
      %p100 = scmp.eq.s32.totalorder %s27, 0
      %p101 = por %p99, %p100
      %s103 = sadd.s32 %s102, 1
      %p106 = scmp.eq.s32.totalorder %s21, 1
      %p107 = scmp.ne.s32.totalorder %s102, %s104
      %p108 = scmp.eq.s32.totalorder %s21, 0
      %p109 = por %p107, %p108
      %p110 = scmp.ne.s32.totalorder %s102, %s104
      %p111 = scmp.eq.s32.totalorder %s26, 1
      %p112 = por %p110, %p111
      %p113 = scmp.ne.s32.totalorder %s104, %s105
      %p114 = scmp.eq.s32.totalorder %s26, 0
      %p115 = por %p113, %p114
      %p116 = scmp.ne.s32.totalorder %s104, %s105
      %p117 = scmp.eq.s32.totalorder %s27, 1
      %p118 = por %p116, %p117
      %p120 = scmp.ne.s32.totalorder %s105, %s119
      %p121 = scmp.eq.s32.totalorder %s27, 0
      %p122 = por %p120, %p121
      %s124 = sadd.s32 %s123, 1
      %p127 = scmp.eq.s32.totalorder %s21, 1
      %p128 = scmp.ne.s32.totalorder %s123, %s125
      %p129 = scmp.eq.s32.totalorder %s21, 0
      %p130 = por %p128, %p129
      %p131 = scmp.ne.s32.totalorder %s123, %s125
      %p132 = scmp.eq.s32.totalorder %s26, 1
      %p133 = por %p131, %p132
      %p134 = scmp.ne.s32.totalorder %s125, %s126
      %p135 = scmp.eq.s32.totalorder %s26, 0
      %p136 = por %p134, %p135
      %p137 = scmp.ne.s32.totalorder %s125, %s126
      %p138 = scmp.eq.s32.totalorder %s27, 1
      %p139 = por %p137, %p138
      %p141 = scmp.ne.s32.totalorder %s126, %s140
      %p142 = scmp.eq.s32.totalorder %s27, 0
      %p143 = por %p141, %p142
      %s144 = ssub.s32 %s21, %s28
      %p145 = scmp.eq.s32.totalorder %s144, 0
      %s147 = sadd.s32 %s146, 1
      %s148 = scalar_select %p145, %s146, %s147
      %p151 = pneg %p145
      %p152 = scmp.eq.s32.totalorder %s21, 1
      %p153 = por %p151, %p152
      %p154 = scmp.ne.s32.totalorder %s146, %s149
      %p155 = scmp.eq.s32.totalorder %s21, 0
      %p156 = por %p154, %p155
      %p157 = scmp.ne.s32.totalorder %s146, %s149
      %p158 = scmp.eq.s32.totalorder %s26, 1
      %p159 = por %p157, %p158
      %p160 = scmp.ne.s32.totalorder %s149, %s150
      %p161 = scmp.eq.s32.totalorder %s26, 0
      %p162 = por %p160, %p161
      %p163 = scmp.ne.s32.totalorder %s149, %s150
      %p164 = scmp.eq.s32.totalorder %s27, 1
      %p165 = por %p163, %p164
      %p167 = scmp.ne.s32.totalorder %s150, %s166
      %p168 = scmp.eq.s32.totalorder %s27, 0
      %p169 = por %p167, %p168
      %p170 = scmp.le.s32.totalorder 1, %s21
      %p171 = scmp.lt.s32.totalorder %s21, 3
      %p172 = pnand %p170, %p171
      %p173 = pneg %p172
      // Predicated region
      $region9: #{tpu_custom_call.1} parent=5 // pred_check
        _
      $region10: #{tpu_custom_call.1} parent=5 // pred_check_branch
        %175 = sbr.rel (%p172) target = $region12
      $region11: #{tpu_custom_call.1} parent=5 // pred_region
        %s176 = ssub.s32 %s21, 1
        // Predicated region
        $region13: #{tpu_custom_call.1} parent=11 // pred_check
          %p177 = pneg %p94
        $region14: #{tpu_custom_call.1} parent=11 // pred_check_branch
          %179 = sbr.rel (%p177) target = $region16
        $region15: #{tpu_custom_call.1} parent=11 // pred_region
          %s181 = ssub.s32 256, 256
          %182 = vsyncadd [#allocation6], %s181
          %s183 = sshll.u32 [#allocation7], 4
          %s184 = int_to_ptr.vmem [resolvable:$true] %s183
          %189 = dma.hbm_to_vmem [thread:$0]  %s2, 256, %s184, [#allocation6], 128, 128, 8
        $region16: #{tpu_custom_call.1} parent=11 // pred_fallthru
          _
        // Predicated region
        $region17: #{tpu_custom_call.1} parent=11 // pred_check
          %p190 = pneg %p115
        $region18: #{tpu_custom_call.1} parent=11 // pred_check_branch
          %192 = sbr.rel (%p190) target = $region20
        $region19: #{tpu_custom_call.1} parent=11 // pred_region
          %s194 = ssub.s32 512, 512
          %195 = vsyncadd [#allocation9], %s194
          %s196 = sshll.u32 [#allocation8], 4
          %s197 = int_to_ptr.vmem [resolvable:$true] %s196
          %202 = dma.hbm_to_vmem [thread:$0]  %s3, 512, %s197, [#allocation9], 128, 128, 8
        $region20: #{tpu_custom_call.1} parent=11 // pred_fallthru
          _
        // Predicated region
        $region21: #{tpu_custom_call.1} parent=11 // pred_check
          %p203 = pneg %p136
        $region22: #{tpu_custom_call.1} parent=11 // pred_check_branch
          %205 = sbr.rel (%p203) target = $region24
        $region23: #{tpu_custom_call.1} parent=11 // pred_region
          %s207 = ssub.s32 512, 512
          %208 = vsyncadd [#allocation9], %s207
          %s209 = sshll.u32 [#allocation10], 4
          %s210 = int_to_ptr.vmem [resolvable:$true] %s209
          %215 = dma.hbm_to_vmem [thread:$0]  %s4, 512, %s210, [#allocation9], 128, 128, 8
        $region24: #{tpu_custom_call.1} parent=11 // pred_fallthru
          _
      $region12: #{tpu_custom_call.1} parent=5 // pred_fallthru
        _
      %p216 = scmp.lt.s32.totalorder %s21, 2
      // Predicated region
      $region25: #{tpu_custom_call.1} parent=5 // pred_check
        %p217 = pneg %p216
      $region26: #{tpu_custom_call.1} parent=5 // pred_check_branch
        %219 = sbr.rel (%p217) target = $region28
      $region27: #{tpu_custom_call.1} parent=5 // pred_region
        // Predicated region
        $region29: #{tpu_custom_call.1} parent=27 // pred_check
          %p220 = pneg %p41
        $region30: #{tpu_custom_call.1} parent=27 // pred_check_branch
          %222 = sbr.rel (%p220) target = $region32
        $region31: #{tpu_custom_call.1} parent=27 // pred_region
          %s223 = sand.u32 %s31, 1
          %s224 = scalar_lea.sflag [#allocation3], %s223
          %s225 = sand.u32 %s31, 1
          %s226 = smul.addr %s225, 64
          %s227 = scalar_lea.vmem [#allocation2], %s226
          %s228 = smul.u32 4, %s21
          %s230 = ssub.s32 1024, 1024
          %231 = vsyncadd %s224, %s230
          %s232 = smul.addr %s228, 2
          %s233 = smul.addr %s232, 128
          %s234 = scalar_lea.hbm %s0, %s233
          %s235 = sshll.u32 %s227, 4
          %s236 = int_to_ptr.vmem [resolvable:$true] %s235
          %241 = dma.hbm_to_vmem [thread:$0]  %s234, 1024, %s236, %s224, 128, 128, 8
        $region32: #{tpu_custom_call.1} parent=27 // pred_fallthru
          _
        // Predicated region
        $region33: #{tpu_custom_call.1} parent=27 // pred_check
          %p242 = pneg %p67
        $region34: #{tpu_custom_call.1} parent=27 // pred_check_branch
          %244 = sbr.rel (%p242) target = $region36
        $region35: #{tpu_custom_call.1} parent=27 // pred_region
          %s245 = sand.u32 %s21, 1
          %s246 = scalar_lea.sflag [#allocation6], %s245
          %s247 = sand.u32 %s57, 1
          %s248 = smul.addr %s247, 64
          %s249 = scalar_lea.vmem [#allocation5], %s248
          %s250 = smul.u32 4, %s21
          %s252 = ssub.s32 1024, 1024
          %253 = vsyncadd %s246, %s252
          %s254 = smul.addr %s250, 2
          %s255 = smul.addr %s254, 128
          %s256 = scalar_lea.hbm %s1, %s255
          %s257 = sshll.u32 %s249, 4
          %s258 = int_to_ptr.vmem [resolvable:$true] %s257
          %263 = dma.hbm_to_vmem [thread:$0]  %s256, 1024, %s258, %s246, 128, 128, 8
        $region36: #{tpu_custom_call.1} parent=27 // pred_fallthru
          _
      $region28: #{tpu_custom_call.1} parent=5 // pred_fallthru
        _
      %p264 = scmp.le.s32.totalorder 1, %s21
      %p265 = scmp.lt.s32.totalorder %s21, 3
      %p266 = pnand %p264, %p265
      %p267 = pneg %p266
      // Predicated region
      $region37: #{tpu_custom_call.1} parent=5 // pred_check
        _
      $region38: #{tpu_custom_call.1} parent=5 // pred_check_branch
        %269 = sbr.rel (%p266) target = $region40
      $region39: #{tpu_custom_call.1} parent=5 // pred_region
        %s270 = ssub.s32 %s21, 1
        %s271 = sand.u32 %s34, 1
        %s272 = scalar_lea.sflag [#allocation3], %s271
        %s273 = sand.u32 %s34, 1
        %s274 = smul.addr %s273, 64
        %s275 = scalar_lea.vmem [#allocation2], %s274
        // Predicated region
        $region41: #{tpu_custom_call.1} parent=39 // pred_check
          %p276 = pneg %p47
        $region42: #{tpu_custom_call.1} parent=39 // pred_check_branch
          %278 = sbr.rel (%p276) target = $region44
        $region43: #{tpu_custom_call.1} parent=39 // pred_region
          %279 = dma.done %s272, 1024
        $region44: #{tpu_custom_call.1} parent=39 // pred_fallthru
          _
        %s280 = sand.u32 %s26, 1
        %s281 = scalar_lea.sflag [#allocation6], %s280
        %s282 = sand.u32 %s60, 1
        %s283 = smul.addr %s282, 64
        %s284 = scalar_lea.vmem [#allocation5], %s283
        // Predicated region
        $region45: #{tpu_custom_call.1} parent=39 // pred_check
          %p285 = pneg %p73
        $region46: #{tpu_custom_call.1} parent=39 // pred_check_branch
          %287 = sbr.rel (%p285) target = $region48
        $region47: #{tpu_custom_call.1} parent=39 // pred_region
          %288 = dma.done %s281, 1024
        $region48: #{tpu_custom_call.1} parent=39 // pred_fallthru
          _
        // Predicated region
        $region49: #{tpu_custom_call.1} parent=39 // pred_check
          %p289 = pneg %p94
        $region50: #{tpu_custom_call.1} parent=39 // pred_check_branch
          %291 = sbr.rel (%p289) target = $region52
        $region51: #{tpu_custom_call.1} parent=39 // pred_region
          %292 = dma.done [#allocation6], 256
        $region52: #{tpu_custom_call.1} parent=39 // pred_fallthru
          _
        // Predicated region
        $region53: #{tpu_custom_call.1} parent=39 // pred_check
          %p293 = pneg %p115
        $region54: #{tpu_custom_call.1} parent=39 // pred_check_branch
          %295 = sbr.rel (%p293) target = $region56
        $region55: #{tpu_custom_call.1} parent=39 // pred_region
          %296 = dma.done [#allocation9], 512
        $region56: #{tpu_custom_call.1} parent=39 // pred_fallthru
          _
        // Predicated region
        $region57: #{tpu_custom_call.1} parent=39 // pred_check
          %p297 = pneg %p136
        $region58: #{tpu_custom_call.1} parent=39 // pred_check_branch
          %299 = sbr.rel (%p297) target = $region60
        $region59: #{tpu_custom_call.1} parent=39 // pred_region
          %300 = dma.done [#allocation9], 512
        $region60: #{tpu_custom_call.1} parent=39 // pred_fallthru
          _
        %s301 = sand.u32 %s34, 1
        %s302 = scalar_lea.sflag [#allocation3], %s301
        %s303 = sand.u32 %s34, 1
        %s304 = smul.addr %s303, 64
        %s305 = scalar_lea.vmem [#allocation2], %s304
        %p306 = pneg %p47
        %p307 = pneg %p44
        %s308 = sand.u32 %s26, 1
        %s309 = scalar_lea.sflag [#allocation6], %s308
        %s310 = sand.u32 %s60, 1
        %s311 = smul.addr %s310, 64
        %s312 = scalar_lea.vmem [#allocation5], %s311
        %p313 = pneg %p73
        %p314 = pneg %p70
        %p315 = pneg %p94
        %p316 = pneg %p91
        %p317 = pneg %p115
        %p318 = pneg %p112
        %p319 = pneg %p136
        %p320 = pneg %p133
        %p321 = pneg %p162
        %p322 = pneg %p159
        %s323 = sand.u32 %s149, 1
        %s324 = scalar_lea.sflag [#allocation4], %s323
        %s325 = sand.u32 %s149, 1
        %s326 = smul.addr %s325, 64
        %s327 = scalar_lea.vmem [#allocation11], %s326
        %s328 = smul.u32 4, %s26
        %s329 = smul.u32 4, %s26
        %s330 = smul.u32 4, %s26
        %v331 = vld [vmem:[%s275] sm:$0xff]
        %v332 = vld [vmem:[%s275 + $0x8] sm:$0xff]
        %v333 = vld [vmem:[%s275 + $0x10] sm:$0xff]
        %v334 = vld [vmem:[%s275 + $0x18] sm:$0xff]
        %v335 = vld [vmem:[%s275 + $0x20] sm:$0xff]
        %v336 = vld [vmem:[%s275 + $0x28] sm:$0xff]
        %v337 = vld [vmem:[%s275 + $0x30] sm:$0xff]
        %v338 = vld [vmem:[%s275 + $0x38] sm:$0xff]
        %v339 = vld [vmem:[#allocation8] sm:$0xff]
        %v340 = vld [vmem:[#allocation8 + $0x8] sm:$0xff]
        %v341 = vld [vmem:[#allocation8 + $0x10] sm:$0xff]
        %v342 = vld [vmem:[#allocation8 + $0x18] sm:$0xff]
        %vm343 = vcmask 261120
        %v345 = vsel %vm343, %v331, 0
        %v348 = vsel %vm343, %v332, 0
        %v351 = vsel %vm343, %v333, 0
        %v354 = vsel %vm343, %v334, 0
        %v357 = vsel %vm343, %v335, 0
        %v360 = vsel %vm343, %v336, 0
        %v363 = vsel %vm343, %v337, 0
        %v366 = vsel %vm343, %v338, 0
        %368 = vmatprep.subr.mxu0 0.0
        %v369 = vand.u32 %v339, 4294901760
        %370 = vmatpush1.msra.mxu0 %v369
        %371 = vmatprep.subr.mxu0 0.0
        %v372 = vand.u32 %v340, 4294901760
        %373 = vmatpush1.msra.mxu0 %v372
        %374 = vmatprep.subr.mxu0 0.0
        %v375 = vand.u32 %v341, 4294901760
        %376 = vmatpush1.msra.mxu0 %v375
        %377 = vmatprep.subr.mxu0 0.0
        %v378 = vand.u32 %v342, 4294901760
        %379 = vmatpush1.msra.mxu0 %v378
        %380 = vmatprep.subr.mxu0 0.0
        %381 = vmatpush1.msra.mxu0 0.0
        %382 = vmatprep.subr.mxu0 0.0
        %383 = vmatpush1.msra.mxu0 0.0
        %384 = vmatprep.subr.mxu0 0.0
        %385 = vmatpush1.msra.mxu0 0.0
        %386 = vmatprep.subr.mxu0 0.0
        %387 = vmatpush1.msra.mxu0 0.0
        %388 = vmatprep.subr.mxu0 0.0
        %389 = vmatpush1.msra.mxu0 0.0
        %390 = vmatprep.subr.mxu0 0.0
        %391 = vmatpush1.msra.mxu0 0.0
        %392 = vmatprep.subr.mxu0 0.0
        %393 = vmatpush1.msra.mxu0 0.0
        %394 = vmatprep.subr.mxu0 0.0
        %395 = vmatpush1.msra.mxu0 0.0
        %396 = vmatprep.subr.mxu0 0.0
        %397 = vmatpush1.msra.mxu0 0.0
        %398 = vmatprep.subr.mxu0 0.0
        %399 = vmatpush1.msra.mxu0 0.0
        %400 = vmatprep.subr.mxu0 0.0
        %401 = vmatpush1.msra.mxu0 0.0
        %402 = vmatprep.subr.mxu0 0.0
        %403 = vmatpush1.msra.mxu0 0.0
        %404 = vmatprep.subr.mxu0 0.0
        %405 = vmatpush1.msra.mxu0 0.0
        %406 = vmatprep.subr.mxu0 0.0
        %407 = vmatpush1.msra.mxu0 0.0
        %408 = vmatprep.subr.mxu0 0.0
        %409 = vmatpush1.msra.mxu0 0.0
        %410 = vmatprep.subr.mxu0 0.0
        %411 = vmatpush1.msra.mxu0 0.0
        %412 = vmatprep.subr.mxu0 0.0
        %413 = vmatpush1.msra.mxu0 0.0
        %414 = vmatprep.subr.mxu0 0.0
        %415 = vmatpush1.msra.mxu0 0.0
        %416 = vmatprep.subr.mxu0 0.0
        %417 = vmatpush1.msra.mxu0 0.0
        %418 = vmatprep.subr.mxu0 0.0
        %419 = vmatpush1.msra.mxu0 0.0
        %420 = vmatprep.subr.mxu0 0.0
        %421 = vmatpush1.msra.mxu0 0.0
        %422 = vmatprep.subr.mxu0 0.0
        %423 = vmatpush1.msra.mxu0 0.0
        %424 = vmatprep.subr.mxu0 0.0
        %425 = vmatpush1.msra.mxu0 0.0
        %426 = vmatprep.subr.mxu0 0.0
        %427 = vmatpush1.msra.mxu0 0.0
        %428 = vmatprep.subr.mxu0 0.0
        %429 = vmatpush1.msra.mxu0 0.0
        %430 = vmatprep.subr.mxu0 0.0
        %431 = vmatpush1.msra.mxu0 0.0
        %432 = vmatprep.subr.mxu0 0.0
        %433 = vmatpush1.msra.mxu0 0.0
        %434 = vmatprep.subr.mxu0 0.0
        %435 = vmatpush1.msra.mxu0 0.0
        %436 = vmatprep.mubr.f32.mxu0 0.0
        %v437 = vand.u32 %v345, 4294901760
        %v438 = vsub.f32 %v345, %v437
        %v439 = vand.u32 %v438, 4294901760
        %v440 = vsub.f32 %v438, %v439
        %v441 = vand.u32 %v440, 4294901760
        %442 = vmatmul.mubr.f32.gmra.mrb[0].mxu0 %v441
        %v443 = vpop.f32.mrb[0].mxu0
        %v444 = vadd.f32 0.0, %v443
        %v445 = vpop.f32.mrb[0].mxu0
        %446 = vmatprep.mubr.f32.mxu0 0.0
        %v447 = vand.u32 %v348, 4294901760
        %v448 = vsub.f32 %v348, %v447
        %v449 = vand.u32 %v448, 4294901760
        %v450 = vsub.f32 %v448, %v449
        %v451 = vand.u32 %v450, 4294901760
        %452 = vmatmul.mubr.f32.gmra.mrb[0].mxu0 %v451
        %v453 = vpop.f32.mrb[0].mxu0
        %v454 = vadd.f32 0.0, %v453
        %v455 = vpop.f32.mrb[0].mxu0
        %456 = vmatprep.mubr.f32.mxu0 0.0
        %v457 = vand.u32 %v351, 4294901760
        %v458 = vsub.f32 %v351, %v457
        %v459 = vand.u32 %v458, 4294901760
        %v460 = vsub.f32 %v458, %v459
        %v461 = vand.u32 %v460, 4294901760
        %462 = vmatmul.mubr.f32.gmra.mrb[0].mxu0 %v461
        %v463 = vpop.f32.mrb[0].mxu0
        %v464 = vadd.f32 0.0, %v463
        %v465 = vpop.f32.mrb[0].mxu0
        %466 = vmatprep.mubr.f32.mxu0 0.0
        %v467 = vand.u32 %v354, 4294901760
        %v468 = vsub.f32 %v354, %v467
        %v469 = vand.u32 %v468, 4294901760
        %v470 = vsub.f32 %v468, %v469
        %v471 = vand.u32 %v470, 4294901760
        %472 = vmatmul.mubr.f32.gmra.mrb[0].mxu0 %v471
        %v473 = vpop.f32.mrb[0].mxu0
        %v474 = vadd.f32 0.0, %v473
        %v475 = vpop.f32.mrb[0].mxu0
        %476 = vmatprep.mubr.f32.mxu0 0.0
        %v477 = vand.u32 %v357, 4294901760
        %v478 = vsub.f32 %v357, %v477
        %v479 = vand.u32 %v478, 4294901760
        %v480 = vsub.f32 %v478, %v479
        %v481 = vand.u32 %v480, 4294901760
        %482 = vmatmul.mubr.f32.gmra.mrb[0].mxu0 %v481
        %v483 = vpop.f32.mrb[0].mxu0
        %v484 = vadd.f32 0.0, %v483
        %v485 = vpop.f32.mrb[0].mxu0
        %486 = vmatprep.mubr.f32.mxu0 0.0
        %v487 = vand.u32 %v360, 4294901760
        %v488 = vsub.f32 %v360, %v487
        %v489 = vand.u32 %v488, 4294901760
        %v490 = vsub.f32 %v488, %v489
        %v491 = vand.u32 %v490, 4294901760
        %492 = vmatmul.mubr.f32.gmra.mrb[0].mxu0 %v491
        %v493 = vpop.f32.mrb[0].mxu0
        %v494 = vadd.f32 0.0, %v493
        %v495 = vpop.f32.mrb[0].mxu0
        %496 = vmatprep.mubr.f32.mxu0 0.0
        %v497 = vand.u32 %v363, 4294901760
        %v498 = vsub.f32 %v363, %v497
        %v499 = vand.u32 %v498, 4294901760
        %v500 = vsub.f32 %v498, %v499
        %v501 = vand.u32 %v500, 4294901760
        %502 = vmatmul.mubr.f32.gmra.mrb[0].mxu0 %v501
        %v503 = vpop.f32.mrb[0].mxu0
        %v504 = vadd.f32 0.0, %v503
        %v505 = vpop.f32.mrb[0].mxu0
        %506 = vmatprep.mubr.f32.mxu0 0.0
        %v507 = vand.u32 %v366, 4294901760
        %v508 = vsub.f32 %v366, %v507
        %v509 = vand.u32 %v508, 4294901760
        %v510 = vsub.f32 %v508, %v509
        %v511 = vand.u32 %v510, 4294901760
        %512 = vmatmul.mubr.f32.gmra.mrb[0].mxu0 %v511
        %v513 = vpop.f32.mrb[0].mxu0
        %v514 = vadd.f32 0.0, %v513
        %v515 = vpop.f32.mrb[0].mxu0
        %516 = vdwg.mxu0
        %517 = vmatprep.subr.mxu0 0.0
        %v518 = vand.u32 %v339, 4294901760
        %v519 = vsub.f32 %v339, %v518
        %v520 = vand.u32 %v519, 4294901760
        %v521 = vsub.f32 %v519, %v520
        %v522 = vand.u32 %v521, 4294901760
        %523 = vmatpush1.msra.mxu0 %v522
        %524 = vmatprep.subr.mxu0 0.0
        %v525 = vand.u32 %v340, 4294901760
        %v526 = vsub.f32 %v340, %v525
        %v527 = vand.u32 %v526, 4294901760
        %v528 = vsub.f32 %v526, %v527
        %v529 = vand.u32 %v528, 4294901760
        %530 = vmatpush1.msra.mxu0 %v529
        %531 = vmatprep.subr.mxu0 0.0
        %v532 = vand.u32 %v341, 4294901760
        %v533 = vsub.f32 %v341, %v532
        %v534 = vand.u32 %v533, 4294901760
        %v535 = vsub.f32 %v533, %v534
        %v536 = vand.u32 %v535, 4294901760
        %537 = vmatpush1.msra.mxu0 %v536
        %538 = vmatprep.subr.mxu0 0.0
        %v539 = vand.u32 %v342, 4294901760
        %v540 = vsub.f32 %v342, %v539
        %v541 = vand.u32 %v540, 4294901760
        %v542 = vsub.f32 %v540, %v541
        %v543 = vand.u32 %v542, 4294901760
        %544 = vmatpush1.msra.mxu0 %v543
        %545 = vmatprep.subr.mxu0 0.0
        %546 = vmatpush1.msra.mxu0 0.0
        %547 = vmatprep.subr.mxu0 0.0
        %548 = vmatpush1.msra.mxu0 0.0
        %549 = vmatprep.subr.mxu0 0.0
        %550 = vmatpush1.msra.mxu0 0.0
        %551 = vmatprep.subr.mxu0 0.0
        %552 = vmatpush1.msra.mxu0 0.0
        %553 = vmatprep.subr.mxu0 0.0
        %554 = vmatpush1.msra.mxu0 0.0
        %555 = vmatprep.subr.mxu0 0.0
        %556 = vmatpush1.msra.mxu0 0.0
        %557 = vmatprep.subr.mxu0 0.0
        %558 = vmatpush1.msra.mxu0 0.0
        %559 = vmatprep.subr.mxu0 0.0
        %560 = vmatpush1.msra.mxu0 0.0
        %561 = vmatprep.subr.mxu0 0.0
        %562 = vmatpush1.msra.mxu0 0.0
        %563 = vmatprep.subr.mxu0 0.0
        %564 = vmatpush1.msra.mxu0 0.0
        %565 = vmatprep.subr.mxu0 0.0
        %566 = vmatpush1.msra.mxu0 0.0
        %567 = vmatprep.subr.mxu0 0.0
        %568 = vmatpush1.msra.mxu0 0.0
        %569 = vmatprep.subr.mxu0 0.0
        %570 = vmatpush1.msra.mxu0 0.0
        %571 = vmatprep.subr.mxu0 0.0
        %572 = vmatpush1.msra.mxu0 0.0
        %573 = vmatprep.subr.mxu0 0.0
        %574 = vmatpush1.msra.mxu0 0.0
        %575 = vmatprep.subr.mxu0 0.0
        %576 = vmatpush1.msra.mxu0 0.0
        %577 = vmatprep.subr.mxu0 0.0
        %578 = vmatpush1.msra.mxu0 0.0
        %579 = vmatprep.subr.mxu0 0.0
        %580 = vmatpush1.msra.mxu0 0.0
        %581 = vmatprep.subr.mxu0 0.0
        %582 = vmatpush1.msra.mxu0 0.0
        %583 = vmatprep.subr.mxu0 0.0
        %584 = vmatpush1.msra.mxu0 0.0
        %585 = vmatprep.subr.mxu0 0.0
        %586 = vmatpush1.msra.mxu0 0.0
        %587 = vmatprep.subr.mxu0 0.0
        %588 = vmatpush1.msra.mxu0 0.0
        %589 = vmatprep.subr.mxu0 0.0
        %590 = vmatpush1.msra.mxu0 0.0
        %591 = vmatprep.subr.mxu0 0.0
        %592 = vmatpush1.msra.mxu0 0.0
        %593 = vmatprep.subr.mxu0 0.0
        %594 = vmatpush1.msra.mxu0 0.0
        %595 = vmatprep.subr.mxu0 0.0
        %596 = vmatpush1.msra.mxu0 0.0
        %597 = vmatprep.subr.mxu0 0.0
        %598 = vmatpush1.msra.mxu0 0.0
        %599 = vmatprep.subr.mxu0 0.0
        %600 = vmatpush1.msra.mxu0 0.0
        %601 = vmatprep.mubr.f32.mxu0 0.0
        %v602 = vand.u32 %v345, 4294901760
        %603 = vmatmul.mubr.f32.gmra.mrb[0].mxu0 %v602
        %v604 = vpop.f32.mrb[0].mxu0
        %v605 = vadd.f32 %v444, %v604
        %v606 = vpop.f32.mrb[0].mxu0
        %607 = vmatprep.mubr.f32.mxu0 0.0
        %v608 = vand.u32 %v348, 4294901760
        %609 = vmatmul.mubr.f32.gmra.mrb[0].mxu0 %v608
        %v610 = vpop.f32.mrb[0].mxu0
        %v611 = vadd.f32 %v454, %v610
        %v612 = vpop.f32.mrb[0].mxu0
        %613 = vmatprep.mubr.f32.mxu0 0.0
        %v614 = vand.u32 %v351, 4294901760
        %615 = vmatmul.mubr.f32.gmra.mrb[0].mxu0 %v614
        %v616 = vpop.f32.mrb[0].mxu0
        %v617 = vadd.f32 %v464, %v616
        %v618 = vpop.f32.mrb[0].mxu0
        %619 = vmatprep.mubr.f32.mxu0 0.0
        %v620 = vand.u32 %v354, 4294901760
        %621 = vmatmul.mubr.f32.gmra.mrb[0].mxu0 %v620
        %v622 = vpop.f32.mrb[0].mxu0
        %v623 = vadd.f32 %v474, %v622
        %v624 = vpop.f32.mrb[0].mxu0
        %625 = vmatprep.mubr.f32.mxu0 0.0
        %v626 = vand.u32 %v357, 4294901760
        %627 = vmatmul.mubr.f32.gmra.mrb[0].mxu0 %v626
        %v628 = vpop.f32.mrb[0].mxu0
        %v629 = vadd.f32 %v484, %v628
        %v630 = vpop.f32.mrb[0].mxu0
        %631 = vmatprep.mubr.f32.mxu0 0.0
        %v632 = vand.u32 %v360, 4294901760
        %633 = vmatmul.mubr.f32.gmra.mrb[0].mxu0 %v632
        %v634 = vpop.f32.mrb[0].mxu0
        %v635 = vadd.f32 %v494, %v634
        %v636 = vpop.f32.mrb[0].mxu0
        %637 = vmatprep.mubr.f32.mxu0 0.0
        %v638 = vand.u32 %v363, 4294901760
        %639 = vmatmul.mubr.f32.gmra.mrb[0].mxu0 %v638
        %v640 = vpop.f32.mrb[0].mxu0
        %v641 = vadd.f32 %v504, %v640
        %v642 = vpop.f32.mrb[0].mxu0
        %643 = vmatprep.mubr.f32.mxu0 0.0
        %v644 = vand.u32 %v366, 4294901760
        %645 = vmatmul.mubr.f32.gmra.mrb[0].mxu0 %v644
        %v646 = vpop.f32.mrb[0].mxu0
        %v647 = vadd.f32 %v514, %v646
        %v648 = vpop.f32.mrb[0].mxu0
        %649 = vdwg.mxu0
        %650 = vmatprep.subr.mxu0 0.0
        %v651 = vand.u32 %v339, 4294901760
        %v652 = vsub.f32 %v339, %v651
        %653 = vmatpush1.msra.mxu0 %v652
        %654 = vmatprep.subr.mxu0 0.0
        %v655 = vand.u32 %v340, 4294901760
        %v656 = vsub.f32 %v340, %v655
        %657 = vmatpush1.msra.mxu0 %v656
        %658 = vmatprep.subr.mxu0 0.0
        %v659 = vand.u32 %v341, 4294901760
        %v660 = vsub.f32 %v341, %v659
        %661 = vmatpush1.msra.mxu0 %v660
        %662 = vmatprep.subr.mxu0 0.0
        %v663 = vand.u32 %v342, 4294901760
        %v664 = vsub.f32 %v342, %v663
        %665 = vmatpush1.msra.mxu0 %v664
        %666 = vmatprep.subr.mxu0 0.0
        %667 = vmatpush1.msra.mxu0 0.0
        %668 = vmatprep.subr.mxu0 0.0
        %669 = vmatpush1.msra.mxu0 0.0
        %670 = vmatprep.subr.mxu0 0.0
        %671 = vmatpush1.msra.mxu0 0.0
        %672 = vmatprep.subr.mxu0 0.0
        %673 = vmatpush1.msra.mxu0 0.0
        %674 = vmatprep.subr.mxu0 0.0
        %675 = vmatpush1.msra.mxu0 0.0
        %676 = vmatprep.subr.mxu0 0.0
        %677 = vmatpush1.msra.mxu0 0.0
        %678 = vmatprep.subr.mxu0 0.0
        %679 = vmatpush1.msra.mxu0 0.0
        %680 = vmatprep.subr.mxu0 0.0
        %681 = vmatpush1.msra.mxu0 0.0
        %682 = vmatprep.subr.mxu0 0.0
        %683 = vmatpush1.msra.mxu0 0.0
        %684 = vmatprep.subr.mxu0 0.0
        %685 = vmatpush1.msra.mxu0 0.0
        %686 = vmatprep.subr.mxu0 0.0
        %687 = vmatpush1.msra.mxu0 0.0
        %688 = vmatprep.subr.mxu0 0.0
        %689 = vmatpush1.msra.mxu0 0.0
        %690 = vmatprep.subr.mxu0 0.0
        %691 = vmatpush1.msra.mxu0 0.0
        %692 = vmatprep.subr.mxu0 0.0
        %693 = vmatpush1.msra.mxu0 0.0
        %694 = vmatprep.subr.mxu0 0.0
        %695 = vmatpush1.msra.mxu0 0.0
        %696 = vmatprep.subr.mxu0 0.0
        %697 = vmatpush1.msra.mxu0 0.0
        %698 = vmatprep.subr.mxu0 0.0
        %699 = vmatpush1.msra.mxu0 0.0
        %700 = vmatprep.subr.mxu0 0.0
        %701 = vmatpush1.msra.mxu0 0.0
        %702 = vmatprep.subr.mxu0 0.0
        %703 = vmatpush1.msra.mxu0 0.0
        %704 = vmatprep.subr.mxu0 0.0
        %705 = vmatpush1.msra.mxu0 0.0
        %706 = vmatprep.subr.mxu0 0.0
        %707 = vmatpush1.msra.mxu0 0.0
        %708 = vmatprep.subr.mxu0 0.0
        %709 = vmatpush1.msra.mxu0 0.0
        %710 = vmatprep.subr.mxu0 0.0
        %711 = vmatpush1.msra.mxu0 0.0
        %712 = vmatprep.subr.mxu0 0.0
        %713 = vmatpush1.msra.mxu0 0.0
        %714 = vmatprep.subr.mxu0 0.0
        %715 = vmatpush1.msra.mxu0 0.0
        %716 = vmatprep.subr.mxu0 0.0
        %717 = vmatpush1.msra.mxu0 0.0
        %718 = vmatprep.subr.mxu0 0.0
        %719 = vmatpush1.msra.mxu0 0.0
        %720 = vmatprep.subr.mxu0 0.0
        %721 = vmatpush1.msra.mxu0 0.0
        %722 = vmatprep.mubr.f32.mxu0 0.0
        %v723 = vand.u32 %v345, 4294901760
        %v724 = vsub.f32 %v345, %v723
        %725 = vmatmul.mubr.f32.gmra.mrb[0].mxu0 %v724
        %v726 = vpop.f32.mrb[0].mxu0
        %v727 = vadd.f32 %v605, %v726
        %v728 = vpop.f32.mrb[0].mxu0
        %729 = vmatprep.mubr.f32.mxu0 0.0
        %v730 = vand.u32 %v348, 4294901760
        %v731 = vsub.f32 %v348, %v730
        %732 = vmatmul.mubr.f32.gmra.mrb[0].mxu0 %v731
        %v733 = vpop.f32.mrb[0].mxu0
        %v734 = vadd.f32 %v611, %v733
        %v735 = vpop.f32.mrb[0].mxu0
        %736 = vmatprep.mubr.f32.mxu0 0.0
        %v737 = vand.u32 %v351, 4294901760
        %v738 = vsub.f32 %v351, %v737
        %739 = vmatmul.mubr.f32.gmra.mrb[0].mxu0 %v738
        %v740 = vpop.f32.mrb[0].mxu0
        %v741 = vadd.f32 %v617, %v740
        %v742 = vpop.f32.mrb[0].mxu0
        %743 = vmatprep.mubr.f32.mxu0 0.0
        %v744 = vand.u32 %v354, 4294901760
        %v745 = vsub.f32 %v354, %v744
        %746 = vmatmul.mubr.f32.gmra.mrb[0].mxu0 %v745
        %v747 = vpop.f32.mrb[0].mxu0
        %v748 = vadd.f32 %v623, %v747
        %v749 = vpop.f32.mrb[0].mxu0
        %750 = vmatprep.mubr.f32.mxu0 0.0
        %v751 = vand.u32 %v357, 4294901760
        %v752 = vsub.f32 %v357, %v751
        %753 = vmatmul.mubr.f32.gmra.mrb[0].mxu0 %v752
        %v754 = vpop.f32.mrb[0].mxu0
        %v755 = vadd.f32 %v629, %v754
        %v756 = vpop.f32.mrb[0].mxu0
        %757 = vmatprep.mubr.f32.mxu0 0.0
        %v758 = vand.u32 %v360, 4294901760
        %v759 = vsub.f32 %v360, %v758
        %760 = vmatmul.mubr.f32.gmra.mrb[0].mxu0 %v759
        %v761 = vpop.f32.mrb[0].mxu0
        %v762 = vadd.f32 %v635, %v761
        %v763 = vpop.f32.mrb[0].mxu0
        %764 = vmatprep.mubr.f32.mxu0 0.0
        %v765 = vand.u32 %v363, 4294901760
        %v766 = vsub.f32 %v363, %v765
        %767 = vmatmul.mubr.f32.gmra.mrb[0].mxu0 %v766
        %v768 = vpop.f32.mrb[0].mxu0
        %v769 = vadd.f32 %v641, %v768
        %v770 = vpop.f32.mrb[0].mxu0
        %771 = vmatprep.mubr.f32.mxu0 0.0
        %v772 = vand.u32 %v366, 4294901760
        %v773 = vsub.f32 %v366, %v772
        %774 = vmatmul.mubr.f32.gmra.mrb[0].mxu0 %v773
        %v775 = vpop.f32.mrb[0].mxu0
        %v776 = vadd.f32 %v647, %v775
        %v777 = vpop.f32.mrb[0].mxu0
        %778 = vdwg.mxu0
        %779 = vmatprep.subr.mxu0 0.0
        %v780 = vand.u32 %v339, 4294901760
        %781 = vmatpush1.msra.mxu0 %v780
        %782 = vmatprep.subr.mxu0 0.0
        %v783 = vand.u32 %v340, 4294901760
        %784 = vmatpush1.msra.mxu0 %v783
        %785 = vmatprep.subr.mxu0 0.0
        %v786 = vand.u32 %v341, 4294901760
        %787 = vmatpush1.msra.mxu0 %v786
        %788 = vmatprep.subr.mxu0 0.0
        %v789 = vand.u32 %v342, 4294901760
        %790 = vmatpush1.msra.mxu0 %v789
        %791 = vmatprep.subr.mxu0 0.0
        %792 = vmatpush1.msra.mxu0 0.0
        %793 = vmatprep.subr.mxu0 0.0
        %794 = vmatpush1.msra.mxu0 0.0
        %795 = vmatprep.subr.mxu0 0.0
        %796 = vmatpush1.msra.mxu0 0.0
        %797 = vmatprep.subr.mxu0 0.0
        %798 = vmatpush1.msra.mxu0 0.0
        %799 = vmatprep.subr.mxu0 0.0
        %800 = vmatpush1.msra.mxu0 0.0
        %801 = vmatprep.subr.mxu0 0.0
        %802 = vmatpush1.msra.mxu0 0.0
        %803 = vmatprep.subr.mxu0 0.0
        %804 = vmatpush1.msra.mxu0 0.0
        %805 = vmatprep.subr.mxu0 0.0
        %806 = vmatpush1.msra.mxu0 0.0
        %807 = vmatprep.subr.mxu0 0.0
        %808 = vmatpush1.msra.mxu0 0.0
        %809 = vmatprep.subr.mxu0 0.0
        %810 = vmatpush1.msra.mxu0 0.0
        %811 = vmatprep.subr.mxu0 0.0
        %812 = vmatpush1.msra.mxu0 0.0
        %813 = vmatprep.subr.mxu0 0.0
        %814 = vmatpush1.msra.mxu0 0.0
        %815 = vmatprep.subr.mxu0 0.0
        %816 = vmatpush1.msra.mxu0 0.0
        %817 = vmatprep.subr.mxu0 0.0
        %818 = vmatpush1.msra.mxu0 0.0
        %819 = vmatprep.subr.mxu0 0.0
        %820 = vmatpush1.msra.mxu0 0.0
        %821 = vmatprep.subr.mxu0 0.0
        %822 = vmatpush1.msra.mxu0 0.0
        %823 = vmatprep.subr.mxu0 0.0
        %824 = vmatpush1.msra.mxu0 0.0
        %825 = vmatprep.subr.mxu0 0.0
        %826 = vmatpush1.msra.mxu0 0.0
        %827 = vmatprep.subr.mxu0 0.0
        %828 = vmatpush1.msra.mxu0 0.0
        %829 = vmatprep.subr.mxu0 0.0
        %830 = vmatpush1.msra.mxu0 0.0
        %831 = vmatprep.subr.mxu0 0.0
        %832 = vmatpush1.msra.mxu0 0.0
        %833 = vmatprep.subr.mxu0 0.0
        %834 = vmatpush1.msra.mxu0 0.0
        %835 = vmatprep.subr.mxu0 0.0
        %836 = vmatpush1.msra.mxu0 0.0
        %837 = vmatprep.subr.mxu0 0.0
        %838 = vmatpush1.msra.mxu0 0.0
        %839 = vmatprep.subr.mxu0 0.0
        %840 = vmatpush1.msra.mxu0 0.0
        %841 = vmatprep.subr.mxu0 0.0
        %842 = vmatpush1.msra.mxu0 0.0
        %843 = vmatprep.subr.mxu0 0.0
        %844 = vmatpush1.msra.mxu0 0.0
        %845 = vmatprep.subr.mxu0 0.0
        %846 = vmatpush1.msra.mxu0 0.0
        %847 = vmatprep.mubr.f32.mxu0 0.0
        %v848 = vand.u32 %v345, 4294901760
        %v849 = vsub.f32 %v345, %v848
        %v850 = vand.u32 %v849, 4294901760
        %851 = vmatmul.mubr.f32.gmra.mrb[0].mxu0 %v850
        %v852 = vpop.f32.mrb[0].mxu0
        %v853 = vadd.f32 %v727, %v852
        %v854 = vpop.f32.mrb[0].mxu0
        %855 = vmatprep.mubr.f32.mxu0 0.0
        %v856 = vand.u32 %v348, 4294901760
        %v857 = vsub.f32 %v348, %v856
        %v858 = vand.u32 %v857, 4294901760
        %859 = vmatmul.mubr.f32.gmra.mrb[0].mxu0 %v858
        %v860 = vpop.f32.mrb[0].mxu0
        %v861 = vadd.f32 %v734, %v860
        %v862 = vpop.f32.mrb[0].mxu0
        %863 = vmatprep.mubr.f32.mxu0 0.0
        %v864 = vand.u32 %v351, 4294901760
        %v865 = vsub.f32 %v351, %v864
        %v866 = vand.u32 %v865, 4294901760
        %867 = vmatmul.mubr.f32.gmra.mrb[0].mxu0 %v866
        %v868 = vpop.f32.mrb[0].mxu0
        %v869 = vadd.f32 %v741, %v868
        %v870 = vpop.f32.mrb[0].mxu0
        %871 = vmatprep.mubr.f32.mxu0 0.0
        %v872 = vand.u32 %v354, 4294901760
        %v873 = vsub.f32 %v354, %v872
        %v874 = vand.u32 %v873, 4294901760
        %875 = vmatmul.mubr.f32.gmra.mrb[0].mxu0 %v874
        %v876 = vpop.f32.mrb[0].mxu0
        %v877 = vadd.f32 %v748, %v876
        %v878 = vpop.f32.mrb[0].mxu0
        %879 = vmatprep.mubr.f32.mxu0 0.0
        %v880 = vand.u32 %v357, 4294901760
        %v881 = vsub.f32 %v357, %v880
        %v882 = vand.u32 %v881, 4294901760
        %883 = vmatmul.mubr.f32.gmra.mrb[0].mxu0 %v882
        %v884 = vpop.f32.mrb[0].mxu0
        %v885 = vadd.f32 %v755, %v884
        %v886 = vpop.f32.mrb[0].mxu0
        %887 = vmatprep.mubr.f32.mxu0 0.0
        %v888 = vand.u32 %v360, 4294901760
        %v889 = vsub.f32 %v360, %v888
        %v890 = vand.u32 %v889, 4294901760
        %891 = vmatmul.mubr.f32.gmra.mrb[0].mxu0 %v890
        %v892 = vpop.f32.mrb[0].mxu0
        %v893 = vadd.f32 %v762, %v892
        %v894 = vpop.f32.mrb[0].mxu0
        %895 = vmatprep.mubr.f32.mxu0 0.0
        %v896 = vand.u32 %v363, 4294901760
        %v897 = vsub.f32 %v363, %v896
        %v898 = vand.u32 %v897, 4294901760
        %899 = vmatmul.mubr.f32.gmra.mrb[0].mxu0 %v898
        %v900 = vpop.f32.mrb[0].mxu0
        %v901 = vadd.f32 %v769, %v900
        %v902 = vpop.f32.mrb[0].mxu0
        %903 = vmatprep.mubr.f32.mxu0 0.0
        %v904 = vand.u32 %v366, 4294901760
        %v905 = vsub.f32 %v366, %v904
        %v906 = vand.u32 %v905, 4294901760
        %907 = vmatmul.mubr.f32.gmra.mrb[0].mxu0 %v906
        %v908 = vpop.f32.mrb[0].mxu0
        %v909 = vadd.f32 %v776, %v908
        %v910 = vpop.f32.mrb[0].mxu0
        %911 = vdwg.mxu0
        %912 = vmatprep.subr.mxu0 0.0
        %v913 = vand.u32 %v339, 4294901760
        %v914 = vsub.f32 %v339, %v913
        %v915 = vand.u32 %v914, 4294901760
        %916 = vmatpush1.msra.mxu0 %v915
        %917 = vmatprep.subr.mxu0 0.0
        %v918 = vand.u32 %v340, 4294901760
        %v919 = vsub.f32 %v340, %v918
        %v920 = vand.u32 %v919, 4294901760
        %921 = vmatpush1.msra.mxu0 %v920
        %922 = vmatprep.subr.mxu0 0.0
        %v923 = vand.u32 %v341, 4294901760
        %v924 = vsub.f32 %v341, %v923
        %v925 = vand.u32 %v924, 4294901760
        %926 = vmatpush1.msra.mxu0 %v925
        %927 = vmatprep.subr.mxu0 0.0
        %v928 = vand.u32 %v342, 4294901760
        %v929 = vsub.f32 %v342, %v928
        %v930 = vand.u32 %v929, 4294901760
        %931 = vmatpush1.msra.mxu0 %v930
        %932 = vmatprep.subr.mxu0 0.0
        %933 = vmatpush1.msra.mxu0 0.0
        %934 = vmatprep.subr.mxu0 0.0
        %935 = vmatpush1.msra.mxu0 0.0
        %936 = vmatprep.subr.mxu0 0.0
        %937 = vmatpush1.msra.mxu0 0.0
        %938 = vmatprep.subr.mxu0 0.0
        %939 = vmatpush1.msra.mxu0 0.0
        %940 = vmatprep.subr.mxu0 0.0
        %941 = vmatpush1.msra.mxu0 0.0
        %942 = vmatprep.subr.mxu0 0.0
        %943 = vmatpush1.msra.mxu0 0.0
        %944 = vmatprep.subr.mxu0 0.0
        %945 = vmatpush1.msra.mxu0 0.0
        %946 = vmatprep.subr.mxu0 0.0
        %947 = vmatpush1.msra.mxu0 0.0
        %948 = vmatprep.subr.mxu0 0.0
        %949 = vmatpush1.msra.mxu0 0.0
        %950 = vmatprep.subr.mxu0 0.0
        %951 = vmatpush1.msra.mxu0 0.0
        %952 = vmatprep.subr.mxu0 0.0
        %953 = vmatpush1.msra.mxu0 0.0
        %954 = vmatprep.subr.mxu0 0.0
        %955 = vmatpush1.msra.mxu0 0.0
        %956 = vmatprep.subr.mxu0 0.0
        %957 = vmatpush1.msra.mxu0 0.0
        %958 = vmatprep.subr.mxu0 0.0
        %959 = vmatpush1.msra.mxu0 0.0
        %960 = vmatprep.subr.mxu0 0.0
        %961 = vmatpush1.msra.mxu0 0.0
        %962 = vmatprep.subr.mxu0 0.0
        %963 = vmatpush1.msra.mxu0 0.0
        %964 = vmatprep.subr.mxu0 0.0
        %965 = vmatpush1.msra.mxu0 0.0
        %966 = vmatprep.subr.mxu0 0.0
        %967 = vmatpush1.msra.mxu0 0.0
        %968 = vmatprep.subr.mxu0 0.0
        %969 = vmatpush1.msra.mxu0 0.0
        %970 = vmatprep.subr.mxu0 0.0
        %971 = vmatpush1.msra.mxu0 0.0
        %972 = vmatprep.subr.mxu0 0.0
        %973 = vmatpush1.msra.mxu0 0.0
        %974 = vmatprep.subr.mxu0 0.0
        %975 = vmatpush1.msra.mxu0 0.0
        %976 = vmatprep.subr.mxu0 0.0
        %977 = vmatpush1.msra.mxu0 0.0
        %978 = vmatprep.subr.mxu0 0.0
        %979 = vmatpush1.msra.mxu0 0.0
        %980 = vmatprep.subr.mxu0 0.0
        %981 = vmatpush1.msra.mxu0 0.0
        %982 = vmatprep.subr.mxu0 0.0
        %983 = vmatpush1.msra.mxu0 0.0
        %984 = vmatprep.subr.mxu0 0.0
        %985 = vmatpush1.msra.mxu0 0.0
        %986 = vmatprep.subr.mxu0 0.0
        %987 = vmatpush1.msra.mxu0 0.0
        %988 = vmatprep.mubr.f32.mxu0 0.0
        %v989 = vand.u32 %v345, 4294901760
        %990 = vmatmul.mubr.f32.gmra.mrb[0].mxu0 %v989
        %v991 = vpop.f32.mrb[0].mxu0
        %v992 = vadd.f32 %v853, %v991
        %v993 = vpop.f32.mrb[0].mxu0
        %994 = vmatprep.mubr.f32.mxu0 0.0
        %v995 = vand.u32 %v348, 4294901760
        %996 = vmatmul.mubr.f32.gmra.mrb[0].mxu0 %v995
        %v997 = vpop.f32.mrb[0].mxu0
        %v998 = vadd.f32 %v861, %v997
        %v999 = vpop.f32.mrb[0].mxu0
        %1000 = vmatprep.mubr.f32.mxu0 0.0
        %v1001 = vand.u32 %v351, 4294901760
        %1002 = vmatmul.mubr.f32.gmra.mrb[0].mxu0 %v1001
        %v1003 = vpop.f32.mrb[0].mxu0
        %v1004 = vadd.f32 %v869, %v1003
        %v1005 = vpop.f32.mrb[0].mxu0
        %1006 = vmatprep.mubr.f32.mxu0 0.0
        %v1007 = vand.u32 %v354, 4294901760
        %1008 = vmatmul.mubr.f32.gmra.mrb[0].mxu0 %v1007
        %v1009 = vpop.f32.mrb[0].mxu0
        %v1010 = vadd.f32 %v877, %v1009
        %v1011 = vpop.f32.mrb[0].mxu0
        %1012 = vmatprep.mubr.f32.mxu0 0.0
        %v1013 = vand.u32 %v357, 4294901760
        %1014 = vmatmul.mubr.f32.gmra.mrb[0].mxu0 %v1013
        %v1015 = vpop.f32.mrb[0].mxu0
        %v1016 = vadd.f32 %v885, %v1015
        %v1017 = vpop.f32.mrb[0].mxu0
        %1018 = vmatprep.mubr.f32.mxu0 0.0
        %v1019 = vand.u32 %v360, 4294901760
        %1020 = vmatmul.mubr.f32.gmra.mrb[0].mxu0 %v1019
        %v1021 = vpop.f32.mrb[0].mxu0
        %v1022 = vadd.f32 %v893, %v1021
        %v1023 = vpop.f32.mrb[0].mxu0
        %1024 = vmatprep.mubr.f32.mxu0 0.0
        %v1025 = vand.u32 %v363, 4294901760
        %1026 = vmatmul.mubr.f32.gmra.mrb[0].mxu0 %v1025
        %v1027 = vpop.f32.mrb[0].mxu0
        %v1028 = vadd.f32 %v901, %v1027
        %v1029 = vpop.f32.mrb[0].mxu0
        %1030 = vmatprep.mubr.f32.mxu0 0.0
        %v1031 = vand.u32 %v366, 4294901760
        %1032 = vmatmul.mubr.f32.gmra.mrb[0].mxu0 %v1031
        %v1033 = vpop.f32.mrb[0].mxu0
        %v1034 = vadd.f32 %v909, %v1033
        %v1035 = vpop.f32.mrb[0].mxu0
        %1036 = vdwg.mxu0
        %1037 = vmatprep.subr.mxu0 0.0
        %v1038 = vand.u32 %v339, 4294901760
        %1039 = vmatpush1.msra.mxu0 %v1038
        %1040 = vmatprep.subr.mxu0 0.0
        %v1041 = vand.u32 %v340, 4294901760
        %1042 = vmatpush1.msra.mxu0 %v1041
        %1043 = vmatprep.subr.mxu0 0.0
        %v1044 = vand.u32 %v341, 4294901760
        %1045 = vmatpush1.msra.mxu0 %v1044
        %1046 = vmatprep.subr.mxu0 0.0
        %v1047 = vand.u32 %v342, 4294901760
        %1048 = vmatpush1.msra.mxu0 %v1047
        %1049 = vmatprep.subr.mxu0 0.0
        %1050 = vmatpush1.msra.mxu0 0.0
        %1051 = vmatprep.subr.mxu0 0.0
        %1052 = vmatpush1.msra.mxu0 0.0
        %1053 = vmatprep.subr.mxu0 0.0
        %1054 = vmatpush1.msra.mxu0 0.0
        %1055 = vmatprep.subr.mxu0 0.0
        %1056 = vmatpush1.msra.mxu0 0.0
        %1057 = vmatprep.subr.mxu0 0.0
        %1058 = vmatpush1.msra.mxu0 0.0
        %1059 = vmatprep.subr.mxu0 0.0
        %1060 = vmatpush1.msra.mxu0 0.0
        %1061 = vmatprep.subr.mxu0 0.0
        %1062 = vmatpush1.msra.mxu0 0.0
        %1063 = vmatprep.subr.mxu0 0.0
        %1064 = vmatpush1.msra.mxu0 0.0
        %1065 = vmatprep.subr.mxu0 0.0
        %1066 = vmatpush1.msra.mxu0 0.0
        %1067 = vmatprep.subr.mxu0 0.0
        %1068 = vmatpush1.msra.mxu0 0.0
        %1069 = vmatprep.subr.mxu0 0.0
        %1070 = vmatpush1.msra.mxu0 0.0
        %1071 = vmatprep.subr.mxu0 0.0
        %1072 = vmatpush1.msra.mxu0 0.0
        %1073 = vmatprep.subr.mxu0 0.0
        %1074 = vmatpush1.msra.mxu0 0.0
        %1075 = vmatprep.subr.mxu0 0.0
        %1076 = vmatpush1.msra.mxu0 0.0
        %1077 = vmatprep.subr.mxu0 0.0
        %1078 = vmatpush1.msra.mxu0 0.0
        %1079 = vmatprep.subr.mxu0 0.0
        %1080 = vmatpush1.msra.mxu0 0.0
        %1081 = vmatprep.subr.mxu0 0.0
        %1082 = vmatpush1.msra.mxu0 0.0
        %1083 = vmatprep.subr.mxu0 0.0
        %1084 = vmatpush1.msra.mxu0 0.0
        %1085 = vmatprep.subr.mxu0 0.0
        %1086 = vmatpush1.msra.mxu0 0.0
        %1087 = vmatprep.subr.mxu0 0.0
        %1088 = vmatpush1.msra.mxu0 0.0
        %1089 = vmatprep.subr.mxu0 0.0
        %1090 = vmatpush1.msra.mxu0 0.0
        %1091 = vmatprep.subr.mxu0 0.0
        %1092 = vmatpush1.msra.mxu0 0.0
        %1093 = vmatprep.subr.mxu0 0.0
        %1094 = vmatpush1.msra.mxu0 0.0
        %1095 = vmatprep.subr.mxu0 0.0
        %1096 = vmatpush1.msra.mxu0 0.0
        %1097 = vmatprep.subr.mxu0 0.0
        %1098 = vmatpush1.msra.mxu0 0.0
        %1099 = vmatprep.subr.mxu0 0.0
        %1100 = vmatpush1.msra.mxu0 0.0
        %1101 = vmatprep.subr.mxu0 0.0
        %1102 = vmatpush1.msra.mxu0 0.0
        %1103 = vmatprep.subr.mxu0 0.0
        %1104 = vmatpush1.msra.mxu0 0.0
        %1105 = vmatprep.mubr.f32.mxu0 0.0
        %v1106 = vand.u32 %v345, 4294901760
        %1107 = vmatmul.mubr.f32.gmra.mrb[0].mxu0 %v1106
        %v1108 = vpop.f32.mrb[0].mxu0
        %v1109 = vadd.f32 %v992, %v1108
        %v1110 = vpop.f32.mrb[0].mxu0
        %1111 = vmatprep.mubr.f32.mxu0 0.0
        %v1112 = vand.u32 %v348, 4294901760
        %1113 = vmatmul.mubr.f32.gmra.mrb[0].mxu0 %v1112
        %v1114 = vpop.f32.mrb[0].mxu0
        %v1115 = vadd.f32 %v998, %v1114
        %v1116 = vpop.f32.mrb[0].mxu0
        %1117 = vmatprep.mubr.f32.mxu0 0.0
        %v1118 = vand.u32 %v351, 4294901760
        %1119 = vmatmul.mubr.f32.gmra.mrb[0].mxu0 %v1118
        %v1120 = vpop.f32.mrb[0].mxu0
        %v1121 = vadd.f32 %v1004, %v1120
        %v1122 = vpop.f32.mrb[0].mxu0
        %1123 = vmatprep.mubr.f32.mxu0 0.0
        %v1124 = vand.u32 %v354, 4294901760
        %1125 = vmatmul.mubr.f32.gmra.mrb[0].mxu0 %v1124
        %v1126 = vpop.f32.mrb[0].mxu0
        %v1127 = vadd.f32 %v1010, %v1126
        %v1128 = vpop.f32.mrb[0].mxu0
        %1129 = vmatprep.mubr.f32.mxu0 0.0
        %v1130 = vand.u32 %v357, 4294901760
        %1131 = vmatmul.mubr.f32.gmra.mrb[0].mxu0 %v1130
        %v1132 = vpop.f32.mrb[0].mxu0
        %v1133 = vadd.f32 %v1016, %v1132
        %v1134 = vpop.f32.mrb[0].mxu0
        %1135 = vmatprep.mubr.f32.mxu0 0.0
        %v1136 = vand.u32 %v360, 4294901760
        %1137 = vmatmul.mubr.f32.gmra.mrb[0].mxu0 %v1136
        %v1138 = vpop.f32.mrb[0].mxu0
        %v1139 = vadd.f32 %v1022, %v1138
        %v1140 = vpop.f32.mrb[0].mxu0
        %1141 = vmatprep.mubr.f32.mxu0 0.0
        %v1142 = vand.u32 %v363, 4294901760
        %1143 = vmatmul.mubr.f32.gmra.mrb[0].mxu0 %v1142
        %v1144 = vpop.f32.mrb[0].mxu0
        %v1145 = vadd.f32 %v1028, %v1144
        %v1146 = vpop.f32.mrb[0].mxu0
        %1147 = vmatprep.mubr.f32.mxu0 0.0
        %v1148 = vand.u32 %v366, 4294901760
        %1149 = vmatmul.mubr.f32.gmra.mrb[0].mxu0 %v1148
        %v1150 = vpop.f32.mrb[0].mxu0
        %v1151 = vadd.f32 %v1034, %v1150
        %v1152 = vpop.f32.mrb[0].mxu0
        %1153 = vdwg.mxu0
        %1154 = vxpose.xlu0.b32.start [1/16] %v1109, 128
        %1155 = vxpose.xlu0.b32.cont [2/16] %v1115, 128
        %1156 = vxpose.xlu0.b32.cont [3/16] 0.0, 128
        %1157 = vxpose.xlu0.b32.cont [4/16] 0.0, 128
        %1158 = vxpose.xlu0.b32.cont [5/16] 0.0, 128
        %1159 = vxpose.xlu0.b32.cont [6/16] 0.0, 128
        %1160 = vxpose.xlu0.b32.cont [7/16] 0.0, 128
        %1161 = vxpose.xlu0.b32.cont [8/16] 0.0, 128
        %1162 = vxpose.xlu0.b32.cont [9/16] 0.0, 128
        %1163 = vxpose.xlu0.b32.cont [10/16] 0.0, 128
        %1164 = vxpose.xlu0.b32.cont [11/16] 0.0, 128
        %1165 = vxpose.xlu0.b32.cont [12/16] 0.0, 128
        %1166 = vxpose.xlu0.b32.cont [13/16] 0.0, 128
        %1167 = vxpose.xlu0.b32.cont [14/16] 0.0, 128
        %1168 = vxpose.xlu0.b32.cont [15/16] 0.0, 128
        %1169 = vxpose.xlu0.b32.end [16/16] 0.0, 128
        %v1170 = vpop.trf.xlu0
        %v1171 = vpop.trf.xlu0
        %v1172 = vpop.trf.xlu0
        %v1173 = vpop.trf.xlu0
        %v1174 = vpop.trf.xlu0
        %v1175 = vpop.trf.xlu0
        %v1176 = vpop.trf.xlu0
        %v1177 = vpop.trf.xlu0
        %v1178 = vpop.trf.xlu0
        %v1179 = vpop.trf.xlu0
        %v1180 = vpop.trf.xlu0
        %v1181 = vpop.trf.xlu0
        %v1182 = vpop.trf.xlu0
        %v1183 = vpop.trf.xlu0
        %v1184 = vpop.trf.xlu0
        %v1185 = vpop.trf.xlu0
        %1188 = vrot.lane.b32.xlu0 %v1109, 112
        %v1189 = vpop.permute.xlu0 %1188
        %1190 = vrot.lane.b32.xlu0 %v1115, 112
        %v1191 = vpop.permute.xlu0 %1190
        %1194 = vxpose.xlu0.b32.start [1/16] %v1189, 128
        %1195 = vxpose.xlu0.b32.cont [2/16] %v1191, 128
        %1196 = vxpose.xlu0.b32.cont [3/16] 0.0, 128
        %1197 = vxpose.xlu0.b32.cont [4/16] 0.0, 128
        %1198 = vxpose.xlu0.b32.cont [5/16] 0.0, 128
        %1199 = vxpose.xlu0.b32.cont [6/16] 0.0, 128
        %1200 = vxpose.xlu0.b32.cont [7/16] 0.0, 128
        %1201 = vxpose.xlu0.b32.cont [8/16] 0.0, 128
        %1202 = vxpose.xlu0.b32.cont [9/16] 0.0, 128
        %1203 = vxpose.xlu0.b32.cont [10/16] 0.0, 128
        %1204 = vxpose.xlu0.b32.cont [11/16] 0.0, 128
        %1205 = vxpose.xlu0.b32.cont [12/16] 0.0, 128
        %1206 = vxpose.xlu0.b32.cont [13/16] 0.0, 128
        %1207 = vxpose.xlu0.b32.cont [14/16] 0.0, 128
        %1208 = vxpose.xlu0.b32.cont [15/16] 0.0, 128
        %1209 = vxpose.xlu0.b32.end [16/16] 0.0, 128
        %v1210 = vpop.trf.xlu0
        %v1211 = vpop.trf.xlu0
        %v1212 = vpop.trf.xlu0
        %v1213 = vpop.trf.xlu0
        %v1214 = vpop.trf.xlu0
        %v1215 = vpop.trf.xlu0
        %v1216 = vpop.trf.xlu0
        %v1217 = vpop.trf.xlu0
        %v1218 = vpop.trf.xlu0
        %v1219 = vpop.trf.xlu0
        %v1220 = vpop.trf.xlu0
        %v1221 = vpop.trf.xlu0
        %v1222 = vpop.trf.xlu0
        %v1223 = vpop.trf.xlu0
        %v1224 = vpop.trf.xlu0
        %v1225 = vpop.trf.xlu0
        %1228 = vrot.lane.b32.xlu0 %v1210, 16
        %v1229 = vpop.permute.xlu0 %1228
        %1230 = vrot.lane.b32.xlu0 %v1211, 16
        %v1231 = vpop.permute.xlu0 %1230
        %vm1234 = vcmask 130048
        %v1235 = vsel %vm1234, %v1170, %v1229
        %v1236 = vsel %vm1234, %v1171, %v1231
        %1237 = vxpose.xlu0.b32.start [1/16] %v1121, 128
        %1238 = vxpose.xlu0.b32.cont [2/16] %v1127, 128
        %1239 = vxpose.xlu0.b32.cont [3/16] 0.0, 128
        %1240 = vxpose.xlu0.b32.cont [4/16] 0.0, 128
        %1241 = vxpose.xlu0.b32.cont [5/16] 0.0, 128
        %1242 = vxpose.xlu0.b32.cont [6/16] 0.0, 128
        %1243 = vxpose.xlu0.b32.cont [7/16] 0.0, 128
        %1244 = vxpose.xlu0.b32.cont [8/16] 0.0, 128
        %1245 = vxpose.xlu0.b32.cont [9/16] 0.0, 128
        %1246 = vxpose.xlu0.b32.cont [10/16] 0.0, 128
        %1247 = vxpose.xlu0.b32.cont [11/16] 0.0, 128
        %1248 = vxpose.xlu0.b32.cont [12/16] 0.0, 128
        %1249 = vxpose.xlu0.b32.cont [13/16] 0.0, 128
        %1250 = vxpose.xlu0.b32.cont [14/16] 0.0, 128
        %1251 = vxpose.xlu0.b32.cont [15/16] 0.0, 128
        %1252 = vxpose.xlu0.b32.end [16/16] 0.0, 128
        %v1253 = vpop.trf.xlu0
        %v1254 = vpop.trf.xlu0
        %v1255 = vpop.trf.xlu0
        %v1256 = vpop.trf.xlu0
        %v1257 = vpop.trf.xlu0
        %v1258 = vpop.trf.xlu0
        %v1259 = vpop.trf.xlu0
        %v1260 = vpop.trf.xlu0
        %v1261 = vpop.trf.xlu0
        %v1262 = vpop.trf.xlu0
        %v1263 = vpop.trf.xlu0
        %v1264 = vpop.trf.xlu0
        %v1265 = vpop.trf.xlu0
        %v1266 = vpop.trf.xlu0
        %v1267 = vpop.trf.xlu0
        %v1268 = vpop.trf.xlu0
        %1271 = vrot.lane.b32.xlu0 %v1121, 112
        %v1272 = vpop.permute.xlu0 %1271
        %1273 = vrot.lane.b32.xlu0 %v1127, 112
        %v1274 = vpop.permute.xlu0 %1273
        %1277 = vxpose.xlu0.b32.start [1/16] %v1272, 128
        %1278 = vxpose.xlu0.b32.cont [2/16] %v1274, 128
        %1279 = vxpose.xlu0.b32.cont [3/16] 0.0, 128
        %1280 = vxpose.xlu0.b32.cont [4/16] 0.0, 128
        %1281 = vxpose.xlu0.b32.cont [5/16] 0.0, 128
        %1282 = vxpose.xlu0.b32.cont [6/16] 0.0, 128
        %1283 = vxpose.xlu0.b32.cont [7/16] 0.0, 128
        %1284 = vxpose.xlu0.b32.cont [8/16] 0.0, 128
        %1285 = vxpose.xlu0.b32.cont [9/16] 0.0, 128
        %1286 = vxpose.xlu0.b32.cont [10/16] 0.0, 128
        %1287 = vxpose.xlu0.b32.cont [11/16] 0.0, 128
        %1288 = vxpose.xlu0.b32.cont [12/16] 0.0, 128
        %1289 = vxpose.xlu0.b32.cont [13/16] 0.0, 128
        %1290 = vxpose.xlu0.b32.cont [14/16] 0.0, 128
        %1291 = vxpose.xlu0.b32.cont [15/16] 0.0, 128
        %1292 = vxpose.xlu0.b32.end [16/16] 0.0, 128
        %v1293 = vpop.trf.xlu0
        %v1294 = vpop.trf.xlu0
        %v1295 = vpop.trf.xlu0
        %v1296 = vpop.trf.xlu0
        %v1297 = vpop.trf.xlu0
        %v1298 = vpop.trf.xlu0
        %v1299 = vpop.trf.xlu0
        %v1300 = vpop.trf.xlu0
        %v1301 = vpop.trf.xlu0
        %v1302 = vpop.trf.xlu0
        %v1303 = vpop.trf.xlu0
        %v1304 = vpop.trf.xlu0
        %v1305 = vpop.trf.xlu0
        %v1306 = vpop.trf.xlu0
        %v1307 = vpop.trf.xlu0
        %v1308 = vpop.trf.xlu0
        %1311 = vrot.lane.b32.xlu0 %v1293, 16
        %v1312 = vpop.permute.xlu0 %1311
        %1313 = vrot.lane.b32.xlu0 %v1294, 16
        %v1314 = vpop.permute.xlu0 %1313
        %v1317 = vsel %vm1234, %v1253, %v1312
        %v1318 = vsel %vm1234, %v1254, %v1314
        %1319 = vxpose.xlu0.b32.start [1/16] %v1133, 128
        %1320 = vxpose.xlu0.b32.cont [2/16] %v1139, 128
        %1321 = vxpose.xlu0.b32.cont [3/16] 0.0, 128
        %1322 = vxpose.xlu0.b32.cont [4/16] 0.0, 128
        %1323 = vxpose.xlu0.b32.cont [5/16] 0.0, 128
        %1324 = vxpose.xlu0.b32.cont [6/16] 0.0, 128
        %1325 = vxpose.xlu0.b32.cont [7/16] 0.0, 128
        %1326 = vxpose.xlu0.b32.cont [8/16] 0.0, 128
        %1327 = vxpose.xlu0.b32.cont [9/16] 0.0, 128
        %1328 = vxpose.xlu0.b32.cont [10/16] 0.0, 128
        %1329 = vxpose.xlu0.b32.cont [11/16] 0.0, 128
        %1330 = vxpose.xlu0.b32.cont [12/16] 0.0, 128
        %1331 = vxpose.xlu0.b32.cont [13/16] 0.0, 128
        %1332 = vxpose.xlu0.b32.cont [14/16] 0.0, 128
        %1333 = vxpose.xlu0.b32.cont [15/16] 0.0, 128
        %1334 = vxpose.xlu0.b32.end [16/16] 0.0, 128
        %v1335 = vpop.trf.xlu0
        %v1336 = vpop.trf.xlu0
        %v1337 = vpop.trf.xlu0
        %v1338 = vpop.trf.xlu0
        %v1339 = vpop.trf.xlu0
        %v1340 = vpop.trf.xlu0
        %v1341 = vpop.trf.xlu0
        %v1342 = vpop.trf.xlu0
        %v1343 = vpop.trf.xlu0
        %v1344 = vpop.trf.xlu0
        %v1345 = vpop.trf.xlu0
        %v1346 = vpop.trf.xlu0
        %v1347 = vpop.trf.xlu0
        %v1348 = vpop.trf.xlu0
        %v1349 = vpop.trf.xlu0
        %v1350 = vpop.trf.xlu0
        %1353 = vrot.lane.b32.xlu0 %v1133, 112
        %v1354 = vpop.permute.xlu0 %1353
        %1355 = vrot.lane.b32.xlu0 %v1139, 112
        %v1356 = vpop.permute.xlu0 %1355
        %1359 = vxpose.xlu0.b32.start [1/16] %v1354, 128
        %1360 = vxpose.xlu0.b32.cont [2/16] %v1356, 128
        %1361 = vxpose.xlu0.b32.cont [3/16] 0.0, 128
        %1362 = vxpose.xlu0.b32.cont [4/16] 0.0, 128
        %1363 = vxpose.xlu0.b32.cont [5/16] 0.0, 128
        %1364 = vxpose.xlu0.b32.cont [6/16] 0.0, 128
        %1365 = vxpose.xlu0.b32.cont [7/16] 0.0, 128
        %1366 = vxpose.xlu0.b32.cont [8/16] 0.0, 128
        %1367 = vxpose.xlu0.b32.cont [9/16] 0.0, 128
        %1368 = vxpose.xlu0.b32.cont [10/16] 0.0, 128
        %1369 = vxpose.xlu0.b32.cont [11/16] 0.0, 128
        %1370 = vxpose.xlu0.b32.cont [12/16] 0.0, 128
        %1371 = vxpose.xlu0.b32.cont [13/16] 0.0, 128
        %1372 = vxpose.xlu0.b32.cont [14/16] 0.0, 128
        %1373 = vxpose.xlu0.b32.cont [15/16] 0.0, 128
        %1374 = vxpose.xlu0.b32.end [16/16] 0.0, 128
        %v1375 = vpop.trf.xlu0
        %v1376 = vpop.trf.xlu0
        %v1377 = vpop.trf.xlu0
        %v1378 = vpop.trf.xlu0
        %v1379 = vpop.trf.xlu0
        %v1380 = vpop.trf.xlu0
        %v1381 = vpop.trf.xlu0
        %v1382 = vpop.trf.xlu0
        %v1383 = vpop.trf.xlu0
        %v1384 = vpop.trf.xlu0
        %v1385 = vpop.trf.xlu0
        %v1386 = vpop.trf.xlu0
        %v1387 = vpop.trf.xlu0
        %v1388 = vpop.trf.xlu0
        %v1389 = vpop.trf.xlu0
        %v1390 = vpop.trf.xlu0
        %1393 = vrot.lane.b32.xlu0 %v1375, 16
        %v1394 = vpop.permute.xlu0 %1393
        %1395 = vrot.lane.b32.xlu0 %v1376, 16
        %v1396 = vpop.permute.xlu0 %1395
        %v1399 = vsel %vm1234, %v1335, %v1394
        %v1400 = vsel %vm1234, %v1336, %v1396
        %1401 = vxpose.xlu0.b32.start [1/16] %v1145, 128
        %1402 = vxpose.xlu0.b32.cont [2/16] %v1151, 128
        %1403 = vxpose.xlu0.b32.cont [3/16] 0.0, 128
        %1404 = vxpose.xlu0.b32.cont [4/16] 0.0, 128
        %1405 = vxpose.xlu0.b32.cont [5/16] 0.0, 128
        %1406 = vxpose.xlu0.b32.cont [6/16] 0.0, 128
        %1407 = vxpose.xlu0.b32.cont [7/16] 0.0, 128
        %1408 = vxpose.xlu0.b32.cont [8/16] 0.0, 128
        %1409 = vxpose.xlu0.b32.cont [9/16] 0.0, 128
        %1410 = vxpose.xlu0.b32.cont [10/16] 0.0, 128
        %1411 = vxpose.xlu0.b32.cont [11/16] 0.0, 128
        %1412 = vxpose.xlu0.b32.cont [12/16] 0.0, 128
        %1413 = vxpose.xlu0.b32.cont [13/16] 0.0, 128
        %1414 = vxpose.xlu0.b32.cont [14/16] 0.0, 128
        %1415 = vxpose.xlu0.b32.cont [15/16] 0.0, 128
        %1416 = vxpose.xlu0.b32.end [16/16] 0.0, 128
        %v1417 = vpop.trf.xlu0
        %v1418 = vpop.trf.xlu0
        %v1419 = vpop.trf.xlu0
        %v1420 = vpop.trf.xlu0
        %v1421 = vpop.trf.xlu0
        %v1422 = vpop.trf.xlu0
        %v1423 = vpop.trf.xlu0
        %v1424 = vpop.trf.xlu0
        %v1425 = vpop.trf.xlu0
        %v1426 = vpop.trf.xlu0
        %v1427 = vpop.trf.xlu0
        %v1428 = vpop.trf.xlu0
        %v1429 = vpop.trf.xlu0
        %v1430 = vpop.trf.xlu0
        %v1431 = vpop.trf.xlu0
        %v1432 = vpop.trf.xlu0
        %1435 = vrot.lane.b32.xlu0 %v1145, 112
        %v1436 = vpop.permute.xlu0 %1435
        %1437 = vrot.lane.b32.xlu0 %v1151, 112
        %v1438 = vpop.permute.xlu0 %1437
        %1441 = vxpose.xlu0.b32.start [1/16] %v1436, 128
        %1442 = vxpose.xlu0.b32.cont [2/16] %v1438, 128
        %1443 = vxpose.xlu0.b32.cont [3/16] 0.0, 128
        %1444 = vxpose.xlu0.b32.cont [4/16] 0.0, 128
        %1445 = vxpose.xlu0.b32.cont [5/16] 0.0, 128
        %1446 = vxpose.xlu0.b32.cont [6/16] 0.0, 128
        %1447 = vxpose.xlu0.b32.cont [7/16] 0.0, 128
        %1448 = vxpose.xlu0.b32.cont [8/16] 0.0, 128
        %1449 = vxpose.xlu0.b32.cont [9/16] 0.0, 128
        %1450 = vxpose.xlu0.b32.cont [10/16] 0.0, 128
        %1451 = vxpose.xlu0.b32.cont [11/16] 0.0, 128
        %1452 = vxpose.xlu0.b32.cont [12/16] 0.0, 128
        %1453 = vxpose.xlu0.b32.cont [13/16] 0.0, 128
        %1454 = vxpose.xlu0.b32.cont [14/16] 0.0, 128
        %1455 = vxpose.xlu0.b32.cont [15/16] 0.0, 128
        %1456 = vxpose.xlu0.b32.end [16/16] 0.0, 128
        %v1457 = vpop.trf.xlu0
        %v1458 = vpop.trf.xlu0
        %v1459 = vpop.trf.xlu0
        %v1460 = vpop.trf.xlu0
        %v1461 = vpop.trf.xlu0
        %v1462 = vpop.trf.xlu0
        %v1463 = vpop.trf.xlu0
        %v1464 = vpop.trf.xlu0
        %v1465 = vpop.trf.xlu0
        %v1466 = vpop.trf.xlu0
        %v1467 = vpop.trf.xlu0
        %v1468 = vpop.trf.xlu0
        %v1469 = vpop.trf.xlu0
        %v1470 = vpop.trf.xlu0
        %v1471 = vpop.trf.xlu0
        %v1472 = vpop.trf.xlu0
        %1475 = vrot.lane.b32.xlu0 %v1457, 16
        %v1476 = vpop.permute.xlu0 %1475
        %1477 = vrot.lane.b32.xlu0 %v1458, 16
        %v1478 = vpop.permute.xlu0 %1477
        %v1481 = vsel %vm1234, %v1417, %v1476
        %v1482 = vsel %vm1234, %v1418, %v1478
        %v1484 = vsel %vm343, %v1235, 0
        %v1487 = vsel %vm343, %v1236, 0
        %v1490 = vsel %vm343, %v1317, 0
        %v1493 = vsel %vm343, %v1318, 0
        %v1496 = vsel %vm343, %v1399, 0
        %v1499 = vsel %vm343, %v1400, 0
        %v1502 = vsel %vm343, %v1481, 0
        %v1505 = vsel %vm343, %v1482, 0
        %1507 = vmatprep.subr.mxu0 0.0
        %v1508 = vand.u32 %v339, 4294901760
        %1509 = vmatpush1.msra.mxu0 %v1508
        %1510 = vmatprep.subr.mxu0 0.0
        %v1511 = vand.u32 %v340, 4294901760
        %1512 = vmatpush1.msra.mxu0 %v1511
        %1513 = vmatprep.subr.mxu0 0.0
        %v1514 = vand.u32 %v341, 4294901760
        %1515 = vmatpush1.msra.mxu0 %v1514
        %1516 = vmatprep.subr.mxu0 0.0
        %v1517 = vand.u32 %v342, 4294901760
        %1518 = vmatpush1.msra.mxu0 %v1517
        %1519 = vmatprep.subr.mxu0 0.0
        %1520 = vmatpush1.msra.mxu0 0.0
        %1521 = vmatprep.subr.mxu0 0.0
        %1522 = vmatpush1.msra.mxu0 0.0
        %1523 = vmatprep.subr.mxu0 0.0
        %1524 = vmatpush1.msra.mxu0 0.0
        %1525 = vmatprep.subr.mxu0 0.0
        %1526 = vmatpush1.msra.mxu0 0.0
        %1527 = vmatprep.subr.mxu0 0.0
        %1528 = vmatpush1.msra.mxu0 0.0
        %1529 = vmatprep.subr.mxu0 0.0
        %1530 = vmatpush1.msra.mxu0 0.0
        %1531 = vmatprep.subr.mxu0 0.0
        %1532 = vmatpush1.msra.mxu0 0.0
        %1533 = vmatprep.subr.mxu0 0.0
        %1534 = vmatpush1.msra.mxu0 0.0
        %1535 = vmatprep.subr.mxu0 0.0
        %1536 = vmatpush1.msra.mxu0 0.0
        %1537 = vmatprep.subr.mxu0 0.0
        %1538 = vmatpush1.msra.mxu0 0.0
        %1539 = vmatprep.subr.mxu0 0.0
        %1540 = vmatpush1.msra.mxu0 0.0
        %1541 = vmatprep.subr.mxu0 0.0
        %1542 = vmatpush1.msra.mxu0 0.0
        %1543 = vmatprep.subr.mxu0 0.0
        %1544 = vmatpush1.msra.mxu0 0.0
        %1545 = vmatprep.subr.mxu0 0.0
        %1546 = vmatpush1.msra.mxu0 0.0
        %1547 = vmatprep.subr.mxu0 0.0
        %1548 = vmatpush1.msra.mxu0 0.0
        %1549 = vmatprep.subr.mxu0 0.0
        %1550 = vmatpush1.msra.mxu0 0.0
        %1551 = vmatprep.subr.mxu0 0.0
        %1552 = vmatpush1.msra.mxu0 0.0
        %1553 = vmatprep.subr.mxu0 0.0
        %1554 = vmatpush1.msra.mxu0 0.0
        %1555 = vmatprep.subr.mxu0 0.0
        %1556 = vmatpush1.msra.mxu0 0.0
        %1557 = vmatprep.subr.mxu0 0.0
        %1558 = vmatpush1.msra.mxu0 0.0
        %1559 = vmatprep.subr.mxu0 0.0
        %1560 = vmatpush1.msra.mxu0 0.0
        %1561 = vmatprep.subr.mxu0 0.0
        %1562 = vmatpush1.msra.mxu0 0.0
        %1563 = vmatprep.subr.mxu0 0.0
        %1564 = vmatpush1.msra.mxu0 0.0
        %1565 = vmatprep.subr.mxu0 0.0
        %1566 = vmatpush1.msra.mxu0 0.0
        %1567 = vmatprep.subr.mxu0 0.0
        %1568 = vmatpush1.msra.mxu0 0.0
        %1569 = vmatprep.subr.mxu0 0.0
        %1570 = vmatpush1.msra.mxu0 0.0
        %1571 = vmatprep.subr.mxu0 0.0
        %1572 = vmatpush1.msra.mxu0 0.0
        %1573 = vmatprep.subr.mxu0 0.0
        %1574 = vmatpush1.msra.mxu0 0.0
        %1575 = vmatprep.mubr.f32.mxu0 0.0
        %v1576 = vand.u32 %v1484, 4294901760
        %v1577 = vsub.f32 %v1484, %v1576
        %v1578 = vand.u32 %v1577, 4294901760
        %v1579 = vsub.f32 %v1577, %v1578
        %v1580 = vand.u32 %v1579, 4294901760
        %1581 = vmatmul.mubr.f32.gmra.mrb[0].mxu0 %v1580
        %v1582 = vpop.f32.mrb[0].mxu0
        %v1583 = vadd.f32 0.0, %v1582
        %v1584 = vpop.f32.mrb[0].mxu0
        %1585 = vmatprep.mubr.f32.mxu0 0.0
        %v1586 = vand.u32 %v1487, 4294901760
        %v1587 = vsub.f32 %v1487, %v1586
        %v1588 = vand.u32 %v1587, 4294901760
        %v1589 = vsub.f32 %v1587, %v1588
        %v1590 = vand.u32 %v1589, 4294901760
        %1591 = vmatmul.mubr.f32.gmra.mrb[0].mxu0 %v1590
        %v1592 = vpop.f32.mrb[0].mxu0
        %v1593 = vadd.f32 0.0, %v1592
        %v1594 = vpop.f32.mrb[0].mxu0
        %1595 = vmatprep.mubr.f32.mxu0 0.0
        %v1596 = vand.u32 %v1490, 4294901760
        %v1597 = vsub.f32 %v1490, %v1596
        %v1598 = vand.u32 %v1597, 4294901760
        %v1599 = vsub.f32 %v1597, %v1598
        %v1600 = vand.u32 %v1599, 4294901760
        %1601 = vmatmul.mubr.f32.gmra.mrb[0].mxu0 %v1600
        %v1602 = vpop.f32.mrb[0].mxu0
        %v1603 = vadd.f32 0.0, %v1602
        %v1604 = vpop.f32.mrb[0].mxu0
        %1605 = vmatprep.mubr.f32.mxu0 0.0
        %v1606 = vand.u32 %v1493, 4294901760
        %v1607 = vsub.f32 %v1493, %v1606
        %v1608 = vand.u32 %v1607, 4294901760
        %v1609 = vsub.f32 %v1607, %v1608
        %v1610 = vand.u32 %v1609, 4294901760
        %1611 = vmatmul.mubr.f32.gmra.mrb[0].mxu0 %v1610
        %v1612 = vpop.f32.mrb[0].mxu0
        %v1613 = vadd.f32 0.0, %v1612
        %v1614 = vpop.f32.mrb[0].mxu0
        %1615 = vmatprep.mubr.f32.mxu0 0.0
        %v1616 = vand.u32 %v1496, 4294901760
        %v1617 = vsub.f32 %v1496, %v1616
        %v1618 = vand.u32 %v1617, 4294901760
        %v1619 = vsub.f32 %v1617, %v1618
        %v1620 = vand.u32 %v1619, 4294901760
        %1621 = vmatmul.mubr.f32.gmra.mrb[0].mxu0 %v1620
        %v1622 = vpop.f32.mrb[0].mxu0
        %v1623 = vadd.f32 0.0, %v1622
        %v1624 = vpop.f32.mrb[0].mxu0
        %1625 = vmatprep.mubr.f32.mxu0 0.0
        %v1626 = vand.u32 %v1499, 4294901760
        %v1627 = vsub.f32 %v1499, %v1626
        %v1628 = vand.u32 %v1627, 4294901760
        %v1629 = vsub.f32 %v1627, %v1628
        %v1630 = vand.u32 %v1629, 4294901760
        %1631 = vmatmul.mubr.f32.gmra.mrb[0].mxu0 %v1630
        %v1632 = vpop.f32.mrb[0].mxu0
        %v1633 = vadd.f32 0.0, %v1632
        %v1634 = vpop.f32.mrb[0].mxu0
        %1635 = vmatprep.mubr.f32.mxu0 0.0
        %v1636 = vand.u32 %v1502, 4294901760
        %v1637 = vsub.f32 %v1502, %v1636
        %v1638 = vand.u32 %v1637, 4294901760
        %v1639 = vsub.f32 %v1637, %v1638
        %v1640 = vand.u32 %v1639, 4294901760
        %1641 = vmatmul.mubr.f32.gmra.mrb[0].mxu0 %v1640
        %v1642 = vpop.f32.mrb[0].mxu0
        %v1643 = vadd.f32 0.0, %v1642
        %v1644 = vpop.f32.mrb[0].mxu0
        %1645 = vmatprep.mubr.f32.mxu0 0.0
        %v1646 = vand.u32 %v1505, 4294901760
        %v1647 = vsub.f32 %v1505, %v1646
        %v1648 = vand.u32 %v1647, 4294901760
        %v1649 = vsub.f32 %v1647, %v1648
        %v1650 = vand.u32 %v1649, 4294901760
        %1651 = vmatmul.mubr.f32.gmra.mrb[0].mxu0 %v1650
        %v1652 = vpop.f32.mrb[0].mxu0
        %v1653 = vadd.f32 0.0, %v1652
        %v1654 = vpop.f32.mrb[0].mxu0
        %1655 = vdwg.mxu0
        %1656 = vmatprep.subr.mxu0 0.0
        %v1657 = vand.u32 %v339, 4294901760
        %v1658 = vsub.f32 %v339, %v1657
        %v1659 = vand.u32 %v1658, 4294901760
        %v1660 = vsub.f32 %v1658, %v1659
        %v1661 = vand.u32 %v1660, 4294901760
        %1662 = vmatpush1.msra.mxu0 %v1661
        %1663 = vmatprep.subr.mxu0 0.0
        %v1664 = vand.u32 %v340, 4294901760
        %v1665 = vsub.f32 %v340, %v1664
        %v1666 = vand.u32 %v1665, 4294901760
        %v1667 = vsub.f32 %v1665, %v1666
        %v1668 = vand.u32 %v1667, 4294901760
        %1669 = vmatpush1.msra.mxu0 %v1668
        %1670 = vmatprep.subr.mxu0 0.0
        %v1671 = vand.u32 %v341, 4294901760
        %v1672 = vsub.f32 %v341, %v1671
        %v1673 = vand.u32 %v1672, 4294901760
        %v1674 = vsub.f32 %v1672, %v1673
        %v1675 = vand.u32 %v1674, 4294901760
        %1676 = vmatpush1.msra.mxu0 %v1675
        %1677 = vmatprep.subr.mxu0 0.0
        %v1678 = vand.u32 %v342, 4294901760
        %v1679 = vsub.f32 %v342, %v1678
        %v1680 = vand.u32 %v1679, 4294901760
        %v1681 = vsub.f32 %v1679, %v1680
        %v1682 = vand.u32 %v1681, 4294901760
        %1683 = vmatpush1.msra.mxu0 %v1682
        %1684 = vmatprep.subr.mxu0 0.0
        %1685 = vmatpush1.msra.mxu0 0.0
        %1686 = vmatprep.subr.mxu0 0.0
        %1687 = vmatpush1.msra.mxu0 0.0
        %1688 = vmatprep.subr.mxu0 0.0
        %1689 = vmatpush1.msra.mxu0 0.0
        %1690 = vmatprep.subr.mxu0 0.0
        %1691 = vmatpush1.msra.mxu0 0.0
        %1692 = vmatprep.subr.mxu0 0.0
        %1693 = vmatpush1.msra.mxu0 0.0
        %1694 = vmatprep.subr.mxu0 0.0
        %1695 = vmatpush1.msra.mxu0 0.0
        %1696 = vmatprep.subr.mxu0 0.0
        %1697 = vmatpush1.msra.mxu0 0.0
        %1698 = vmatprep.subr.mxu0 0.0
        %1699 = vmatpush1.msra.mxu0 0.0
        %1700 = vmatprep.subr.mxu0 0.0
        %1701 = vmatpush1.msra.mxu0 0.0
        %1702 = vmatprep.subr.mxu0 0.0
        %1703 = vmatpush1.msra.mxu0 0.0
        %1704 = vmatprep.subr.mxu0 0.0
        %1705 = vmatpush1.msra.mxu0 0.0
        %1706 = vmatprep.subr.mxu0 0.0
        %1707 = vmatpush1.msra.mxu0 0.0
        %1708 = vmatprep.subr.mxu0 0.0
        %1709 = vmatpush1.msra.mxu0 0.0
        %1710 = vmatprep.subr.mxu0 0.0
        %1711 = vmatpush1.msra.mxu0 0.0
        %1712 = vmatprep.subr.mxu0 0.0
        %1713 = vmatpush1.msra.mxu0 0.0
        %1714 = vmatprep.subr.mxu0 0.0
        %1715 = vmatpush1.msra.mxu0 0.0
        %1716 = vmatprep.subr.mxu0 0.0
        %1717 = vmatpush1.msra.mxu0 0.0
        %1718 = vmatprep.subr.mxu0 0.0
        %1719 = vmatpush1.msra.mxu0 0.0
        %1720 = vmatprep.subr.mxu0 0.0
        %1721 = vmatpush1.msra.mxu0 0.0
        %1722 = vmatprep.subr.mxu0 0.0
        %1723 = vmatpush1.msra.mxu0 0.0
        %1724 = vmatprep.subr.mxu0 0.0
        %1725 = vmatpush1.msra.mxu0 0.0
        %1726 = vmatprep.subr.mxu0 0.0
        %1727 = vmatpush1.msra.mxu0 0.0
        %1728 = vmatprep.subr.mxu0 0.0
        %1729 = vmatpush1.msra.mxu0 0.0
        %1730 = vmatprep.subr.mxu0 0.0
        %1731 = vmatpush1.msra.mxu0 0.0
        %1732 = vmatprep.subr.mxu0 0.0
        %1733 = vmatpush1.msra.mxu0 0.0
        %1734 = vmatprep.subr.mxu0 0.0
        %1735 = vmatpush1.msra.mxu0 0.0
        %1736 = vmatprep.subr.mxu0 0.0
        %1737 = vmatpush1.msra.mxu0 0.0
        %1738 = vmatprep.subr.mxu0 0.0
        %1739 = vmatpush1.msra.mxu0 0.0
        %1740 = vmatprep.mubr.f32.mxu0 0.0
        %v1741 = vand.u32 %v1484, 4294901760
        %1742 = vmatmul.mubr.f32.gmra.mrb[0].mxu0 %v1741
        %v1743 = vpop.f32.mrb[0].mxu0
        %v1744 = vadd.f32 %v1583, %v1743
        %v1745 = vpop.f32.mrb[0].mxu0
        %1746 = vmatprep.mubr.f32.mxu0 0.0
        %v1747 = vand.u32 %v1487, 4294901760
        %1748 = vmatmul.mubr.f32.gmra.mrb[0].mxu0 %v1747
        %v1749 = vpop.f32.mrb[0].mxu0
        %v1750 = vadd.f32 %v1593, %v1749
        %v1751 = vpop.f32.mrb[0].mxu0
        %1752 = vmatprep.mubr.f32.mxu0 0.0
        %v1753 = vand.u32 %v1490, 4294901760
        %1754 = vmatmul.mubr.f32.gmra.mrb[0].mxu0 %v1753
        %v1755 = vpop.f32.mrb[0].mxu0
        %v1756 = vadd.f32 %v1603, %v1755
        %v1757 = vpop.f32.mrb[0].mxu0
        %1758 = vmatprep.mubr.f32.mxu0 0.0
        %v1759 = vand.u32 %v1493, 4294901760
        %1760 = vmatmul.mubr.f32.gmra.mrb[0].mxu0 %v1759
        %v1761 = vpop.f32.mrb[0].mxu0
        %v1762 = vadd.f32 %v1613, %v1761
        %v1763 = vpop.f32.mrb[0].mxu0
        %1764 = vmatprep.mubr.f32.mxu0 0.0
        %v1765 = vand.u32 %v1496, 4294901760
        %1766 = vmatmul.mubr.f32.gmra.mrb[0].mxu0 %v1765
        %v1767 = vpop.f32.mrb[0].mxu0
        %v1768 = vadd.f32 %v1623, %v1767
        %v1769 = vpop.f32.mrb[0].mxu0
        %1770 = vmatprep.mubr.f32.mxu0 0.0
        %v1771 = vand.u32 %v1499, 4294901760
        %1772 = vmatmul.mubr.f32.gmra.mrb[0].mxu0 %v1771
        %v1773 = vpop.f32.mrb[0].mxu0
        %v1774 = vadd.f32 %v1633, %v1773
        %v1775 = vpop.f32.mrb[0].mxu0
        %1776 = vmatprep.mubr.f32.mxu0 0.0
        %v1777 = vand.u32 %v1502, 4294901760
        %1778 = vmatmul.mubr.f32.gmra.mrb[0].mxu0 %v1777
        %v1779 = vpop.f32.mrb[0].mxu0
        %v1780 = vadd.f32 %v1643, %v1779
        %v1781 = vpop.f32.mrb[0].mxu0
        %1782 = vmatprep.mubr.f32.mxu0 0.0
        %v1783 = vand.u32 %v1505, 4294901760
        %1784 = vmatmul.mubr.f32.gmra.mrb[0].mxu0 %v1783
        %v1785 = vpop.f32.mrb[0].mxu0
        %v1786 = vadd.f32 %v1653, %v1785
        %v1787 = vpop.f32.mrb[0].mxu0
        %1788 = vdwg.mxu0
        %1789 = vmatprep.subr.mxu0 0.0
        %v1790 = vand.u32 %v339, 4294901760
        %v1791 = vsub.f32 %v339, %v1790
        %1792 = vmatpush1.msra.mxu0 %v1791
        %1793 = vmatprep.subr.mxu0 0.0
        %v1794 = vand.u32 %v340, 4294901760
        %v1795 = vsub.f32 %v340, %v1794
        %1796 = vmatpush1.msra.mxu0 %v1795
        %1797 = vmatprep.subr.mxu0 0.0
        %v1798 = vand.u32 %v341, 4294901760
        %v1799 = vsub.f32 %v341, %v1798
        %1800 = vmatpush1.msra.mxu0 %v1799
        %1801 = vmatprep.subr.mxu0 0.0
        %v1802 = vand.u32 %v342, 4294901760
        %v1803 = vsub.f32 %v342, %v1802
        %1804 = vmatpush1.msra.mxu0 %v1803
        %1805 = vmatprep.subr.mxu0 0.0
        %1806 = vmatpush1.msra.mxu0 0.0
        %1807 = vmatprep.subr.mxu0 0.0
        %1808 = vmatpush1.msra.mxu0 0.0
        %1809 = vmatprep.subr.mxu0 0.0
        %1810 = vmatpush1.msra.mxu0 0.0
        %1811 = vmatprep.subr.mxu0 0.0
        %1812 = vmatpush1.msra.mxu0 0.0
        %1813 = vmatprep.subr.mxu0 0.0
        %1814 = vmatpush1.msra.mxu0 0.0
        %1815 = vmatprep.subr.mxu0 0.0
        %1816 = vmatpush1.msra.mxu0 0.0
        %1817 = vmatprep.subr.mxu0 0.0
        %1818 = vmatpush1.msra.mxu0 0.0
        %1819 = vmatprep.subr.mxu0 0.0
        %1820 = vmatpush1.msra.mxu0 0.0
        %1821 = vmatprep.subr.mxu0 0.0
        %1822 = vmatpush1.msra.mxu0 0.0
        %1823 = vmatprep.subr.mxu0 0.0
        %1824 = vmatpush1.msra.mxu0 0.0
        %1825 = vmatprep.subr.mxu0 0.0
        %1826 = vmatpush1.msra.mxu0 0.0
        %1827 = vmatprep.subr.mxu0 0.0
        %1828 = vmatpush1.msra.mxu0 0.0
        %1829 = vmatprep.subr.mxu0 0.0
        %1830 = vmatpush1.msra.mxu0 0.0
        %1831 = vmatprep.subr.mxu0 0.0
        %1832 = vmatpush1.msra.mxu0 0.0
        %1833 = vmatprep.subr.mxu0 0.0
        %1834 = vmatpush1.msra.mxu0 0.0
        %1835 = vmatprep.subr.mxu0 0.0
        %1836 = vmatpush1.msra.mxu0 0.0
        %1837 = vmatprep.subr.mxu0 0.0
        %1838 = vmatpush1.msra.mxu0 0.0
        %1839 = vmatprep.subr.mxu0 0.0
        %1840 = vmatpush1.msra.mxu0 0.0
        %1841 = vmatprep.subr.mxu0 0.0
        %1842 = vmatpush1.msra.mxu0 0.0
        %1843 = vmatprep.subr.mxu0 0.0
        %1844 = vmatpush1.msra.mxu0 0.0
        %1845 = vmatprep.subr.mxu0 0.0
        %1846 = vmatpush1.msra.mxu0 0.0
        %1847 = vmatprep.subr.mxu0 0.0
        %1848 = vmatpush1.msra.mxu0 0.0
        %1849 = vmatprep.subr.mxu0 0.0
        %1850 = vmatpush1.msra.mxu0 0.0
        %1851 = vmatprep.subr.mxu0 0.0
        %1852 = vmatpush1.msra.mxu0 0.0
        %1853 = vmatprep.subr.mxu0 0.0
        %1854 = vmatpush1.msra.mxu0 0.0
        %1855 = vmatprep.subr.mxu0 0.0
        %1856 = vmatpush1.msra.mxu0 0.0
        %1857 = vmatprep.subr.mxu0 0.0
        %1858 = vmatpush1.msra.mxu0 0.0
        %1859 = vmatprep.subr.mxu0 0.0
        %1860 = vmatpush1.msra.mxu0 0.0
        %1861 = vmatprep.mubr.f32.mxu0 0.0
        %v1862 = vand.u32 %v1484, 4294901760
        %v1863 = vsub.f32 %v1484, %v1862
        %1864 = vmatmul.mubr.f32.gmra.mrb[0].mxu0 %v1863
        %v1865 = vpop.f32.mrb[0].mxu0
        %v1866 = vadd.f32 %v1744, %v1865
        %v1867 = vpop.f32.mrb[0].mxu0
        %1868 = vmatprep.mubr.f32.mxu0 0.0
        %v1869 = vand.u32 %v1487, 4294901760
        %v1870 = vsub.f32 %v1487, %v1869
        %1871 = vmatmul.mubr.f32.gmra.mrb[0].mxu0 %v1870
        %v1872 = vpop.f32.mrb[0].mxu0
        %v1873 = vadd.f32 %v1750, %v1872
        %v1874 = vpop.f32.mrb[0].mxu0
        %1875 = vmatprep.mubr.f32.mxu0 0.0
        %v1876 = vand.u32 %v1490, 4294901760
        %v1877 = vsub.f32 %v1490, %v1876
        %1878 = vmatmul.mubr.f32.gmra.mrb[0].mxu0 %v1877
        %v1879 = vpop.f32.mrb[0].mxu0
        %v1880 = vadd.f32 %v1756, %v1879
        %v1881 = vpop.f32.mrb[0].mxu0
        %1882 = vmatprep.mubr.f32.mxu0 0.0
        %v1883 = vand.u32 %v1493, 4294901760
        %v1884 = vsub.f32 %v1493, %v1883
        %1885 = vmatmul.mubr.f32.gmra.mrb[0].mxu0 %v1884
        %v1886 = vpop.f32.mrb[0].mxu0
        %v1887 = vadd.f32 %v1762, %v1886
        %v1888 = vpop.f32.mrb[0].mxu0
        %1889 = vmatprep.mubr.f32.mxu0 0.0
        %v1890 = vand.u32 %v1496, 4294901760
        %v1891 = vsub.f32 %v1496, %v1890
        %1892 = vmatmul.mubr.f32.gmra.mrb[0].mxu0 %v1891
        %v1893 = vpop.f32.mrb[0].mxu0
        %v1894 = vadd.f32 %v1768, %v1893
        %v1895 = vpop.f32.mrb[0].mxu0
        %1896 = vmatprep.mubr.f32.mxu0 0.0
        %v1897 = vand.u32 %v1499, 4294901760
        %v1898 = vsub.f32 %v1499, %v1897
        %1899 = vmatmul.mubr.f32.gmra.mrb[0].mxu0 %v1898
        %v1900 = vpop.f32.mrb[0].mxu0
        %v1901 = vadd.f32 %v1774, %v1900
        %v1902 = vpop.f32.mrb[0].mxu0
        %1903 = vmatprep.mubr.f32.mxu0 0.0
        %v1904 = vand.u32 %v1502, 4294901760
        %v1905 = vsub.f32 %v1502, %v1904
        %1906 = vmatmul.mubr.f32.gmra.mrb[0].mxu0 %v1905
        %v1907 = vpop.f32.mrb[0].mxu0
        %v1908 = vadd.f32 %v1780, %v1907
        %v1909 = vpop.f32.mrb[0].mxu0
        %1910 = vmatprep.mubr.f32.mxu0 0.0
        %v1911 = vand.u32 %v1505, 4294901760
        %v1912 = vsub.f32 %v1505, %v1911
        %1913 = vmatmul.mubr.f32.gmra.mrb[0].mxu0 %v1912
        %v1914 = vpop.f32.mrb[0].mxu0
        %v1915 = vadd.f32 %v1786, %v1914
        %v1916 = vpop.f32.mrb[0].mxu0
        %1917 = vdwg.mxu0
        %1918 = vmatprep.subr.mxu0 0.0
        %v1919 = vand.u32 %v339, 4294901760
        %1920 = vmatpush1.msra.mxu0 %v1919
        %1921 = vmatprep.subr.mxu0 0.0
        %v1922 = vand.u32 %v340, 4294901760
        %1923 = vmatpush1.msra.mxu0 %v1922
        %1924 = vmatprep.subr.mxu0 0.0
        %v1925 = vand.u32 %v341, 4294901760
        %1926 = vmatpush1.msra.mxu0 %v1925
        %1927 = vmatprep.subr.mxu0 0.0
        %v1928 = vand.u32 %v342, 4294901760
        %1929 = vmatpush1.msra.mxu0 %v1928
        %1930 = vmatprep.subr.mxu0 0.0
        %1931 = vmatpush1.msra.mxu0 0.0
        %1932 = vmatprep.subr.mxu0 0.0
        %1933 = vmatpush1.msra.mxu0 0.0
        %1934 = vmatprep.subr.mxu0 0.0
        %1935 = vmatpush1.msra.mxu0 0.0
        %1936 = vmatprep.subr.mxu0 0.0
        %1937 = vmatpush1.msra.mxu0 0.0
        %1938 = vmatprep.subr.mxu0 0.0
        %1939 = vmatpush1.msra.mxu0 0.0
        %1940 = vmatprep.subr.mxu0 0.0
        %1941 = vmatpush1.msra.mxu0 0.0
        %1942 = vmatprep.subr.mxu0 0.0
        %1943 = vmatpush1.msra.mxu0 0.0
        %1944 = vmatprep.subr.mxu0 0.0
        %1945 = vmatpush1.msra.mxu0 0.0
        %1946 = vmatprep.subr.mxu0 0.0
        %1947 = vmatpush1.msra.mxu0 0.0
        %1948 = vmatprep.subr.mxu0 0.0
        %1949 = vmatpush1.msra.mxu0 0.0
        %1950 = vmatprep.subr.mxu0 0.0
        %1951 = vmatpush1.msra.mxu0 0.0
        %1952 = vmatprep.subr.mxu0 0.0
        %1953 = vmatpush1.msra.mxu0 0.0
        %1954 = vmatprep.subr.mxu0 0.0
        %1955 = vmatpush1.msra.mxu0 0.0
        %1956 = vmatprep.subr.mxu0 0.0
        %1957 = vmatpush1.msra.mxu0 0.0
        %1958 = vmatprep.subr.mxu0 0.0
        %1959 = vmatpush1.msra.mxu0 0.0
        %1960 = vmatprep.subr.mxu0 0.0
        %1961 = vmatpush1.msra.mxu0 0.0
        %1962 = vmatprep.subr.mxu0 0.0
        %1963 = vmatpush1.msra.mxu0 0.0
        %1964 = vmatprep.subr.mxu0 0.0
        %1965 = vmatpush1.msra.mxu0 0.0
        %1966 = vmatprep.subr.mxu0 0.0
        %1967 = vmatpush1.msra.mxu0 0.0
        %1968 = vmatprep.subr.mxu0 0.0
        %1969 = vmatpush1.msra.mxu0 0.0
        %1970 = vmatprep.subr.mxu0 0.0
        %1971 = vmatpush1.msra.mxu0 0.0
        %1972 = vmatprep.subr.mxu0 0.0
        %1973 = vmatpush1.msra.mxu0 0.0
        %1974 = vmatprep.subr.mxu0 0.0
        %1975 = vmatpush1.msra.mxu0 0.0
        %1976 = vmatprep.subr.mxu0 0.0
        %1977 = vmatpush1.msra.mxu0 0.0
        %1978 = vmatprep.subr.mxu0 0.0
        %1979 = vmatpush1.msra.mxu0 0.0
        %1980 = vmatprep.subr.mxu0 0.0
        %1981 = vmatpush1.msra.mxu0 0.0
        %1982 = vmatprep.subr.mxu0 0.0
        %1983 = vmatpush1.msra.mxu0 0.0
        %1984 = vmatprep.subr.mxu0 0.0
        %1985 = vmatpush1.msra.mxu0 0.0
        %1986 = vmatprep.mubr.f32.mxu0 0.0
        %v1987 = vand.u32 %v1484, 4294901760
        %v1988 = vsub.f32 %v1484, %v1987
        %v1989 = vand.u32 %v1988, 4294901760
        %1990 = vmatmul.mubr.f32.gmra.mrb[0].mxu0 %v1989
        %v1991 = vpop.f32.mrb[0].mxu0
        %v1992 = vadd.f32 %v1866, %v1991
        %v1993 = vpop.f32.mrb[0].mxu0
        %1994 = vmatprep.mubr.f32.mxu0 0.0
        %v1995 = vand.u32 %v1487, 4294901760
        %v1996 = vsub.f32 %v1487, %v1995
        %v1997 = vand.u32 %v1996, 4294901760
        %1998 = vmatmul.mubr.f32.gmra.mrb[0].mxu0 %v1997
        %v1999 = vpop.f32.mrb[0].mxu0
        %v2000 = vadd.f32 %v1873, %v1999
        %v2001 = vpop.f32.mrb[0].mxu0
        %2002 = vmatprep.mubr.f32.mxu0 0.0
        %v2003 = vand.u32 %v1490, 4294901760
        %v2004 = vsub.f32 %v1490, %v2003
        %v2005 = vand.u32 %v2004, 4294901760
        %2006 = vmatmul.mubr.f32.gmra.mrb[0].mxu0 %v2005
        %v2007 = vpop.f32.mrb[0].mxu0
        %v2008 = vadd.f32 %v1880, %v2007
        %v2009 = vpop.f32.mrb[0].mxu0
        %2010 = vmatprep.mubr.f32.mxu0 0.0
        %v2011 = vand.u32 %v1493, 4294901760
        %v2012 = vsub.f32 %v1493, %v2011
        %v2013 = vand.u32 %v2012, 4294901760
        %2014 = vmatmul.mubr.f32.gmra.mrb[0].mxu0 %v2013
        %v2015 = vpop.f32.mrb[0].mxu0
        %v2016 = vadd.f32 %v1887, %v2015
        %v2017 = vpop.f32.mrb[0].mxu0
        %2018 = vmatprep.mubr.f32.mxu0 0.0
        %v2019 = vand.u32 %v1496, 4294901760
        %v2020 = vsub.f32 %v1496, %v2019
        %v2021 = vand.u32 %v2020, 4294901760
        %2022 = vmatmul.mubr.f32.gmra.mrb[0].mxu0 %v2021
        %v2023 = vpop.f32.mrb[0].mxu0
        %v2024 = vadd.f32 %v1894, %v2023
        %v2025 = vpop.f32.mrb[0].mxu0
        %2026 = vmatprep.mubr.f32.mxu0 0.0
        %v2027 = vand.u32 %v1499, 4294901760
        %v2028 = vsub.f32 %v1499, %v2027
        %v2029 = vand.u32 %v2028, 4294901760
        %2030 = vmatmul.mubr.f32.gmra.mrb[0].mxu0 %v2029
        %v2031 = vpop.f32.mrb[0].mxu0
        %v2032 = vadd.f32 %v1901, %v2031
        %v2033 = vpop.f32.mrb[0].mxu0
        %2034 = vmatprep.mubr.f32.mxu0 0.0
        %v2035 = vand.u32 %v1502, 4294901760
        %v2036 = vsub.f32 %v1502, %v2035
        %v2037 = vand.u32 %v2036, 4294901760
        %2038 = vmatmul.mubr.f32.gmra.mrb[0].mxu0 %v2037
        %v2039 = vpop.f32.mrb[0].mxu0
        %v2040 = vadd.f32 %v1908, %v2039
        %v2041 = vpop.f32.mrb[0].mxu0
        %2042 = vmatprep.mubr.f32.mxu0 0.0
        %v2043 = vand.u32 %v1505, 4294901760
        %v2044 = vsub.f32 %v1505, %v2043
        %v2045 = vand.u32 %v2044, 4294901760
        %2046 = vmatmul.mubr.f32.gmra.mrb[0].mxu0 %v2045
        %v2047 = vpop.f32.mrb[0].mxu0
        %v2048 = vadd.f32 %v1915, %v2047
        %v2049 = vpop.f32.mrb[0].mxu0
        %2050 = vdwg.mxu0
        %2051 = vmatprep.subr.mxu0 0.0
        %v2052 = vand.u32 %v339, 4294901760
        %v2053 = vsub.f32 %v339, %v2052
        %v2054 = vand.u32 %v2053, 4294901760
        %2055 = vmatpush1.msra.mxu0 %v2054
        %2056 = vmatprep.subr.mxu0 0.0
        %v2057 = vand.u32 %v340, 4294901760
        %v2058 = vsub.f32 %v340, %v2057
        %v2059 = vand.u32 %v2058, 4294901760
        %2060 = vmatpush1.msra.mxu0 %v2059
        %2061 = vmatprep.subr.mxu0 0.0
        %v2062 = vand.u32 %v341, 4294901760
        %v2063 = vsub.f32 %v341, %v2062
        %v2064 = vand.u32 %v2063, 4294901760
        %2065 = vmatpush1.msra.mxu0 %v2064
        %2066 = vmatprep.subr.mxu0 0.0
        %v2067 = vand.u32 %v342, 4294901760
        %v2068 = vsub.f32 %v342, %v2067
        %v2069 = vand.u32 %v2068, 4294901760
        %2070 = vmatpush1.msra.mxu0 %v2069
        %2071 = vmatprep.subr.mxu0 0.0
        %2072 = vmatpush1.msra.mxu0 0.0
        %2073 = vmatprep.subr.mxu0 0.0
        %2074 = vmatpush1.msra.mxu0 0.0
        %2075 = vmatprep.subr.mxu0 0.0
        %2076 = vmatpush1.msra.mxu0 0.0
        %2077 = vmatprep.subr.mxu0 0.0
        %2078 = vmatpush1.msra.mxu0 0.0
        %2079 = vmatprep.subr.mxu0 0.0
        %2080 = vmatpush1.msra.mxu0 0.0
        %2081 = vmatprep.subr.mxu0 0.0
        %2082 = vmatpush1.msra.mxu0 0.0
        %2083 = vmatprep.subr.mxu0 0.0
        %2084 = vmatpush1.msra.mxu0 0.0
        %2085 = vmatprep.subr.mxu0 0.0
        %2086 = vmatpush1.msra.mxu0 0.0
        %2087 = vmatprep.subr.mxu0 0.0
        %2088 = vmatpush1.msra.mxu0 0.0
        %2089 = vmatprep.subr.mxu0 0.0
        %2090 = vmatpush1.msra.mxu0 0.0
        %2091 = vmatprep.subr.mxu0 0.0
        %2092 = vmatpush1.msra.mxu0 0.0
        %2093 = vmatprep.subr.mxu0 0.0
        %2094 = vmatpush1.msra.mxu0 0.0
        %2095 = vmatprep.subr.mxu0 0.0
        %2096 = vmatpush1.msra.mxu0 0.0
        %2097 = vmatprep.subr.mxu0 0.0
        %2098 = vmatpush1.msra.mxu0 0.0
        %2099 = vmatprep.subr.mxu0 0.0
        %2100 = vmatpush1.msra.mxu0 0.0
        %2101 = vmatprep.subr.mxu0 0.0
        %2102 = vmatpush1.msra.mxu0 0.0
        %2103 = vmatprep.subr.mxu0 0.0
        %2104 = vmatpush1.msra.mxu0 0.0
        %2105 = vmatprep.subr.mxu0 0.0
        %2106 = vmatpush1.msra.mxu0 0.0
        %2107 = vmatprep.subr.mxu0 0.0
        %2108 = vmatpush1.msra.mxu0 0.0
        %2109 = vmatprep.subr.mxu0 0.0
        %2110 = vmatpush1.msra.mxu0 0.0
        %2111 = vmatprep.subr.mxu0 0.0
        %2112 = vmatpush1.msra.mxu0 0.0
        %2113 = vmatprep.subr.mxu0 0.0
        %2114 = vmatpush1.msra.mxu0 0.0
        %2115 = vmatprep.subr.mxu0 0.0
        %2116 = vmatpush1.msra.mxu0 0.0
        %2117 = vmatprep.subr.mxu0 0.0
        %2118 = vmatpush1.msra.mxu0 0.0
        %2119 = vmatprep.subr.mxu0 0.0
        %2120 = vmatpush1.msra.mxu0 0.0
        %2121 = vmatprep.subr.mxu0 0.0
        %2122 = vmatpush1.msra.mxu0 0.0
        %2123 = vmatprep.subr.mxu0 0.0
        %2124 = vmatpush1.msra.mxu0 0.0
        %2125 = vmatprep.subr.mxu0 0.0
        %2126 = vmatpush1.msra.mxu0 0.0
        %2127 = vmatprep.mubr.f32.mxu0 0.0
        %v2128 = vand.u32 %v1484, 4294901760
        %2129 = vmatmul.mubr.f32.gmra.mrb[0].mxu0 %v2128
        %v2130 = vpop.f32.mrb[0].mxu0
        %v2131 = vadd.f32 %v1992, %v2130
        %v2132 = vpop.f32.mrb[0].mxu0
        %2133 = vmatprep.mubr.f32.mxu0 0.0
        %v2134 = vand.u32 %v1487, 4294901760
        %2135 = vmatmul.mubr.f32.gmra.mrb[0].mxu0 %v2134
        %v2136 = vpop.f32.mrb[0].mxu0
        %v2137 = vadd.f32 %v2000, %v2136
        %v2138 = vpop.f32.mrb[0].mxu0
        %2139 = vmatprep.mubr.f32.mxu0 0.0
        %v2140 = vand.u32 %v1490, 4294901760
        %2141 = vmatmul.mubr.f32.gmra.mrb[0].mxu0 %v2140
        %v2142 = vpop.f32.mrb[0].mxu0
        %v2143 = vadd.f32 %v2008, %v2142
        %v2144 = vpop.f32.mrb[0].mxu0
        %2145 = vmatprep.mubr.f32.mxu0 0.0
        %v2146 = vand.u32 %v1493, 4294901760
        %2147 = vmatmul.mubr.f32.gmra.mrb[0].mxu0 %v2146
        %v2148 = vpop.f32.mrb[0].mxu0
        %v2149 = vadd.f32 %v2016, %v2148
        %v2150 = vpop.f32.mrb[0].mxu0
        %2151 = vmatprep.mubr.f32.mxu0 0.0
        %v2152 = vand.u32 %v1496, 4294901760
        %2153 = vmatmul.mubr.f32.gmra.mrb[0].mxu0 %v2152
        %v2154 = vpop.f32.mrb[0].mxu0
        %v2155 = vadd.f32 %v2024, %v2154
        %v2156 = vpop.f32.mrb[0].mxu0
        %2157 = vmatprep.mubr.f32.mxu0 0.0
        %v2158 = vand.u32 %v1499, 4294901760
        %2159 = vmatmul.mubr.f32.gmra.mrb[0].mxu0 %v2158
        %v2160 = vpop.f32.mrb[0].mxu0
        %v2161 = vadd.f32 %v2032, %v2160
        %v2162 = vpop.f32.mrb[0].mxu0
        %2163 = vmatprep.mubr.f32.mxu0 0.0
        %v2164 = vand.u32 %v1502, 4294901760
        %2165 = vmatmul.mubr.f32.gmra.mrb[0].mxu0 %v2164
        %v2166 = vpop.f32.mrb[0].mxu0
        %v2167 = vadd.f32 %v2040, %v2166
        %v2168 = vpop.f32.mrb[0].mxu0
        %2169 = vmatprep.mubr.f32.mxu0 0.0
        %v2170 = vand.u32 %v1505, 4294901760
        %2171 = vmatmul.mubr.f32.gmra.mrb[0].mxu0 %v2170
        %v2172 = vpop.f32.mrb[0].mxu0
        %v2173 = vadd.f32 %v2048, %v2172
        %v2174 = vpop.f32.mrb[0].mxu0
        %2175 = vdwg.mxu0
        %2176 = vmatprep.subr.mxu0 0.0
        %v2177 = vand.u32 %v339, 4294901760
        %2178 = vmatpush1.msra.mxu0 %v2177
        %2179 = vmatprep.subr.mxu0 0.0
        %v2180 = vand.u32 %v340, 4294901760
        %2181 = vmatpush1.msra.mxu0 %v2180
        %2182 = vmatprep.subr.mxu0 0.0
        %v2183 = vand.u32 %v341, 4294901760
        %2184 = vmatpush1.msra.mxu0 %v2183
        %2185 = vmatprep.subr.mxu0 0.0
        %v2186 = vand.u32 %v342, 4294901760
        %2187 = vmatpush1.msra.mxu0 %v2186
        %2188 = vmatprep.subr.mxu0 0.0
        %2189 = vmatpush1.msra.mxu0 0.0
        %2190 = vmatprep.subr.mxu0 0.0
        %2191 = vmatpush1.msra.mxu0 0.0
        %2192 = vmatprep.subr.mxu0 0.0
        %2193 = vmatpush1.msra.mxu0 0.0
        %2194 = vmatprep.subr.mxu0 0.0
        %2195 = vmatpush1.msra.mxu0 0.0
        %2196 = vmatprep.subr.mxu0 0.0
        %2197 = vmatpush1.msra.mxu0 0.0
        %2198 = vmatprep.subr.mxu0 0.0
        %2199 = vmatpush1.msra.mxu0 0.0
        %2200 = vmatprep.subr.mxu0 0.0
        %2201 = vmatpush1.msra.mxu0 0.0
        %2202 = vmatprep.subr.mxu0 0.0
        %2203 = vmatpush1.msra.mxu0 0.0
        %2204 = vmatprep.subr.mxu0 0.0
        %2205 = vmatpush1.msra.mxu0 0.0
        %2206 = vmatprep.subr.mxu0 0.0
        %2207 = vmatpush1.msra.mxu0 0.0
        %2208 = vmatprep.subr.mxu0 0.0
        %2209 = vmatpush1.msra.mxu0 0.0
        %2210 = vmatprep.subr.mxu0 0.0
        %2211 = vmatpush1.msra.mxu0 0.0
        %2212 = vmatprep.subr.mxu0 0.0
        %2213 = vmatpush1.msra.mxu0 0.0
        %2214 = vmatprep.subr.mxu0 0.0
        %2215 = vmatpush1.msra.mxu0 0.0
        %2216 = vmatprep.subr.mxu0 0.0
        %2217 = vmatpush1.msra.mxu0 0.0
        %2218 = vmatprep.subr.mxu0 0.0
        %2219 = vmatpush1.msra.mxu0 0.0
        %2220 = vmatprep.subr.mxu0 0.0
        %2221 = vmatpush1.msra.mxu0 0.0
        %2222 = vmatprep.subr.mxu0 0.0
        %2223 = vmatpush1.msra.mxu0 0.0
        %2224 = vmatprep.subr.mxu0 0.0
        %2225 = vmatpush1.msra.mxu0 0.0
        %2226 = vmatprep.subr.mxu0 0.0
        %2227 = vmatpush1.msra.mxu0 0.0
        %2228 = vmatprep.subr.mxu0 0.0
        %2229 = vmatpush1.msra.mxu0 0.0
        %2230 = vmatprep.subr.mxu0 0.0
        %2231 = vmatpush1.msra.mxu0 0.0
        %2232 = vmatprep.subr.mxu0 0.0
        %2233 = vmatpush1.msra.mxu0 0.0
        %2234 = vmatprep.subr.mxu0 0.0
        %2235 = vmatpush1.msra.mxu0 0.0
        %2236 = vmatprep.subr.mxu0 0.0
        %2237 = vmatpush1.msra.mxu0 0.0
        %2238 = vmatprep.subr.mxu0 0.0
        %2239 = vmatpush1.msra.mxu0 0.0
        %2240 = vmatprep.subr.mxu0 0.0
        %2241 = vmatpush1.msra.mxu0 0.0
        %2242 = vmatprep.subr.mxu0 0.0
        %2243 = vmatpush1.msra.mxu0 0.0
        %2244 = vmatprep.mubr.f32.mxu0 0.0
        %v2245 = vand.u32 %v1484, 4294901760
        %2246 = vmatmul.mubr.f32.gmra.mrb[0].mxu0 %v2245
        %v2247 = vpop.f32.mrb[0].mxu0
        %v2248 = vadd.f32 %v2131, %v2247
        %v2249 = vpop.f32.mrb[0].mxu0
        %2250 = vmatprep.mubr.f32.mxu0 0.0
        %v2251 = vand.u32 %v1487, 4294901760
        %2252 = vmatmul.mubr.f32.gmra.mrb[0].mxu0 %v2251
        %v2253 = vpop.f32.mrb[0].mxu0
        %v2254 = vadd.f32 %v2137, %v2253
        %v2255 = vpop.f32.mrb[0].mxu0
        %2256 = vmatprep.mubr.f32.mxu0 0.0
        %v2257 = vand.u32 %v1490, 4294901760
        %2258 = vmatmul.mubr.f32.gmra.mrb[0].mxu0 %v2257
        %v2259 = vpop.f32.mrb[0].mxu0
        %v2260 = vadd.f32 %v2143, %v2259
        %v2261 = vpop.f32.mrb[0].mxu0
        %2262 = vmatprep.mubr.f32.mxu0 0.0
        %v2263 = vand.u32 %v1493, 4294901760
        %2264 = vmatmul.mubr.f32.gmra.mrb[0].mxu0 %v2263
        %v2265 = vpop.f32.mrb[0].mxu0
        %v2266 = vadd.f32 %v2149, %v2265
        %v2267 = vpop.f32.mrb[0].mxu0
        %2268 = vmatprep.mubr.f32.mxu0 0.0
        %v2269 = vand.u32 %v1496, 4294901760
        %2270 = vmatmul.mubr.f32.gmra.mrb[0].mxu0 %v2269
        %v2271 = vpop.f32.mrb[0].mxu0
        %v2272 = vadd.f32 %v2155, %v2271
        %v2273 = vpop.f32.mrb[0].mxu0
        %2274 = vmatprep.mubr.f32.mxu0 0.0
        %v2275 = vand.u32 %v1499, 4294901760
        %2276 = vmatmul.mubr.f32.gmra.mrb[0].mxu0 %v2275
        %v2277 = vpop.f32.mrb[0].mxu0
        %v2278 = vadd.f32 %v2161, %v2277
        %v2279 = vpop.f32.mrb[0].mxu0
        %2280 = vmatprep.mubr.f32.mxu0 0.0
        %v2281 = vand.u32 %v1502, 4294901760
        %2282 = vmatmul.mubr.f32.gmra.mrb[0].mxu0 %v2281
        %v2283 = vpop.f32.mrb[0].mxu0
        %v2284 = vadd.f32 %v2167, %v2283
        %v2285 = vpop.f32.mrb[0].mxu0
        %2286 = vmatprep.mubr.f32.mxu0 0.0
        %v2287 = vand.u32 %v1505, 4294901760
        %2288 = vmatmul.mubr.f32.gmra.mrb[0].mxu0 %v2287
        %v2289 = vpop.f32.mrb[0].mxu0
        %v2290 = vadd.f32 %v2173, %v2289
        %v2291 = vpop.f32.mrb[0].mxu0
        %2292 = vdwg.mxu0
        %v2293 = vld [vmem:[#allocation7] sm:$0xff]
        %v2294 = vld [vmem:[#allocation7 + $0x8] sm:$0xff]
        %vm2295 = vcmp.gt.f32.partialorder %v2293, 0.5
        %vm2296 = vcmp.gt.f32.partialorder %v2294, 0.5
        %v2297 = vld [vmem:[%s284] sm:$0xff]
        %v2298 = vld [vmem:[%s284 + $0x8] sm:$0xff]
        %v2299 = vld [vmem:[%s284 + $0x10] sm:$0xff]
        %v2300 = vld [vmem:[%s284 + $0x18] sm:$0xff]
        %v2301 = vld [vmem:[%s284 + $0x20] sm:$0xff]
        %v2302 = vld [vmem:[%s284 + $0x28] sm:$0xff]
        %v2303 = vld [vmem:[%s284 + $0x30] sm:$0xff]
        %v2304 = vld [vmem:[%s284 + $0x38] sm:$0xff]
        %v2305 = vsel %vm2295, 1, 0
        %v2306 = vsel %vm2296, 1, 0
        %vm2307 = vcmp.eq.s32.totalorder %v2305, 1
        %vm2308 = vcmp.eq.s32.totalorder %v2306, 1
        %v2309 = vsel %vm2307, %v2297, %v2248
        %v2310 = vsel %vm2308, %v2298, %v2254
        %v2311 = vsel %vm2307, %v2299, %v2260
        %v2312 = vsel %vm2308, %v2300, %v2266
        %v2313 = vsel %vm2307, %v2301, %v2272
        %v2314 = vsel %vm2308, %v2302, %v2278
        %v2315 = vsel %vm2307, %v2303, %v2284
        %v2316 = vsel %vm2308, %v2304, %v2290
        %v2317 = vld [vmem:[#allocation10] sm:$0xff]
        %v2318 = vld [vmem:[#allocation10 + $0x8] sm:$0xff]
        %v2319 = vld [vmem:[#allocation10 + $0x10] sm:$0xff]
        %v2320 = vld [vmem:[#allocation10 + $0x18] sm:$0xff]
        %v2322 = vsel %vm343, %v2309, 0
        %v2325 = vsel %vm343, %v2310, 0
        %v2328 = vsel %vm343, %v2311, 0
        %v2331 = vsel %vm343, %v2312, 0
        %v2334 = vsel %vm343, %v2313, 0
        %v2337 = vsel %vm343, %v2314, 0
        %v2340 = vsel %vm343, %v2315, 0
        %v2343 = vsel %vm343, %v2316, 0
        %2345 = vmatprep.subr.mxu0 0.0
        %v2346 = vand.u32 %v2317, 4294901760
        %2347 = vmatpush1.msra.mxu0 %v2346
        %2348 = vmatprep.subr.mxu0 0.0
        %v2349 = vand.u32 %v2318, 4294901760
        %2350 = vmatpush1.msra.mxu0 %v2349
        %2351 = vmatprep.subr.mxu0 0.0
        %v2352 = vand.u32 %v2319, 4294901760
        %2353 = vmatpush1.msra.mxu0 %v2352
        %2354 = vmatprep.subr.mxu0 0.0
        %v2355 = vand.u32 %v2320, 4294901760
        %2356 = vmatpush1.msra.mxu0 %v2355
        %2357 = vmatprep.subr.mxu0 0.0
        %2358 = vmatpush1.msra.mxu0 0.0
        %2359 = vmatprep.subr.mxu0 0.0
        %2360 = vmatpush1.msra.mxu0 0.0
        %2361 = vmatprep.subr.mxu0 0.0
        %2362 = vmatpush1.msra.mxu0 0.0
        %2363 = vmatprep.subr.mxu0 0.0
        %2364 = vmatpush1.msra.mxu0 0.0
        %2365 = vmatprep.subr.mxu0 0.0
        %2366 = vmatpush1.msra.mxu0 0.0
        %2367 = vmatprep.subr.mxu0 0.0
        %2368 = vmatpush1.msra.mxu0 0.0
        %2369 = vmatprep.subr.mxu0 0.0
        %2370 = vmatpush1.msra.mxu0 0.0
        %2371 = vmatprep.subr.mxu0 0.0
        %2372 = vmatpush1.msra.mxu0 0.0
        %2373 = vmatprep.subr.mxu0 0.0
        %2374 = vmatpush1.msra.mxu0 0.0
        %2375 = vmatprep.subr.mxu0 0.0
        %2376 = vmatpush1.msra.mxu0 0.0
        %2377 = vmatprep.subr.mxu0 0.0
        %2378 = vmatpush1.msra.mxu0 0.0
        %2379 = vmatprep.subr.mxu0 0.0
        %2380 = vmatpush1.msra.mxu0 0.0
        %2381 = vmatprep.subr.mxu0 0.0
        %2382 = vmatpush1.msra.mxu0 0.0
        %2383 = vmatprep.subr.mxu0 0.0
        %2384 = vmatpush1.msra.mxu0 0.0
        %2385 = vmatprep.subr.mxu0 0.0
        %2386 = vmatpush1.msra.mxu0 0.0
        %2387 = vmatprep.subr.mxu0 0.0
        %2388 = vmatpush1.msra.mxu0 0.0
        %2389 = vmatprep.subr.mxu0 0.0
        %2390 = vmatpush1.msra.mxu0 0.0
        %2391 = vmatprep.subr.mxu0 0.0
        %2392 = vmatpush1.msra.mxu0 0.0
        %2393 = vmatprep.subr.mxu0 0.0
        %2394 = vmatpush1.msra.mxu0 0.0
        %2395 = vmatprep.subr.mxu0 0.0
        %2396 = vmatpush1.msra.mxu0 0.0
        %2397 = vmatprep.subr.mxu0 0.0
        %2398 = vmatpush1.msra.mxu0 0.0
        %2399 = vmatprep.subr.mxu0 0.0
        %2400 = vmatpush1.msra.mxu0 0.0
        %2401 = vmatprep.subr.mxu0 0.0
        %2402 = vmatpush1.msra.mxu0 0.0
        %2403 = vmatprep.subr.mxu0 0.0
        %2404 = vmatpush1.msra.mxu0 0.0
        %2405 = vmatprep.subr.mxu0 0.0
        %2406 = vmatpush1.msra.mxu0 0.0
        %2407 = vmatprep.subr.mxu0 0.0
        %2408 = vmatpush1.msra.mxu0 0.0
        %2409 = vmatprep.subr.mxu0 0.0
        %2410 = vmatpush1.msra.mxu0 0.0
        %2411 = vmatprep.subr.mxu0 0.0
        %2412 = vmatpush1.msra.mxu0 0.0
        %2413 = vmatprep.mubr.f32.mxu0 0.0
        %v2414 = vand.u32 %v2322, 4294901760
        %v2415 = vsub.f32 %v2322, %v2414
        %v2416 = vand.u32 %v2415, 4294901760
        %v2417 = vsub.f32 %v2415, %v2416
        %v2418 = vand.u32 %v2417, 4294901760
        %2419 = vmatmul.mubr.f32.gmra.mrb[0].mxu0 %v2418
        %v2420 = vpop.f32.mrb[0].mxu0
        %v2421 = vadd.f32 0.0, %v2420
        %v2422 = vpop.f32.mrb[0].mxu0
        %2423 = vmatprep.mubr.f32.mxu0 0.0
        %v2424 = vand.u32 %v2325, 4294901760
        %v2425 = vsub.f32 %v2325, %v2424
        %v2426 = vand.u32 %v2425, 4294901760
        %v2427 = vsub.f32 %v2425, %v2426
        %v2428 = vand.u32 %v2427, 4294901760
        %2429 = vmatmul.mubr.f32.gmra.mrb[0].mxu0 %v2428
        %v2430 = vpop.f32.mrb[0].mxu0
        %v2431 = vadd.f32 0.0, %v2430
        %v2432 = vpop.f32.mrb[0].mxu0
        %2433 = vmatprep.mubr.f32.mxu0 0.0
        %v2434 = vand.u32 %v2328, 4294901760
        %v2435 = vsub.f32 %v2328, %v2434
        %v2436 = vand.u32 %v2435, 4294901760
        %v2437 = vsub.f32 %v2435, %v2436
        %v2438 = vand.u32 %v2437, 4294901760
        %2439 = vmatmul.mubr.f32.gmra.mrb[0].mxu0 %v2438
        %v2440 = vpop.f32.mrb[0].mxu0
        %v2441 = vadd.f32 0.0, %v2440
        %v2442 = vpop.f32.mrb[0].mxu0
        %2443 = vmatprep.mubr.f32.mxu0 0.0
        %v2444 = vand.u32 %v2331, 4294901760
        %v2445 = vsub.f32 %v2331, %v2444
        %v2446 = vand.u32 %v2445, 4294901760
        %v2447 = vsub.f32 %v2445, %v2446
        %v2448 = vand.u32 %v2447, 4294901760
        %2449 = vmatmul.mubr.f32.gmra.mrb[0].mxu0 %v2448
        %v2450 = vpop.f32.mrb[0].mxu0
        %v2451 = vadd.f32 0.0, %v2450
        %v2452 = vpop.f32.mrb[0].mxu0
        %2453 = vmatprep.mubr.f32.mxu0 0.0
        %v2454 = vand.u32 %v2334, 4294901760
        %v2455 = vsub.f32 %v2334, %v2454
        %v2456 = vand.u32 %v2455, 4294901760
        %v2457 = vsub.f32 %v2455, %v2456
        %v2458 = vand.u32 %v2457, 4294901760
        %2459 = vmatmul.mubr.f32.gmra.mrb[0].mxu0 %v2458
        %v2460 = vpop.f32.mrb[0].mxu0
        %v2461 = vadd.f32 0.0, %v2460
        %v2462 = vpop.f32.mrb[0].mxu0
        %2463 = vmatprep.mubr.f32.mxu0 0.0
        %v2464 = vand.u32 %v2337, 4294901760
        %v2465 = vsub.f32 %v2337, %v2464
        %v2466 = vand.u32 %v2465, 4294901760
        %v2467 = vsub.f32 %v2465, %v2466
        %v2468 = vand.u32 %v2467, 4294901760
        %2469 = vmatmul.mubr.f32.gmra.mrb[0].mxu0 %v2468
        %v2470 = vpop.f32.mrb[0].mxu0
        %v2471 = vadd.f32 0.0, %v2470
        %v2472 = vpop.f32.mrb[0].mxu0
        %2473 = vmatprep.mubr.f32.mxu0 0.0
        %v2474 = vand.u32 %v2340, 4294901760
        %v2475 = vsub.f32 %v2340, %v2474
        %v2476 = vand.u32 %v2475, 4294901760
        %v2477 = vsub.f32 %v2475, %v2476
        %v2478 = vand.u32 %v2477, 4294901760
        %2479 = vmatmul.mubr.f32.gmra.mrb[0].mxu0 %v2478
        %v2480 = vpop.f32.mrb[0].mxu0
        %v2481 = vadd.f32 0.0, %v2480
        %v2482 = vpop.f32.mrb[0].mxu0
        %2483 = vmatprep.mubr.f32.mxu0 0.0
        %v2484 = vand.u32 %v2343, 4294901760
        %v2485 = vsub.f32 %v2343, %v2484
        %v2486 = vand.u32 %v2485, 4294901760
        %v2487 = vsub.f32 %v2485, %v2486
        %v2488 = vand.u32 %v2487, 4294901760
        %2489 = vmatmul.mubr.f32.gmra.mrb[0].mxu0 %v2488
        %v2490 = vpop.f32.mrb[0].mxu0
        %v2491 = vadd.f32 0.0, %v2490
        %v2492 = vpop.f32.mrb[0].mxu0
        %2493 = vdwg.mxu0
        %2494 = vmatprep.subr.mxu0 0.0
        %v2495 = vand.u32 %v2317, 4294901760
        %v2496 = vsub.f32 %v2317, %v2495
        %v2497 = vand.u32 %v2496, 4294901760
        %v2498 = vsub.f32 %v2496, %v2497
        %v2499 = vand.u32 %v2498, 4294901760
        %2500 = vmatpush1.msra.mxu0 %v2499
        %2501 = vmatprep.subr.mxu0 0.0
        %v2502 = vand.u32 %v2318, 4294901760
        %v2503 = vsub.f32 %v2318, %v2502
        %v2504 = vand.u32 %v2503, 4294901760
        %v2505 = vsub.f32 %v2503, %v2504
        %v2506 = vand.u32 %v2505, 4294901760
        %2507 = vmatpush1.msra.mxu0 %v2506
        %2508 = vmatprep.subr.mxu0 0.0
        %v2509 = vand.u32 %v2319, 4294901760
        %v2510 = vsub.f32 %v2319, %v2509
        %v2511 = vand.u32 %v2510, 4294901760
        %v2512 = vsub.f32 %v2510, %v2511
        %v2513 = vand.u32 %v2512, 4294901760
        %2514 = vmatpush1.msra.mxu0 %v2513
        %2515 = vmatprep.subr.mxu0 0.0
        %v2516 = vand.u32 %v2320, 4294901760
        %v2517 = vsub.f32 %v2320, %v2516
        %v2518 = vand.u32 %v2517, 4294901760
        %v2519 = vsub.f32 %v2517, %v2518
        %v2520 = vand.u32 %v2519, 4294901760
        %2521 = vmatpush1.msra.mxu0 %v2520
        %2522 = vmatprep.subr.mxu0 0.0
        %2523 = vmatpush1.msra.mxu0 0.0
        %2524 = vmatprep.subr.mxu0 0.0
        %2525 = vmatpush1.msra.mxu0 0.0
        %2526 = vmatprep.subr.mxu0 0.0
        %2527 = vmatpush1.msra.mxu0 0.0
        %2528 = vmatprep.subr.mxu0 0.0
        %2529 = vmatpush1.msra.mxu0 0.0
        %2530 = vmatprep.subr.mxu0 0.0
        %2531 = vmatpush1.msra.mxu0 0.0
        %2532 = vmatprep.subr.mxu0 0.0
        %2533 = vmatpush1.msra.mxu0 0.0
        %2534 = vmatprep.subr.mxu0 0.0
        %2535 = vmatpush1.msra.mxu0 0.0
        %2536 = vmatprep.subr.mxu0 0.0
        %2537 = vmatpush1.msra.mxu0 0.0
        %2538 = vmatprep.subr.mxu0 0.0
        %2539 = vmatpush1.msra.mxu0 0.0
        %2540 = vmatprep.subr.mxu0 0.0
        %2541 = vmatpush1.msra.mxu0 0.0
        %2542 = vmatprep.subr.mxu0 0.0
        %2543 = vmatpush1.msra.mxu0 0.0
        %2544 = vmatprep.subr.mxu0 0.0
        %2545 = vmatpush1.msra.mxu0 0.0
        %2546 = vmatprep.subr.mxu0 0.0
        %2547 = vmatpush1.msra.mxu0 0.0
        %2548 = vmatprep.subr.mxu0 0.0
        %2549 = vmatpush1.msra.mxu0 0.0
        %2550 = vmatprep.subr.mxu0 0.0
        %2551 = vmatpush1.msra.mxu0 0.0
        %2552 = vmatprep.subr.mxu0 0.0
        %2553 = vmatpush1.msra.mxu0 0.0
        %2554 = vmatprep.subr.mxu0 0.0
        %2555 = vmatpush1.msra.mxu0 0.0
        %2556 = vmatprep.subr.mxu0 0.0
        %2557 = vmatpush1.msra.mxu0 0.0
        %2558 = vmatprep.subr.mxu0 0.0
        %2559 = vmatpush1.msra.mxu0 0.0
        %2560 = vmatprep.subr.mxu0 0.0
        %2561 = vmatpush1.msra.mxu0 0.0
        %2562 = vmatprep.subr.mxu0 0.0
        %2563 = vmatpush1.msra.mxu0 0.0
        %2564 = vmatprep.subr.mxu0 0.0
        %2565 = vmatpush1.msra.mxu0 0.0
        %2566 = vmatprep.subr.mxu0 0.0
        %2567 = vmatpush1.msra.mxu0 0.0
        %2568 = vmatprep.subr.mxu0 0.0
        %2569 = vmatpush1.msra.mxu0 0.0
        %2570 = vmatprep.subr.mxu0 0.0
        %2571 = vmatpush1.msra.mxu0 0.0
        %2572 = vmatprep.subr.mxu0 0.0
        %2573 = vmatpush1.msra.mxu0 0.0
        %2574 = vmatprep.subr.mxu0 0.0
        %2575 = vmatpush1.msra.mxu0 0.0
        %2576 = vmatprep.subr.mxu0 0.0
        %2577 = vmatpush1.msra.mxu0 0.0
        %2578 = vmatprep.mubr.f32.mxu0 0.0
        %v2579 = vand.u32 %v2322, 4294901760
        %2580 = vmatmul.mubr.f32.gmra.mrb[0].mxu0 %v2579
        %v2581 = vpop.f32.mrb[0].mxu0
        %v2582 = vadd.f32 %v2421, %v2581
        %v2583 = vpop.f32.mrb[0].mxu0
        %2584 = vmatprep.mubr.f32.mxu0 0.0
        %v2585 = vand.u32 %v2325, 4294901760
        %2586 = vmatmul.mubr.f32.gmra.mrb[0].mxu0 %v2585
        %v2587 = vpop.f32.mrb[0].mxu0
        %v2588 = vadd.f32 %v2431, %v2587
        %v2589 = vpop.f32.mrb[0].mxu0
        %2590 = vmatprep.mubr.f32.mxu0 0.0
        %v2591 = vand.u32 %v2328, 4294901760
        %2592 = vmatmul.mubr.f32.gmra.mrb[0].mxu0 %v2591
        %v2593 = vpop.f32.mrb[0].mxu0
        %v2594 = vadd.f32 %v2441, %v2593
        %v2595 = vpop.f32.mrb[0].mxu0
        %2596 = vmatprep.mubr.f32.mxu0 0.0
        %v2597 = vand.u32 %v2331, 4294901760
        %2598 = vmatmul.mubr.f32.gmra.mrb[0].mxu0 %v2597
        %v2599 = vpop.f32.mrb[0].mxu0
        %v2600 = vadd.f32 %v2451, %v2599
        %v2601 = vpop.f32.mrb[0].mxu0
        %2602 = vmatprep.mubr.f32.mxu0 0.0
        %v2603 = vand.u32 %v2334, 4294901760
        %2604 = vmatmul.mubr.f32.gmra.mrb[0].mxu0 %v2603
        %v2605 = vpop.f32.mrb[0].mxu0
        %v2606 = vadd.f32 %v2461, %v2605
        %v2607 = vpop.f32.mrb[0].mxu0
        %2608 = vmatprep.mubr.f32.mxu0 0.0
        %v2609 = vand.u32 %v2337, 4294901760
        %2610 = vmatmul.mubr.f32.gmra.mrb[0].mxu0 %v2609
        %v2611 = vpop.f32.mrb[0].mxu0
        %v2612 = vadd.f32 %v2471, %v2611
        %v2613 = vpop.f32.mrb[0].mxu0
        %2614 = vmatprep.mubr.f32.mxu0 0.0
        %v2615 = vand.u32 %v2340, 4294901760
        %2616 = vmatmul.mubr.f32.gmra.mrb[0].mxu0 %v2615
        %v2617 = vpop.f32.mrb[0].mxu0
        %v2618 = vadd.f32 %v2481, %v2617
        %v2619 = vpop.f32.mrb[0].mxu0
        %2620 = vmatprep.mubr.f32.mxu0 0.0
        %v2621 = vand.u32 %v2343, 4294901760
        %2622 = vmatmul.mubr.f32.gmra.mrb[0].mxu0 %v2621
        %v2623 = vpop.f32.mrb[0].mxu0
        %v2624 = vadd.f32 %v2491, %v2623
        %v2625 = vpop.f32.mrb[0].mxu0
        %2626 = vdwg.mxu0
        %2627 = vmatprep.subr.mxu0 0.0
        %v2628 = vand.u32 %v2317, 4294901760
        %v2629 = vsub.f32 %v2317, %v2628
        %2630 = vmatpush1.msra.mxu0 %v2629
        %2631 = vmatprep.subr.mxu0 0.0
        %v2632 = vand.u32 %v2318, 4294901760
        %v2633 = vsub.f32 %v2318, %v2632
        %2634 = vmatpush1.msra.mxu0 %v2633
        %2635 = vmatprep.subr.mxu0 0.0
        %v2636 = vand.u32 %v2319, 4294901760
        %v2637 = vsub.f32 %v2319, %v2636
        %2638 = vmatpush1.msra.mxu0 %v2637
        %2639 = vmatprep.subr.mxu0 0.0
        %v2640 = vand.u32 %v2320, 4294901760
        %v2641 = vsub.f32 %v2320, %v2640
        %2642 = vmatpush1.msra.mxu0 %v2641
        %2643 = vmatprep.subr.mxu0 0.0
        %2644 = vmatpush1.msra.mxu0 0.0
        %2645 = vmatprep.subr.mxu0 0.0
        %2646 = vmatpush1.msra.mxu0 0.0
        %2647 = vmatprep.subr.mxu0 0.0
        %2648 = vmatpush1.msra.mxu0 0.0
        %2649 = vmatprep.subr.mxu0 0.0
        %2650 = vmatpush1.msra.mxu0 0.0
        %2651 = vmatprep.subr.mxu0 0.0
        %2652 = vmatpush1.msra.mxu0 0.0
        %2653 = vmatprep.subr.mxu0 0.0
        %2654 = vmatpush1.msra.mxu0 0.0
        %2655 = vmatprep.subr.mxu0 0.0
        %2656 = vmatpush1.msra.mxu0 0.0
        %2657 = vmatprep.subr.mxu0 0.0
        %2658 = vmatpush1.msra.mxu0 0.0
        %2659 = vmatprep.subr.mxu0 0.0
        %2660 = vmatpush1.msra.mxu0 0.0
        %2661 = vmatprep.subr.mxu0 0.0
        %2662 = vmatpush1.msra.mxu0 0.0
        %2663 = vmatprep.subr.mxu0 0.0
        %2664 = vmatpush1.msra.mxu0 0.0
        %2665 = vmatprep.subr.mxu0 0.0
        %2666 = vmatpush1.msra.mxu0 0.0
        %2667 = vmatprep.subr.mxu0 0.0
        %2668 = vmatpush1.msra.mxu0 0.0
        %2669 = vmatprep.subr.mxu0 0.0
        %2670 = vmatpush1.msra.mxu0 0.0
        %2671 = vmatprep.subr.mxu0 0.0
        %2672 = vmatpush1.msra.mxu0 0.0
        %2673 = vmatprep.subr.mxu0 0.0
        %2674 = vmatpush1.msra.mxu0 0.0
        %2675 = vmatprep.subr.mxu0 0.0
        %2676 = vmatpush1.msra.mxu0 0.0
        %2677 = vmatprep.subr.mxu0 0.0
        %2678 = vmatpush1.msra.mxu0 0.0
        %2679 = vmatprep.subr.mxu0 0.0
        %2680 = vmatpush1.msra.mxu0 0.0
        %2681 = vmatprep.subr.mxu0 0.0
        %2682 = vmatpush1.msra.mxu0 0.0
        %2683 = vmatprep.subr.mxu0 0.0
        %2684 = vmatpush1.msra.mxu0 0.0
        %2685 = vmatprep.subr.mxu0 0.0
        %2686 = vmatpush1.msra.mxu0 0.0
        %2687 = vmatprep.subr.mxu0 0.0
        %2688 = vmatpush1.msra.mxu0 0.0
        %2689 = vmatprep.subr.mxu0 0.0
        %2690 = vmatpush1.msra.mxu0 0.0
        %2691 = vmatprep.subr.mxu0 0.0
        %2692 = vmatpush1.msra.mxu0 0.0
        %2693 = vmatprep.subr.mxu0 0.0
        %2694 = vmatpush1.msra.mxu0 0.0
        %2695 = vmatprep.subr.mxu0 0.0
        %2696 = vmatpush1.msra.mxu0 0.0
        %2697 = vmatprep.subr.mxu0 0.0
        %2698 = vmatpush1.msra.mxu0 0.0
        %2699 = vmatprep.mubr.f32.mxu0 0.0
        %v2700 = vand.u32 %v2322, 4294901760
        %v2701 = vsub.f32 %v2322, %v2700
        %2702 = vmatmul.mubr.f32.gmra.mrb[0].mxu0 %v2701
        %v2703 = vpop.f32.mrb[0].mxu0
        %v2704 = vadd.f32 %v2582, %v2703
        %v2705 = vpop.f32.mrb[0].mxu0
        %2706 = vmatprep.mubr.f32.mxu0 0.0
        %v2707 = vand.u32 %v2325, 4294901760
        %v2708 = vsub.f32 %v2325, %v2707
        %2709 = vmatmul.mubr.f32.gmra.mrb[0].mxu0 %v2708
        %v2710 = vpop.f32.mrb[0].mxu0
        %v2711 = vadd.f32 %v2588, %v2710
        %v2712 = vpop.f32.mrb[0].mxu0
        %2713 = vmatprep.mubr.f32.mxu0 0.0
        %v2714 = vand.u32 %v2328, 4294901760
        %v2715 = vsub.f32 %v2328, %v2714
        %2716 = vmatmul.mubr.f32.gmra.mrb[0].mxu0 %v2715
        %v2717 = vpop.f32.mrb[0].mxu0
        %v2718 = vadd.f32 %v2594, %v2717
        %v2719 = vpop.f32.mrb[0].mxu0
        %2720 = vmatprep.mubr.f32.mxu0 0.0
        %v2721 = vand.u32 %v2331, 4294901760
        %v2722 = vsub.f32 %v2331, %v2721
        %2723 = vmatmul.mubr.f32.gmra.mrb[0].mxu0 %v2722
        %v2724 = vpop.f32.mrb[0].mxu0
        %v2725 = vadd.f32 %v2600, %v2724
        %v2726 = vpop.f32.mrb[0].mxu0
        %2727 = vmatprep.mubr.f32.mxu0 0.0
        %v2728 = vand.u32 %v2334, 4294901760
        %v2729 = vsub.f32 %v2334, %v2728
        %2730 = vmatmul.mubr.f32.gmra.mrb[0].mxu0 %v2729
        %v2731 = vpop.f32.mrb[0].mxu0
        %v2732 = vadd.f32 %v2606, %v2731
        %v2733 = vpop.f32.mrb[0].mxu0
        %2734 = vmatprep.mubr.f32.mxu0 0.0
        %v2735 = vand.u32 %v2337, 4294901760
        %v2736 = vsub.f32 %v2337, %v2735
        %2737 = vmatmul.mubr.f32.gmra.mrb[0].mxu0 %v2736
        %v2738 = vpop.f32.mrb[0].mxu0
        %v2739 = vadd.f32 %v2612, %v2738
        %v2740 = vpop.f32.mrb[0].mxu0
        %2741 = vmatprep.mubr.f32.mxu0 0.0
        %v2742 = vand.u32 %v2340, 4294901760
        %v2743 = vsub.f32 %v2340, %v2742
        %2744 = vmatmul.mubr.f32.gmra.mrb[0].mxu0 %v2743
        %v2745 = vpop.f32.mrb[0].mxu0
        %v2746 = vadd.f32 %v2618, %v2745
        %v2747 = vpop.f32.mrb[0].mxu0
        %2748 = vmatprep.mubr.f32.mxu0 0.0
        %v2749 = vand.u32 %v2343, 4294901760
        %v2750 = vsub.f32 %v2343, %v2749
        %2751 = vmatmul.mubr.f32.gmra.mrb[0].mxu0 %v2750
        %v2752 = vpop.f32.mrb[0].mxu0
        %v2753 = vadd.f32 %v2624, %v2752
        %v2754 = vpop.f32.mrb[0].mxu0
        %2755 = vdwg.mxu0
        %2756 = vmatprep.subr.mxu0 0.0
        %v2757 = vand.u32 %v2317, 4294901760
        %2758 = vmatpush1.msra.mxu0 %v2757
        %2759 = vmatprep.subr.mxu0 0.0
        %v2760 = vand.u32 %v2318, 4294901760
        %2761 = vmatpush1.msra.mxu0 %v2760
        %2762 = vmatprep.subr.mxu0 0.0
        %v2763 = vand.u32 %v2319, 4294901760
        %2764 = vmatpush1.msra.mxu0 %v2763
        %2765 = vmatprep.subr.mxu0 0.0
        %v2766 = vand.u32 %v2320, 4294901760
        %2767 = vmatpush1.msra.mxu0 %v2766
        %2768 = vmatprep.subr.mxu0 0.0
        %2769 = vmatpush1.msra.mxu0 0.0
        %2770 = vmatprep.subr.mxu0 0.0
        %2771 = vmatpush1.msra.mxu0 0.0
        %2772 = vmatprep.subr.mxu0 0.0
        %2773 = vmatpush1.msra.mxu0 0.0
        %2774 = vmatprep.subr.mxu0 0.0
        %2775 = vmatpush1.msra.mxu0 0.0
        %2776 = vmatprep.subr.mxu0 0.0
        %2777 = vmatpush1.msra.mxu0 0.0
        %2778 = vmatprep.subr.mxu0 0.0
        %2779 = vmatpush1.msra.mxu0 0.0
        %2780 = vmatprep.subr.mxu0 0.0
        %2781 = vmatpush1.msra.mxu0 0.0
        %2782 = vmatprep.subr.mxu0 0.0
        %2783 = vmatpush1.msra.mxu0 0.0
        %2784 = vmatprep.subr.mxu0 0.0
        %2785 = vmatpush1.msra.mxu0 0.0
        %2786 = vmatprep.subr.mxu0 0.0
        %2787 = vmatpush1.msra.mxu0 0.0
        %2788 = vmatprep.subr.mxu0 0.0
        %2789 = vmatpush1.msra.mxu0 0.0
        %2790 = vmatprep.subr.mxu0 0.0
        %2791 = vmatpush1.msra.mxu0 0.0
        %2792 = vmatprep.subr.mxu0 0.0
        %2793 = vmatpush1.msra.mxu0 0.0
        %2794 = vmatprep.subr.mxu0 0.0
        %2795 = vmatpush1.msra.mxu0 0.0
        %2796 = vmatprep.subr.mxu0 0.0
        %2797 = vmatpush1.msra.mxu0 0.0
        %2798 = vmatprep.subr.mxu0 0.0
        %2799 = vmatpush1.msra.mxu0 0.0
        %2800 = vmatprep.subr.mxu0 0.0
        %2801 = vmatpush1.msra.mxu0 0.0
        %2802 = vmatprep.subr.mxu0 0.0
        %2803 = vmatpush1.msra.mxu0 0.0
        %2804 = vmatprep.subr.mxu0 0.0
        %2805 = vmatpush1.msra.mxu0 0.0
        %2806 = vmatprep.subr.mxu0 0.0
        %2807 = vmatpush1.msra.mxu0 0.0
        %2808 = vmatprep.subr.mxu0 0.0
        %2809 = vmatpush1.msra.mxu0 0.0
        %2810 = vmatprep.subr.mxu0 0.0
        %2811 = vmatpush1.msra.mxu0 0.0
        %2812 = vmatprep.subr.mxu0 0.0
        %2813 = vmatpush1.msra.mxu0 0.0
        %2814 = vmatprep.subr.mxu0 0.0
        %2815 = vmatpush1.msra.mxu0 0.0
        %2816 = vmatprep.subr.mxu0 0.0
        %2817 = vmatpush1.msra.mxu0 0.0
        %2818 = vmatprep.subr.mxu0 0.0
        %2819 = vmatpush1.msra.mxu0 0.0
        %2820 = vmatprep.subr.mxu0 0.0
        %2821 = vmatpush1.msra.mxu0 0.0
        %2822 = vmatprep.subr.mxu0 0.0
        %2823 = vmatpush1.msra.mxu0 0.0
        %2824 = vmatprep.mubr.f32.mxu0 0.0
        %v2825 = vand.u32 %v2322, 4294901760
        %v2826 = vsub.f32 %v2322, %v2825
        %v2827 = vand.u32 %v2826, 4294901760
        %2828 = vmatmul.mubr.f32.gmra.mrb[0].mxu0 %v2827
        %v2829 = vpop.f32.mrb[0].mxu0
        %v2830 = vadd.f32 %v2704, %v2829
        %v2831 = vpop.f32.mrb[0].mxu0
        %2832 = vmatprep.mubr.f32.mxu0 0.0
        %v2833 = vand.u32 %v2325, 4294901760
        %v2834 = vsub.f32 %v2325, %v2833
        %v2835 = vand.u32 %v2834, 4294901760
        %2836 = vmatmul.mubr.f32.gmra.mrb[0].mxu0 %v2835
        %v2837 = vpop.f32.mrb[0].mxu0
        %v2838 = vadd.f32 %v2711, %v2837
        %v2839 = vpop.f32.mrb[0].mxu0
        %2840 = vmatprep.mubr.f32.mxu0 0.0
        %v2841 = vand.u32 %v2328, 4294901760
        %v2842 = vsub.f32 %v2328, %v2841
        %v2843 = vand.u32 %v2842, 4294901760
        %2844 = vmatmul.mubr.f32.gmra.mrb[0].mxu0 %v2843
        %v2845 = vpop.f32.mrb[0].mxu0
        %v2846 = vadd.f32 %v2718, %v2845
        %v2847 = vpop.f32.mrb[0].mxu0
        %2848 = vmatprep.mubr.f32.mxu0 0.0
        %v2849 = vand.u32 %v2331, 4294901760
        %v2850 = vsub.f32 %v2331, %v2849
        %v2851 = vand.u32 %v2850, 4294901760
        %2852 = vmatmul.mubr.f32.gmra.mrb[0].mxu0 %v2851
        %v2853 = vpop.f32.mrb[0].mxu0
        %v2854 = vadd.f32 %v2725, %v2853
        %v2855 = vpop.f32.mrb[0].mxu0
        %2856 = vmatprep.mubr.f32.mxu0 0.0
        %v2857 = vand.u32 %v2334, 4294901760
        %v2858 = vsub.f32 %v2334, %v2857
        %v2859 = vand.u32 %v2858, 4294901760
        %2860 = vmatmul.mubr.f32.gmra.mrb[0].mxu0 %v2859
        %v2861 = vpop.f32.mrb[0].mxu0
        %v2862 = vadd.f32 %v2732, %v2861
        %v2863 = vpop.f32.mrb[0].mxu0
        %2864 = vmatprep.mubr.f32.mxu0 0.0
        %v2865 = vand.u32 %v2337, 4294901760
        %v2866 = vsub.f32 %v2337, %v2865
        %v2867 = vand.u32 %v2866, 4294901760
        %2868 = vmatmul.mubr.f32.gmra.mrb[0].mxu0 %v2867
        %v2869 = vpop.f32.mrb[0].mxu0
        %v2870 = vadd.f32 %v2739, %v2869
        %v2871 = vpop.f32.mrb[0].mxu0
        %2872 = vmatprep.mubr.f32.mxu0 0.0
        %v2873 = vand.u32 %v2340, 4294901760
        %v2874 = vsub.f32 %v2340, %v2873
        %v2875 = vand.u32 %v2874, 4294901760
        %2876 = vmatmul.mubr.f32.gmra.mrb[0].mxu0 %v2875
        %v2877 = vpop.f32.mrb[0].mxu0
        %v2878 = vadd.f32 %v2746, %v2877
        %v2879 = vpop.f32.mrb[0].mxu0
        %2880 = vmatprep.mubr.f32.mxu0 0.0
        %v2881 = vand.u32 %v2343, 4294901760
        %v2882 = vsub.f32 %v2343, %v2881
        %v2883 = vand.u32 %v2882, 4294901760
        %2884 = vmatmul.mubr.f32.gmra.mrb[0].mxu0 %v2883
        %v2885 = vpop.f32.mrb[0].mxu0
        %v2886 = vadd.f32 %v2753, %v2885
        %v2887 = vpop.f32.mrb[0].mxu0
        %2888 = vdwg.mxu0
        %2889 = vmatprep.subr.mxu0 0.0
        %v2890 = vand.u32 %v2317, 4294901760
        %v2891 = vsub.f32 %v2317, %v2890
        %v2892 = vand.u32 %v2891, 4294901760
        %2893 = vmatpush1.msra.mxu0 %v2892
        %2894 = vmatprep.subr.mxu0 0.0
        %v2895 = vand.u32 %v2318, 4294901760
        %v2896 = vsub.f32 %v2318, %v2895
        %v2897 = vand.u32 %v2896, 4294901760
        %2898 = vmatpush1.msra.mxu0 %v2897
        %2899 = vmatprep.subr.mxu0 0.0
        %v2900 = vand.u32 %v2319, 4294901760
        %v2901 = vsub.f32 %v2319, %v2900
        %v2902 = vand.u32 %v2901, 4294901760
        %2903 = vmatpush1.msra.mxu0 %v2902
        %2904 = vmatprep.subr.mxu0 0.0
        %v2905 = vand.u32 %v2320, 4294901760
        %v2906 = vsub.f32 %v2320, %v2905
        %v2907 = vand.u32 %v2906, 4294901760
        %2908 = vmatpush1.msra.mxu0 %v2907
        %2909 = vmatprep.subr.mxu0 0.0
        %2910 = vmatpush1.msra.mxu0 0.0
        %2911 = vmatprep.subr.mxu0 0.0
        %2912 = vmatpush1.msra.mxu0 0.0
        %2913 = vmatprep.subr.mxu0 0.0
        %2914 = vmatpush1.msra.mxu0 0.0
        %2915 = vmatprep.subr.mxu0 0.0
        %2916 = vmatpush1.msra.mxu0 0.0
        %2917 = vmatprep.subr.mxu0 0.0
        %2918 = vmatpush1.msra.mxu0 0.0
        %2919 = vmatprep.subr.mxu0 0.0
        %2920 = vmatpush1.msra.mxu0 0.0
        %2921 = vmatprep.subr.mxu0 0.0
        %2922 = vmatpush1.msra.mxu0 0.0
        %2923 = vmatprep.subr.mxu0 0.0
        %2924 = vmatpush1.msra.mxu0 0.0
        %2925 = vmatprep.subr.mxu0 0.0
        %2926 = vmatpush1.msra.mxu0 0.0
        %2927 = vmatprep.subr.mxu0 0.0
        %2928 = vmatpush1.msra.mxu0 0.0
        %2929 = vmatprep.subr.mxu0 0.0
        %2930 = vmatpush1.msra.mxu0 0.0
        %2931 = vmatprep.subr.mxu0 0.0
        %2932 = vmatpush1.msra.mxu0 0.0
        %2933 = vmatprep.subr.mxu0 0.0
        %2934 = vmatpush1.msra.mxu0 0.0
        %2935 = vmatprep.subr.mxu0 0.0
        %2936 = vmatpush1.msra.mxu0 0.0
        %2937 = vmatprep.subr.mxu0 0.0
        %2938 = vmatpush1.msra.mxu0 0.0
        %2939 = vmatprep.subr.mxu0 0.0
        %2940 = vmatpush1.msra.mxu0 0.0
        %2941 = vmatprep.subr.mxu0 0.0
        %2942 = vmatpush1.msra.mxu0 0.0
        %2943 = vmatprep.subr.mxu0 0.0
        %2944 = vmatpush1.msra.mxu0 0.0
        %2945 = vmatprep.subr.mxu0 0.0
        %2946 = vmatpush1.msra.mxu0 0.0
        %2947 = vmatprep.subr.mxu0 0.0
        %2948 = vmatpush1.msra.mxu0 0.0
        %2949 = vmatprep.subr.mxu0 0.0
        %2950 = vmatpush1.msra.mxu0 0.0
        %2951 = vmatprep.subr.mxu0 0.0
        %2952 = vmatpush1.msra.mxu0 0.0
        %2953 = vmatprep.subr.mxu0 0.0
        %2954 = vmatpush1.msra.mxu0 0.0
        %2955 = vmatprep.subr.mxu0 0.0
        %2956 = vmatpush1.msra.mxu0 0.0
        %2957 = vmatprep.subr.mxu0 0.0
        %2958 = vmatpush1.msra.mxu0 0.0
        %2959 = vmatprep.subr.mxu0 0.0
        %2960 = vmatpush1.msra.mxu0 0.0
        %2961 = vmatprep.subr.mxu0 0.0
        %2962 = vmatpush1.msra.mxu0 0.0
        %2963 = vmatprep.subr.mxu0 0.0
        %2964 = vmatpush1.msra.mxu0 0.0
        %2965 = vmatprep.mubr.f32.mxu0 0.0
        %v2966 = vand.u32 %v2322, 4294901760
        %2967 = vmatmul.mubr.f32.gmra.mrb[0].mxu0 %v2966
        %v2968 = vpop.f32.mrb[0].mxu0
        %v2969 = vadd.f32 %v2830, %v2968
        %v2970 = vpop.f32.mrb[0].mxu0
        %2971 = vmatprep.mubr.f32.mxu0 0.0
        %v2972 = vand.u32 %v2325, 4294901760
        %2973 = vmatmul.mubr.f32.gmra.mrb[0].mxu0 %v2972
        %v2974 = vpop.f32.mrb[0].mxu0
        %v2975 = vadd.f32 %v2838, %v2974
        %v2976 = vpop.f32.mrb[0].mxu0
        %2977 = vmatprep.mubr.f32.mxu0 0.0
        %v2978 = vand.u32 %v2328, 4294901760
        %2979 = vmatmul.mubr.f32.gmra.mrb[0].mxu0 %v2978
        %v2980 = vpop.f32.mrb[0].mxu0
        %v2981 = vadd.f32 %v2846, %v2980
        %v2982 = vpop.f32.mrb[0].mxu0
        %2983 = vmatprep.mubr.f32.mxu0 0.0
        %v2984 = vand.u32 %v2331, 4294901760
        %2985 = vmatmul.mubr.f32.gmra.mrb[0].mxu0 %v2984
        %v2986 = vpop.f32.mrb[0].mxu0
        %v2987 = vadd.f32 %v2854, %v2986
        %v2988 = vpop.f32.mrb[0].mxu0
        %2989 = vmatprep.mubr.f32.mxu0 0.0
        %v2990 = vand.u32 %v2334, 4294901760
        %2991 = vmatmul.mubr.f32.gmra.mrb[0].mxu0 %v2990
        %v2992 = vpop.f32.mrb[0].mxu0
        %v2993 = vadd.f32 %v2862, %v2992
        %v2994 = vpop.f32.mrb[0].mxu0
        %2995 = vmatprep.mubr.f32.mxu0 0.0
        %v2996 = vand.u32 %v2337, 4294901760
        %2997 = vmatmul.mubr.f32.gmra.mrb[0].mxu0 %v2996
        %v2998 = vpop.f32.mrb[0].mxu0
        %v2999 = vadd.f32 %v2870, %v2998
        %v3000 = vpop.f32.mrb[0].mxu0
        %3001 = vmatprep.mubr.f32.mxu0 0.0
        %v3002 = vand.u32 %v2340, 4294901760
        %3003 = vmatmul.mubr.f32.gmra.mrb[0].mxu0 %v3002
        %v3004 = vpop.f32.mrb[0].mxu0
        %v3005 = vadd.f32 %v2878, %v3004
        %v3006 = vpop.f32.mrb[0].mxu0
        %3007 = vmatprep.mubr.f32.mxu0 0.0
        %v3008 = vand.u32 %v2343, 4294901760
        %3009 = vmatmul.mubr.f32.gmra.mrb[0].mxu0 %v3008
        %v3010 = vpop.f32.mrb[0].mxu0
        %v3011 = vadd.f32 %v2886, %v3010
        %v3012 = vpop.f32.mrb[0].mxu0
        %3013 = vdwg.mxu0
        %3014 = vmatprep.subr.mxu0 0.0
        %v3015 = vand.u32 %v2317, 4294901760
        %3016 = vmatpush1.msra.mxu0 %v3015
        %3017 = vmatprep.subr.mxu0 0.0
        %v3018 = vand.u32 %v2318, 4294901760
        %3019 = vmatpush1.msra.mxu0 %v3018
        %3020 = vmatprep.subr.mxu0 0.0
        %v3021 = vand.u32 %v2319, 4294901760
        %3022 = vmatpush1.msra.mxu0 %v3021
        %3023 = vmatprep.subr.mxu0 0.0
        %v3024 = vand.u32 %v2320, 4294901760
        %3025 = vmatpush1.msra.mxu0 %v3024
        %3026 = vmatprep.subr.mxu0 0.0
        %3027 = vmatpush1.msra.mxu0 0.0
        %3028 = vmatprep.subr.mxu0 0.0
        %3029 = vmatpush1.msra.mxu0 0.0
        %3030 = vmatprep.subr.mxu0 0.0
        %3031 = vmatpush1.msra.mxu0 0.0
        %3032 = vmatprep.subr.mxu0 0.0
        %3033 = vmatpush1.msra.mxu0 0.0
        %3034 = vmatprep.subr.mxu0 0.0
        %3035 = vmatpush1.msra.mxu0 0.0
        %3036 = vmatprep.subr.mxu0 0.0
        %3037 = vmatpush1.msra.mxu0 0.0
        %3038 = vmatprep.subr.mxu0 0.0
        %3039 = vmatpush1.msra.mxu0 0.0
        %3040 = vmatprep.subr.mxu0 0.0
        %3041 = vmatpush1.msra.mxu0 0.0
        %3042 = vmatprep.subr.mxu0 0.0
        %3043 = vmatpush1.msra.mxu0 0.0
        %3044 = vmatprep.subr.mxu0 0.0
        %3045 = vmatpush1.msra.mxu0 0.0
        %3046 = vmatprep.subr.mxu0 0.0
        %3047 = vmatpush1.msra.mxu0 0.0
        %3048 = vmatprep.subr.mxu0 0.0
        %3049 = vmatpush1.msra.mxu0 0.0
        %3050 = vmatprep.subr.mxu0 0.0
        %3051 = vmatpush1.msra.mxu0 0.0
        %3052 = vmatprep.subr.mxu0 0.0
        %3053 = vmatpush1.msra.mxu0 0.0
        %3054 = vmatprep.subr.mxu0 0.0
        %3055 = vmatpush1.msra.mxu0 0.0
        %3056 = vmatprep.subr.mxu0 0.0
        %3057 = vmatpush1.msra.mxu0 0.0
        %3058 = vmatprep.subr.mxu0 0.0
        %3059 = vmatpush1.msra.mxu0 0.0
        %3060 = vmatprep.subr.mxu0 0.0
        %3061 = vmatpush1.msra.mxu0 0.0
        %3062 = vmatprep.subr.mxu0 0.0
        %3063 = vmatpush1.msra.mxu0 0.0
        %3064 = vmatprep.subr.mxu0 0.0
        %3065 = vmatpush1.msra.mxu0 0.0
        %3066 = vmatprep.subr.mxu0 0.0
        %3067 = vmatpush1.msra.mxu0 0.0
        %3068 = vmatprep.subr.mxu0 0.0
        %3069 = vmatpush1.msra.mxu0 0.0
        %3070 = vmatprep.subr.mxu0 0.0
        %3071 = vmatpush1.msra.mxu0 0.0
        %3072 = vmatprep.subr.mxu0 0.0
        %3073 = vmatpush1.msra.mxu0 0.0
        %3074 = vmatprep.subr.mxu0 0.0
        %3075 = vmatpush1.msra.mxu0 0.0
        %3076 = vmatprep.subr.mxu0 0.0
        %3077 = vmatpush1.msra.mxu0 0.0
        %3078 = vmatprep.subr.mxu0 0.0
        %3079 = vmatpush1.msra.mxu0 0.0
        %3080 = vmatprep.subr.mxu0 0.0
        %3081 = vmatpush1.msra.mxu0 0.0
        %3082 = vmatprep.mubr.f32.mxu0 0.0
        %v3083 = vand.u32 %v2322, 4294901760
        %3084 = vmatmul.mubr.f32.gmra.mrb[0].mxu0 %v3083
        %v3085 = vpop.f32.mrb[0].mxu0
        %v3086 = vadd.f32 %v2969, %v3085
        %v3087 = vpop.f32.mrb[0].mxu0
        %3088 = vmatprep.mubr.f32.mxu0 0.0
        %v3089 = vand.u32 %v2325, 4294901760
        %3090 = vmatmul.mubr.f32.gmra.mrb[0].mxu0 %v3089
        %v3091 = vpop.f32.mrb[0].mxu0
        %v3092 = vadd.f32 %v2975, %v3091
        %v3093 = vpop.f32.mrb[0].mxu0
        %3094 = vmatprep.mubr.f32.mxu0 0.0
        %v3095 = vand.u32 %v2328, 4294901760
        %3096 = vmatmul.mubr.f32.gmra.mrb[0].mxu0 %v3095
        %v3097 = vpop.f32.mrb[0].mxu0
        %v3098 = vadd.f32 %v2981, %v3097
        %v3099 = vpop.f32.mrb[0].mxu0
        %3100 = vmatprep.mubr.f32.mxu0 0.0
        %v3101 = vand.u32 %v2331, 4294901760
        %3102 = vmatmul.mubr.f32.gmra.mrb[0].mxu0 %v3101
        %v3103 = vpop.f32.mrb[0].mxu0
        %v3104 = vadd.f32 %v2987, %v3103
        %v3105 = vpop.f32.mrb[0].mxu0
        %3106 = vmatprep.mubr.f32.mxu0 0.0
        %v3107 = vand.u32 %v2334, 4294901760
        %3108 = vmatmul.mubr.f32.gmra.mrb[0].mxu0 %v3107
        %v3109 = vpop.f32.mrb[0].mxu0
        %v3110 = vadd.f32 %v2993, %v3109
        %v3111 = vpop.f32.mrb[0].mxu0
        %3112 = vmatprep.mubr.f32.mxu0 0.0
        %v3113 = vand.u32 %v2337, 4294901760
        %3114 = vmatmul.mubr.f32.gmra.mrb[0].mxu0 %v3113
        %v3115 = vpop.f32.mrb[0].mxu0
        %v3116 = vadd.f32 %v2999, %v3115
        %v3117 = vpop.f32.mrb[0].mxu0
        %3118 = vmatprep.mubr.f32.mxu0 0.0
        %v3119 = vand.u32 %v2340, 4294901760
        %3120 = vmatmul.mubr.f32.gmra.mrb[0].mxu0 %v3119
        %v3121 = vpop.f32.mrb[0].mxu0
        %v3122 = vadd.f32 %v3005, %v3121
        %v3123 = vpop.f32.mrb[0].mxu0
        %3124 = vmatprep.mubr.f32.mxu0 0.0
        %v3125 = vand.u32 %v2343, 4294901760
        %3126 = vmatmul.mubr.f32.gmra.mrb[0].mxu0 %v3125
        %v3127 = vpop.f32.mrb[0].mxu0
        %v3128 = vadd.f32 %v3011, %v3127
        %v3129 = vpop.f32.mrb[0].mxu0
        %3130 = vdwg.mxu0
        %3131 = vxpose.xlu0.b32.start [1/16] %v3086, 128
        %3132 = vxpose.xlu0.b32.cont [2/16] %v3092, 128
        %3133 = vxpose.xlu0.b32.cont [3/16] 0.0, 128
        %3134 = vxpose.xlu0.b32.cont [4/16] 0.0, 128
        %3135 = vxpose.xlu0.b32.cont [5/16] 0.0, 128
        %3136 = vxpose.xlu0.b32.cont [6/16] 0.0, 128
        %3137 = vxpose.xlu0.b32.cont [7/16] 0.0, 128
        %3138 = vxpose.xlu0.b32.cont [8/16] 0.0, 128
        %3139 = vxpose.xlu0.b32.cont [9/16] 0.0, 128
        %3140 = vxpose.xlu0.b32.cont [10/16] 0.0, 128
        %3141 = vxpose.xlu0.b32.cont [11/16] 0.0, 128
        %3142 = vxpose.xlu0.b32.cont [12/16] 0.0, 128
        %3143 = vxpose.xlu0.b32.cont [13/16] 0.0, 128
        %3144 = vxpose.xlu0.b32.cont [14/16] 0.0, 128
        %3145 = vxpose.xlu0.b32.cont [15/16] 0.0, 128
        %3146 = vxpose.xlu0.b32.end [16/16] 0.0, 128
        %v3147 = vpop.trf.xlu0
        %v3148 = vpop.trf.xlu0
        %v3149 = vpop.trf.xlu0
        %v3150 = vpop.trf.xlu0
        %v3151 = vpop.trf.xlu0
        %v3152 = vpop.trf.xlu0
        %v3153 = vpop.trf.xlu0
        %v3154 = vpop.trf.xlu0
        %v3155 = vpop.trf.xlu0
        %v3156 = vpop.trf.xlu0
        %v3157 = vpop.trf.xlu0
        %v3158 = vpop.trf.xlu0
        %v3159 = vpop.trf.xlu0
        %v3160 = vpop.trf.xlu0
        %v3161 = vpop.trf.xlu0
        %v3162 = vpop.trf.xlu0
        %3165 = vrot.lane.b32.xlu0 %v3086, 112
        %v3166 = vpop.permute.xlu0 %3165
        %3167 = vrot.lane.b32.xlu0 %v3092, 112
        %v3168 = vpop.permute.xlu0 %3167
        %3171 = vxpose.xlu0.b32.start [1/16] %v3166, 128
        %3172 = vxpose.xlu0.b32.cont [2/16] %v3168, 128
        %3173 = vxpose.xlu0.b32.cont [3/16] 0.0, 128
        %3174 = vxpose.xlu0.b32.cont [4/16] 0.0, 128
        %3175 = vxpose.xlu0.b32.cont [5/16] 0.0, 128
        %3176 = vxpose.xlu0.b32.cont [6/16] 0.0, 128
        %3177 = vxpose.xlu0.b32.cont [7/16] 0.0, 128
        %3178 = vxpose.xlu0.b32.cont [8/16] 0.0, 128
        %3179 = vxpose.xlu0.b32.cont [9/16] 0.0, 128
        %3180 = vxpose.xlu0.b32.cont [10/16] 0.0, 128
        %3181 = vxpose.xlu0.b32.cont [11/16] 0.0, 128
        %3182 = vxpose.xlu0.b32.cont [12/16] 0.0, 128
        %3183 = vxpose.xlu0.b32.cont [13/16] 0.0, 128
        %3184 = vxpose.xlu0.b32.cont [14/16] 0.0, 128
        %3185 = vxpose.xlu0.b32.cont [15/16] 0.0, 128
        %3186 = vxpose.xlu0.b32.end [16/16] 0.0, 128
        %v3187 = vpop.trf.xlu0
        %v3188 = vpop.trf.xlu0
        %v3189 = vpop.trf.xlu0
        %v3190 = vpop.trf.xlu0
        %v3191 = vpop.trf.xlu0
        %v3192 = vpop.trf.xlu0
        %v3193 = vpop.trf.xlu0
        %v3194 = vpop.trf.xlu0
        %v3195 = vpop.trf.xlu0
        %v3196 = vpop.trf.xlu0
        %v3197 = vpop.trf.xlu0
        %v3198 = vpop.trf.xlu0
        %v3199 = vpop.trf.xlu0
        %v3200 = vpop.trf.xlu0
        %v3201 = vpop.trf.xlu0
        %v3202 = vpop.trf.xlu0
        %3205 = vrot.lane.b32.xlu0 %v3187, 16
        %v3206 = vpop.permute.xlu0 %3205
        %3207 = vrot.lane.b32.xlu0 %v3188, 16
        %v3208 = vpop.permute.xlu0 %3207
        %v3211 = vsel %vm1234, %v3147, %v3206
        %v3212 = vsel %vm1234, %v3148, %v3208
        %3213 = vxpose.xlu0.b32.start [1/16] %v3098, 128
        %3214 = vxpose.xlu0.b32.cont [2/16] %v3104, 128
        %3215 = vxpose.xlu0.b32.cont [3/16] 0.0, 128
        %3216 = vxpose.xlu0.b32.cont [4/16] 0.0, 128
        %3217 = vxpose.xlu0.b32.cont [5/16] 0.0, 128
        %3218 = vxpose.xlu0.b32.cont [6/16] 0.0, 128
        %3219 = vxpose.xlu0.b32.cont [7/16] 0.0, 128
        %3220 = vxpose.xlu0.b32.cont [8/16] 0.0, 128
        %3221 = vxpose.xlu0.b32.cont [9/16] 0.0, 128
        %3222 = vxpose.xlu0.b32.cont [10/16] 0.0, 128
        %3223 = vxpose.xlu0.b32.cont [11/16] 0.0, 128
        %3224 = vxpose.xlu0.b32.cont [12/16] 0.0, 128
        %3225 = vxpose.xlu0.b32.cont [13/16] 0.0, 128
        %3226 = vxpose.xlu0.b32.cont [14/16] 0.0, 128
        %3227 = vxpose.xlu0.b32.cont [15/16] 0.0, 128
        %3228 = vxpose.xlu0.b32.end [16/16] 0.0, 128
        %v3229 = vpop.trf.xlu0
        %v3230 = vpop.trf.xlu0
        %v3231 = vpop.trf.xlu0
        %v3232 = vpop.trf.xlu0
        %v3233 = vpop.trf.xlu0
        %v3234 = vpop.trf.xlu0
        %v3235 = vpop.trf.xlu0
        %v3236 = vpop.trf.xlu0
        %v3237 = vpop.trf.xlu0
        %v3238 = vpop.trf.xlu0
        %v3239 = vpop.trf.xlu0
        %v3240 = vpop.trf.xlu0
        %v3241 = vpop.trf.xlu0
        %v3242 = vpop.trf.xlu0
        %v3243 = vpop.trf.xlu0
        %v3244 = vpop.trf.xlu0
        %3247 = vrot.lane.b32.xlu0 %v3098, 112
        %v3248 = vpop.permute.xlu0 %3247
        %3249 = vrot.lane.b32.xlu0 %v3104, 112
        %v3250 = vpop.permute.xlu0 %3249
        %3253 = vxpose.xlu0.b32.start [1/16] %v3248, 128
        %3254 = vxpose.xlu0.b32.cont [2/16] %v3250, 128
        %3255 = vxpose.xlu0.b32.cont [3/16] 0.0, 128
        %3256 = vxpose.xlu0.b32.cont [4/16] 0.0, 128
        %3257 = vxpose.xlu0.b32.cont [5/16] 0.0, 128
        %3258 = vxpose.xlu0.b32.cont [6/16] 0.0, 128
        %3259 = vxpose.xlu0.b32.cont [7/16] 0.0, 128
        %3260 = vxpose.xlu0.b32.cont [8/16] 0.0, 128
        %3261 = vxpose.xlu0.b32.cont [9/16] 0.0, 128
        %3262 = vxpose.xlu0.b32.cont [10/16] 0.0, 128
        %3263 = vxpose.xlu0.b32.cont [11/16] 0.0, 128
        %3264 = vxpose.xlu0.b32.cont [12/16] 0.0, 128
        %3265 = vxpose.xlu0.b32.cont [13/16] 0.0, 128
        %3266 = vxpose.xlu0.b32.cont [14/16] 0.0, 128
        %3267 = vxpose.xlu0.b32.cont [15/16] 0.0, 128
        %3268 = vxpose.xlu0.b32.end [16/16] 0.0, 128
        %v3269 = vpop.trf.xlu0
        %v3270 = vpop.trf.xlu0
        %v3271 = vpop.trf.xlu0
        %v3272 = vpop.trf.xlu0
        %v3273 = vpop.trf.xlu0
        %v3274 = vpop.trf.xlu0
        %v3275 = vpop.trf.xlu0
        %v3276 = vpop.trf.xlu0
        %v3277 = vpop.trf.xlu0
        %v3278 = vpop.trf.xlu0
        %v3279 = vpop.trf.xlu0
        %v3280 = vpop.trf.xlu0
        %v3281 = vpop.trf.xlu0
        %v3282 = vpop.trf.xlu0
        %v3283 = vpop.trf.xlu0
        %v3284 = vpop.trf.xlu0
        %3287 = vrot.lane.b32.xlu0 %v3269, 16
        %v3288 = vpop.permute.xlu0 %3287
        %3289 = vrot.lane.b32.xlu0 %v3270, 16
        %v3290 = vpop.permute.xlu0 %3289
        %v3293 = vsel %vm1234, %v3229, %v3288
        %v3294 = vsel %vm1234, %v3230, %v3290
        %3295 = vxpose.xlu0.b32.start [1/16] %v3110, 128
        %3296 = vxpose.xlu0.b32.cont [2/16] %v3116, 128
        %3297 = vxpose.xlu0.b32.cont [3/16] 0.0, 128
        %3298 = vxpose.xlu0.b32.cont [4/16] 0.0, 128
        %3299 = vxpose.xlu0.b32.cont [5/16] 0.0, 128
        %3300 = vxpose.xlu0.b32.cont [6/16] 0.0, 128
        %3301 = vxpose.xlu0.b32.cont [7/16] 0.0, 128
        %3302 = vxpose.xlu0.b32.cont [8/16] 0.0, 128
        %3303 = vxpose.xlu0.b32.cont [9/16] 0.0, 128
        %3304 = vxpose.xlu0.b32.cont [10/16] 0.0, 128
        %3305 = vxpose.xlu0.b32.cont [11/16] 0.0, 128
        %3306 = vxpose.xlu0.b32.cont [12/16] 0.0, 128
        %3307 = vxpose.xlu0.b32.cont [13/16] 0.0, 128
        %3308 = vxpose.xlu0.b32.cont [14/16] 0.0, 128
        %3309 = vxpose.xlu0.b32.cont [15/16] 0.0, 128
        %3310 = vxpose.xlu0.b32.end [16/16] 0.0, 128
        %v3311 = vpop.trf.xlu0
        %v3312 = vpop.trf.xlu0
        %v3313 = vpop.trf.xlu0
        %v3314 = vpop.trf.xlu0
        %v3315 = vpop.trf.xlu0
        %v3316 = vpop.trf.xlu0
        %v3317 = vpop.trf.xlu0
        %v3318 = vpop.trf.xlu0
        %v3319 = vpop.trf.xlu0
        %v3320 = vpop.trf.xlu0
        %v3321 = vpop.trf.xlu0
        %v3322 = vpop.trf.xlu0
        %v3323 = vpop.trf.xlu0
        %v3324 = vpop.trf.xlu0
        %v3325 = vpop.trf.xlu0
        %v3326 = vpop.trf.xlu0
        %3329 = vrot.lane.b32.xlu0 %v3110, 112
        %v3330 = vpop.permute.xlu0 %3329
        %3331 = vrot.lane.b32.xlu0 %v3116, 112
        %v3332 = vpop.permute.xlu0 %3331
        %3335 = vxpose.xlu0.b32.start [1/16] %v3330, 128
        %3336 = vxpose.xlu0.b32.cont [2/16] %v3332, 128
        %3337 = vxpose.xlu0.b32.cont [3/16] 0.0, 128
        %3338 = vxpose.xlu0.b32.cont [4/16] 0.0, 128
        %3339 = vxpose.xlu0.b32.cont [5/16] 0.0, 128
        %3340 = vxpose.xlu0.b32.cont [6/16] 0.0, 128
        %3341 = vxpose.xlu0.b32.cont [7/16] 0.0, 128
        %3342 = vxpose.xlu0.b32.cont [8/16] 0.0, 128
        %3343 = vxpose.xlu0.b32.cont [9/16] 0.0, 128
        %3344 = vxpose.xlu0.b32.cont [10/16] 0.0, 128
        %3345 = vxpose.xlu0.b32.cont [11/16] 0.0, 128
        %3346 = vxpose.xlu0.b32.cont [12/16] 0.0, 128
        %3347 = vxpose.xlu0.b32.cont [13/16] 0.0, 128
        %3348 = vxpose.xlu0.b32.cont [14/16] 0.0, 128
        %3349 = vxpose.xlu0.b32.cont [15/16] 0.0, 128
        %3350 = vxpose.xlu0.b32.end [16/16] 0.0, 128
        %v3351 = vpop.trf.xlu0
        %v3352 = vpop.trf.xlu0
        %v3353 = vpop.trf.xlu0
        %v3354 = vpop.trf.xlu0
        %v3355 = vpop.trf.xlu0
        %v3356 = vpop.trf.xlu0
        %v3357 = vpop.trf.xlu0
        %v3358 = vpop.trf.xlu0
        %v3359 = vpop.trf.xlu0
        %v3360 = vpop.trf.xlu0
        %v3361 = vpop.trf.xlu0
        %v3362 = vpop.trf.xlu0
        %v3363 = vpop.trf.xlu0
        %v3364 = vpop.trf.xlu0
        %v3365 = vpop.trf.xlu0
        %v3366 = vpop.trf.xlu0
        %3369 = vrot.lane.b32.xlu0 %v3351, 16
        %v3370 = vpop.permute.xlu0 %3369
        %3371 = vrot.lane.b32.xlu0 %v3352, 16
        %v3372 = vpop.permute.xlu0 %3371
        %v3375 = vsel %vm1234, %v3311, %v3370
        %v3376 = vsel %vm1234, %v3312, %v3372
        %3377 = vxpose.xlu0.b32.start [1/16] %v3122, 128
        %3378 = vxpose.xlu0.b32.cont [2/16] %v3128, 128
        %3379 = vxpose.xlu0.b32.cont [3/16] 0.0, 128
        %3380 = vxpose.xlu0.b32.cont [4/16] 0.0, 128
        %3381 = vxpose.xlu0.b32.cont [5/16] 0.0, 128
        %3382 = vxpose.xlu0.b32.cont [6/16] 0.0, 128
        %3383 = vxpose.xlu0.b32.cont [7/16] 0.0, 128
        %3384 = vxpose.xlu0.b32.cont [8/16] 0.0, 128
        %3385 = vxpose.xlu0.b32.cont [9/16] 0.0, 128
        %3386 = vxpose.xlu0.b32.cont [10/16] 0.0, 128
        %3387 = vxpose.xlu0.b32.cont [11/16] 0.0, 128
        %3388 = vxpose.xlu0.b32.cont [12/16] 0.0, 128
        %3389 = vxpose.xlu0.b32.cont [13/16] 0.0, 128
        %3390 = vxpose.xlu0.b32.cont [14/16] 0.0, 128
        %3391 = vxpose.xlu0.b32.cont [15/16] 0.0, 128
        %3392 = vxpose.xlu0.b32.end [16/16] 0.0, 128
        %v3393 = vpop.trf.xlu0
        %v3394 = vpop.trf.xlu0
        %v3395 = vpop.trf.xlu0
        %v3396 = vpop.trf.xlu0
        %v3397 = vpop.trf.xlu0
        %v3398 = vpop.trf.xlu0
        %v3399 = vpop.trf.xlu0
        %v3400 = vpop.trf.xlu0
        %v3401 = vpop.trf.xlu0
        %v3402 = vpop.trf.xlu0
        %v3403 = vpop.trf.xlu0
        %v3404 = vpop.trf.xlu0
        %v3405 = vpop.trf.xlu0
        %v3406 = vpop.trf.xlu0
        %v3407 = vpop.trf.xlu0
        %v3408 = vpop.trf.xlu0
        %3411 = vrot.lane.b32.xlu0 %v3122, 112
        %v3412 = vpop.permute.xlu0 %3411
        %3413 = vrot.lane.b32.xlu0 %v3128, 112
        %v3414 = vpop.permute.xlu0 %3413
        %3417 = vxpose.xlu0.b32.start [1/16] %v3412, 128
        %3418 = vxpose.xlu0.b32.cont [2/16] %v3414, 128
        %3419 = vxpose.xlu0.b32.cont [3/16] 0.0, 128
        %3420 = vxpose.xlu0.b32.cont [4/16] 0.0, 128
        %3421 = vxpose.xlu0.b32.cont [5/16] 0.0, 128
        %3422 = vxpose.xlu0.b32.cont [6/16] 0.0, 128
        %3423 = vxpose.xlu0.b32.cont [7/16] 0.0, 128
        %3424 = vxpose.xlu0.b32.cont [8/16] 0.0, 128
        %3425 = vxpose.xlu0.b32.cont [9/16] 0.0, 128
        %3426 = vxpose.xlu0.b32.cont [10/16] 0.0, 128
        %3427 = vxpose.xlu0.b32.cont [11/16] 0.0, 128
        %3428 = vxpose.xlu0.b32.cont [12/16] 0.0, 128
        %3429 = vxpose.xlu0.b32.cont [13/16] 0.0, 128
        %3430 = vxpose.xlu0.b32.cont [14/16] 0.0, 128
        %3431 = vxpose.xlu0.b32.cont [15/16] 0.0, 128
        %3432 = vxpose.xlu0.b32.end [16/16] 0.0, 128
        %v3433 = vpop.trf.xlu0
        %v3434 = vpop.trf.xlu0
        %v3435 = vpop.trf.xlu0
        %v3436 = vpop.trf.xlu0
        %v3437 = vpop.trf.xlu0
        %v3438 = vpop.trf.xlu0
        %v3439 = vpop.trf.xlu0
        %v3440 = vpop.trf.xlu0
        %v3441 = vpop.trf.xlu0
        %v3442 = vpop.trf.xlu0
        %v3443 = vpop.trf.xlu0
        %v3444 = vpop.trf.xlu0
        %v3445 = vpop.trf.xlu0
        %v3446 = vpop.trf.xlu0
        %v3447 = vpop.trf.xlu0
        %v3448 = vpop.trf.xlu0
        %3451 = vrot.lane.b32.xlu0 %v3433, 16
        %v3452 = vpop.permute.xlu0 %3451
        %3453 = vrot.lane.b32.xlu0 %v3434, 16
        %v3454 = vpop.permute.xlu0 %3453
        %v3457 = vsel %vm1234, %v3393, %v3452
        %v3458 = vsel %vm1234, %v3394, %v3454
        %v3460 = vsel %vm343, %v3211, 0
        %v3463 = vsel %vm343, %v3212, 0
        %v3466 = vsel %vm343, %v3293, 0
        %v3469 = vsel %vm343, %v3294, 0
        %v3472 = vsel %vm343, %v3375, 0
        %v3475 = vsel %vm343, %v3376, 0
        %v3478 = vsel %vm343, %v3457, 0
        %v3481 = vsel %vm343, %v3458, 0
        %3483 = vmatprep.subr.mxu0 0.0
        %v3484 = vand.u32 %v2317, 4294901760
        %3485 = vmatpush1.msra.mxu0 %v3484
        %3486 = vmatprep.subr.mxu0 0.0
        %v3487 = vand.u32 %v2318, 4294901760
        %3488 = vmatpush1.msra.mxu0 %v3487
        %3489 = vmatprep.subr.mxu0 0.0
        %v3490 = vand.u32 %v2319, 4294901760
        %3491 = vmatpush1.msra.mxu0 %v3490
        %3492 = vmatprep.subr.mxu0 0.0
        %v3493 = vand.u32 %v2320, 4294901760
        %3494 = vmatpush1.msra.mxu0 %v3493
        %3495 = vmatprep.subr.mxu0 0.0
        %3496 = vmatpush1.msra.mxu0 0.0
        %3497 = vmatprep.subr.mxu0 0.0
        %3498 = vmatpush1.msra.mxu0 0.0
        %3499 = vmatprep.subr.mxu0 0.0
        %3500 = vmatpush1.msra.mxu0 0.0
        %3501 = vmatprep.subr.mxu0 0.0
        %3502 = vmatpush1.msra.mxu0 0.0
        %3503 = vmatprep.subr.mxu0 0.0
        %3504 = vmatpush1.msra.mxu0 0.0
        %3505 = vmatprep.subr.mxu0 0.0
        %3506 = vmatpush1.msra.mxu0 0.0
        %3507 = vmatprep.subr.mxu0 0.0
        %3508 = vmatpush1.msra.mxu0 0.0
        %3509 = vmatprep.subr.mxu0 0.0
        %3510 = vmatpush1.msra.mxu0 0.0
        %3511 = vmatprep.subr.mxu0 0.0
        %3512 = vmatpush1.msra.mxu0 0.0
        %3513 = vmatprep.subr.mxu0 0.0
        %3514 = vmatpush1.msra.mxu0 0.0
        %3515 = vmatprep.subr.mxu0 0.0
        %3516 = vmatpush1.msra.mxu0 0.0
        %3517 = vmatprep.subr.mxu0 0.0
        %3518 = vmatpush1.msra.mxu0 0.0
        %3519 = vmatprep.subr.mxu0 0.0
        %3520 = vmatpush1.msra.mxu0 0.0
        %3521 = vmatprep.subr.mxu0 0.0
        %3522 = vmatpush1.msra.mxu0 0.0
        %3523 = vmatprep.subr.mxu0 0.0
        %3524 = vmatpush1.msra.mxu0 0.0
        %3525 = vmatprep.subr.mxu0 0.0
        %3526 = vmatpush1.msra.mxu0 0.0
        %3527 = vmatprep.subr.mxu0 0.0
        %3528 = vmatpush1.msra.mxu0 0.0
        %3529 = vmatprep.subr.mxu0 0.0
        %3530 = vmatpush1.msra.mxu0 0.0
        %3531 = vmatprep.subr.mxu0 0.0
        %3532 = vmatpush1.msra.mxu0 0.0
        %3533 = vmatprep.subr.mxu0 0.0
        %3534 = vmatpush1.msra.mxu0 0.0
        %3535 = vmatprep.subr.mxu0 0.0
        %3536 = vmatpush1.msra.mxu0 0.0
        %3537 = vmatprep.subr.mxu0 0.0
        %3538 = vmatpush1.msra.mxu0 0.0
        %3539 = vmatprep.subr.mxu0 0.0
        %3540 = vmatpush1.msra.mxu0 0.0
        %3541 = vmatprep.subr.mxu0 0.0
        %3542 = vmatpush1.msra.mxu0 0.0
        %3543 = vmatprep.subr.mxu0 0.0
        %3544 = vmatpush1.msra.mxu0 0.0
        %3545 = vmatprep.subr.mxu0 0.0
        %3546 = vmatpush1.msra.mxu0 0.0
        %3547 = vmatprep.subr.mxu0 0.0
        %3548 = vmatpush1.msra.mxu0 0.0
        %3549 = vmatprep.subr.mxu0 0.0
        %3550 = vmatpush1.msra.mxu0 0.0
        %3551 = vmatprep.mubr.f32.mxu0 0.0
        %v3552 = vand.u32 %v3460, 4294901760
        %v3553 = vsub.f32 %v3460, %v3552
        %v3554 = vand.u32 %v3553, 4294901760
        %v3555 = vsub.f32 %v3553, %v3554
        %v3556 = vand.u32 %v3555, 4294901760
        %3557 = vmatmul.mubr.f32.gmra.mrb[0].mxu0 %v3556
        %v3558 = vpop.f32.mrb[0].mxu0
        %v3559 = vadd.f32 0.0, %v3558
        %v3560 = vpop.f32.mrb[0].mxu0
        %3561 = vmatprep.mubr.f32.mxu0 0.0
        %v3562 = vand.u32 %v3463, 4294901760
        %v3563 = vsub.f32 %v3463, %v3562
        %v3564 = vand.u32 %v3563, 4294901760
        %v3565 = vsub.f32 %v3563, %v3564
        %v3566 = vand.u32 %v3565, 4294901760
        %3567 = vmatmul.mubr.f32.gmra.mrb[0].mxu0 %v3566
        %v3568 = vpop.f32.mrb[0].mxu0
        %v3569 = vadd.f32 0.0, %v3568
        %v3570 = vpop.f32.mrb[0].mxu0
        %3571 = vmatprep.mubr.f32.mxu0 0.0
        %v3572 = vand.u32 %v3466, 4294901760
        %v3573 = vsub.f32 %v3466, %v3572
        %v3574 = vand.u32 %v3573, 4294901760
        %v3575 = vsub.f32 %v3573, %v3574
        %v3576 = vand.u32 %v3575, 4294901760
        %3577 = vmatmul.mubr.f32.gmra.mrb[0].mxu0 %v3576
        %v3578 = vpop.f32.mrb[0].mxu0
        %v3579 = vadd.f32 0.0, %v3578
        %v3580 = vpop.f32.mrb[0].mxu0
        %3581 = vmatprep.mubr.f32.mxu0 0.0
        %v3582 = vand.u32 %v3469, 4294901760
        %v3583 = vsub.f32 %v3469, %v3582
        %v3584 = vand.u32 %v3583, 4294901760
        %v3585 = vsub.f32 %v3583, %v3584
        %v3586 = vand.u32 %v3585, 4294901760
        %3587 = vmatmul.mubr.f32.gmra.mrb[0].mxu0 %v3586
        %v3588 = vpop.f32.mrb[0].mxu0
        %v3589 = vadd.f32 0.0, %v3588
        %v3590 = vpop.f32.mrb[0].mxu0
        %3591 = vmatprep.mubr.f32.mxu0 0.0
        %v3592 = vand.u32 %v3472, 4294901760
        %v3593 = vsub.f32 %v3472, %v3592
        %v3594 = vand.u32 %v3593, 4294901760
        %v3595 = vsub.f32 %v3593, %v3594
        %v3596 = vand.u32 %v3595, 4294901760
        %3597 = vmatmul.mubr.f32.gmra.mrb[0].mxu0 %v3596
        %v3598 = vpop.f32.mrb[0].mxu0
        %v3599 = vadd.f32 0.0, %v3598
        %v3600 = vpop.f32.mrb[0].mxu0
        %3601 = vmatprep.mubr.f32.mxu0 0.0
        %v3602 = vand.u32 %v3475, 4294901760
        %v3603 = vsub.f32 %v3475, %v3602
        %v3604 = vand.u32 %v3603, 4294901760
        %v3605 = vsub.f32 %v3603, %v3604
        %v3606 = vand.u32 %v3605, 4294901760
        %3607 = vmatmul.mubr.f32.gmra.mrb[0].mxu0 %v3606
        %v3608 = vpop.f32.mrb[0].mxu0
        %v3609 = vadd.f32 0.0, %v3608
        %v3610 = vpop.f32.mrb[0].mxu0
        %3611 = vmatprep.mubr.f32.mxu0 0.0
        %v3612 = vand.u32 %v3478, 4294901760
        %v3613 = vsub.f32 %v3478, %v3612
        %v3614 = vand.u32 %v3613, 4294901760
        %v3615 = vsub.f32 %v3613, %v3614
        %v3616 = vand.u32 %v3615, 4294901760
        %3617 = vmatmul.mubr.f32.gmra.mrb[0].mxu0 %v3616
        %v3618 = vpop.f32.mrb[0].mxu0
        %v3619 = vadd.f32 0.0, %v3618
        %v3620 = vpop.f32.mrb[0].mxu0
        %3621 = vmatprep.mubr.f32.mxu0 0.0
        %v3622 = vand.u32 %v3481, 4294901760
        %v3623 = vsub.f32 %v3481, %v3622
        %v3624 = vand.u32 %v3623, 4294901760
        %v3625 = vsub.f32 %v3623, %v3624
        %v3626 = vand.u32 %v3625, 4294901760
        %3627 = vmatmul.mubr.f32.gmra.mrb[0].mxu0 %v3626
        %v3628 = vpop.f32.mrb[0].mxu0
        %v3629 = vadd.f32 0.0, %v3628
        %v3630 = vpop.f32.mrb[0].mxu0
        %3631 = vdwg.mxu0
        %3632 = vmatprep.subr.mxu0 0.0
        %v3633 = vand.u32 %v2317, 4294901760
        %v3634 = vsub.f32 %v2317, %v3633
        %v3635 = vand.u32 %v3634, 4294901760
        %v3636 = vsub.f32 %v3634, %v3635
        %v3637 = vand.u32 %v3636, 4294901760
        %3638 = vmatpush1.msra.mxu0 %v3637
        %3639 = vmatprep.subr.mxu0 0.0
        %v3640 = vand.u32 %v2318, 4294901760
        %v3641 = vsub.f32 %v2318, %v3640
        %v3642 = vand.u32 %v3641, 4294901760
        %v3643 = vsub.f32 %v3641, %v3642
        %v3644 = vand.u32 %v3643, 4294901760
        %3645 = vmatpush1.msra.mxu0 %v3644
        %3646 = vmatprep.subr.mxu0 0.0
        %v3647 = vand.u32 %v2319, 4294901760
        %v3648 = vsub.f32 %v2319, %v3647
        %v3649 = vand.u32 %v3648, 4294901760
        %v3650 = vsub.f32 %v3648, %v3649
        %v3651 = vand.u32 %v3650, 4294901760
        %3652 = vmatpush1.msra.mxu0 %v3651
        %3653 = vmatprep.subr.mxu0 0.0
        %v3654 = vand.u32 %v2320, 4294901760
        %v3655 = vsub.f32 %v2320, %v3654
        %v3656 = vand.u32 %v3655, 4294901760
        %v3657 = vsub.f32 %v3655, %v3656
        %v3658 = vand.u32 %v3657, 4294901760
        %3659 = vmatpush1.msra.mxu0 %v3658
        %3660 = vmatprep.subr.mxu0 0.0
        %3661 = vmatpush1.msra.mxu0 0.0
        %3662 = vmatprep.subr.mxu0 0.0
        %3663 = vmatpush1.msra.mxu0 0.0
        %3664 = vmatprep.subr.mxu0 0.0
        %3665 = vmatpush1.msra.mxu0 0.0
        %3666 = vmatprep.subr.mxu0 0.0
        %3667 = vmatpush1.msra.mxu0 0.0
        %3668 = vmatprep.subr.mxu0 0.0
        %3669 = vmatpush1.msra.mxu0 0.0
        %3670 = vmatprep.subr.mxu0 0.0
        %3671 = vmatpush1.msra.mxu0 0.0
        %3672 = vmatprep.subr.mxu0 0.0
        %3673 = vmatpush1.msra.mxu0 0.0
        %3674 = vmatprep.subr.mxu0 0.0
        %3675 = vmatpush1.msra.mxu0 0.0
        %3676 = vmatprep.subr.mxu0 0.0
        %3677 = vmatpush1.msra.mxu0 0.0
        %3678 = vmatprep.subr.mxu0 0.0
        %3679 = vmatpush1.msra.mxu0 0.0
        %3680 = vmatprep.subr.mxu0 0.0
        %3681 = vmatpush1.msra.mxu0 0.0
        %3682 = vmatprep.subr.mxu0 0.0
        %3683 = vmatpush1.msra.mxu0 0.0
        %3684 = vmatprep.subr.mxu0 0.0
        %3685 = vmatpush1.msra.mxu0 0.0
        %3686 = vmatprep.subr.mxu0 0.0
        %3687 = vmatpush1.msra.mxu0 0.0
        %3688 = vmatprep.subr.mxu0 0.0
        %3689 = vmatpush1.msra.mxu0 0.0
        %3690 = vmatprep.subr.mxu0 0.0
        %3691 = vmatpush1.msra.mxu0 0.0
        %3692 = vmatprep.subr.mxu0 0.0
        %3693 = vmatpush1.msra.mxu0 0.0
        %3694 = vmatprep.subr.mxu0 0.0
        %3695 = vmatpush1.msra.mxu0 0.0
        %3696 = vmatprep.subr.mxu0 0.0
        %3697 = vmatpush1.msra.mxu0 0.0
        %3698 = vmatprep.subr.mxu0 0.0
        %3699 = vmatpush1.msra.mxu0 0.0
        %3700 = vmatprep.subr.mxu0 0.0
        %3701 = vmatpush1.msra.mxu0 0.0
        %3702 = vmatprep.subr.mxu0 0.0
        %3703 = vmatpush1.msra.mxu0 0.0
        %3704 = vmatprep.subr.mxu0 0.0
        %3705 = vmatpush1.msra.mxu0 0.0
        %3706 = vmatprep.subr.mxu0 0.0
        %3707 = vmatpush1.msra.mxu0 0.0
        %3708 = vmatprep.subr.mxu0 0.0
        %3709 = vmatpush1.msra.mxu0 0.0
        %3710 = vmatprep.subr.mxu0 0.0
        %3711 = vmatpush1.msra.mxu0 0.0
        %3712 = vmatprep.subr.mxu0 0.0
        %3713 = vmatpush1.msra.mxu0 0.0
        %3714 = vmatprep.subr.mxu0 0.0
        %3715 = vmatpush1.msra.mxu0 0.0
        %3716 = vmatprep.mubr.f32.mxu0 0.0
        %v3717 = vand.u32 %v3460, 4294901760
        %3718 = vmatmul.mubr.f32.gmra.mrb[0].mxu0 %v3717
        %v3719 = vpop.f32.mrb[0].mxu0
        %v3720 = vadd.f32 %v3559, %v3719
        %v3721 = vpop.f32.mrb[0].mxu0
        %3722 = vmatprep.mubr.f32.mxu0 0.0
        %v3723 = vand.u32 %v3463, 4294901760
        %3724 = vmatmul.mubr.f32.gmra.mrb[0].mxu0 %v3723
        %v3725 = vpop.f32.mrb[0].mxu0
        %v3726 = vadd.f32 %v3569, %v3725
        %v3727 = vpop.f32.mrb[0].mxu0
        %3728 = vmatprep.mubr.f32.mxu0 0.0
        %v3729 = vand.u32 %v3466, 4294901760
        %3730 = vmatmul.mubr.f32.gmra.mrb[0].mxu0 %v3729
        %v3731 = vpop.f32.mrb[0].mxu0
        %v3732 = vadd.f32 %v3579, %v3731
        %v3733 = vpop.f32.mrb[0].mxu0
        %3734 = vmatprep.mubr.f32.mxu0 0.0
        %v3735 = vand.u32 %v3469, 4294901760
        %3736 = vmatmul.mubr.f32.gmra.mrb[0].mxu0 %v3735
        %v3737 = vpop.f32.mrb[0].mxu0
        %v3738 = vadd.f32 %v3589, %v3737
        %v3739 = vpop.f32.mrb[0].mxu0
        %3740 = vmatprep.mubr.f32.mxu0 0.0
        %v3741 = vand.u32 %v3472, 4294901760
        %3742 = vmatmul.mubr.f32.gmra.mrb[0].mxu0 %v3741
        %v3743 = vpop.f32.mrb[0].mxu0
        %v3744 = vadd.f32 %v3599, %v3743
        %v3745 = vpop.f32.mrb[0].mxu0
        %3746 = vmatprep.mubr.f32.mxu0 0.0
        %v3747 = vand.u32 %v3475, 4294901760
        %3748 = vmatmul.mubr.f32.gmra.mrb[0].mxu0 %v3747
        %v3749 = vpop.f32.mrb[0].mxu0
        %v3750 = vadd.f32 %v3609, %v3749
        %v3751 = vpop.f32.mrb[0].mxu0
        %3752 = vmatprep.mubr.f32.mxu0 0.0
        %v3753 = vand.u32 %v3478, 4294901760
        %3754 = vmatmul.mubr.f32.gmra.mrb[0].mxu0 %v3753
        %v3755 = vpop.f32.mrb[0].mxu0
        %v3756 = vadd.f32 %v3619, %v3755
        %v3757 = vpop.f32.mrb[0].mxu0
        %3758 = vmatprep.mubr.f32.mxu0 0.0
        %v3759 = vand.u32 %v3481, 4294901760
        %3760 = vmatmul.mubr.f32.gmra.mrb[0].mxu0 %v3759
        %v3761 = vpop.f32.mrb[0].mxu0
        %v3762 = vadd.f32 %v3629, %v3761
        %v3763 = vpop.f32.mrb[0].mxu0
        %3764 = vdwg.mxu0
        %3765 = vmatprep.subr.mxu0 0.0
        %v3766 = vand.u32 %v2317, 4294901760
        %v3767 = vsub.f32 %v2317, %v3766
        %3768 = vmatpush1.msra.mxu0 %v3767
        %3769 = vmatprep.subr.mxu0 0.0
        %v3770 = vand.u32 %v2318, 4294901760
        %v3771 = vsub.f32 %v2318, %v3770
        %3772 = vmatpush1.msra.mxu0 %v3771
        %3773 = vmatprep.subr.mxu0 0.0
        %v3774 = vand.u32 %v2319, 4294901760
        %v3775 = vsub.f32 %v2319, %v3774
        %3776 = vmatpush1.msra.mxu0 %v3775
        %3777 = vmatprep.subr.mxu0 0.0
        %v3778 = vand.u32 %v2320, 4294901760
        %v3779 = vsub.f32 %v2320, %v3778
        %3780 = vmatpush1.msra.mxu0 %v3779
        %3781 = vmatprep.subr.mxu0 0.0
        %3782 = vmatpush1.msra.mxu0 0.0
        %3783 = vmatprep.subr.mxu0 0.0
        %3784 = vmatpush1.msra.mxu0 0.0
        %3785 = vmatprep.subr.mxu0 0.0
        %3786 = vmatpush1.msra.mxu0 0.0
        %3787 = vmatprep.subr.mxu0 0.0
        %3788 = vmatpush1.msra.mxu0 0.0
        %3789 = vmatprep.subr.mxu0 0.0
        %3790 = vmatpush1.msra.mxu0 0.0
        %3791 = vmatprep.subr.mxu0 0.0
        %3792 = vmatpush1.msra.mxu0 0.0
        %3793 = vmatprep.subr.mxu0 0.0
        %3794 = vmatpush1.msra.mxu0 0.0
        %3795 = vmatprep.subr.mxu0 0.0
        %3796 = vmatpush1.msra.mxu0 0.0
        %3797 = vmatprep.subr.mxu0 0.0
        %3798 = vmatpush1.msra.mxu0 0.0
        %3799 = vmatprep.subr.mxu0 0.0
        %3800 = vmatpush1.msra.mxu0 0.0
        %3801 = vmatprep.subr.mxu0 0.0
        %3802 = vmatpush1.msra.mxu0 0.0
        %3803 = vmatprep.subr.mxu0 0.0
        %3804 = vmatpush1.msra.mxu0 0.0
        %3805 = vmatprep.subr.mxu0 0.0
        %3806 = vmatpush1.msra.mxu0 0.0
        %3807 = vmatprep.subr.mxu0 0.0
        %3808 = vmatpush1.msra.mxu0 0.0
        %3809 = vmatprep.subr.mxu0 0.0
        %3810 = vmatpush1.msra.mxu0 0.0
        %3811 = vmatprep.subr.mxu0 0.0
        %3812 = vmatpush1.msra.mxu0 0.0
        %3813 = vmatprep.subr.mxu0 0.0
        %3814 = vmatpush1.msra.mxu0 0.0
        %3815 = vmatprep.subr.mxu0 0.0
        %3816 = vmatpush1.msra.mxu0 0.0
        %3817 = vmatprep.subr.mxu0 0.0
        %3818 = vmatpush1.msra.mxu0 0.0
        %3819 = vmatprep.subr.mxu0 0.0
        %3820 = vmatpush1.msra.mxu0 0.0
        %3821 = vmatprep.subr.mxu0 0.0
        %3822 = vmatpush1.msra.mxu0 0.0
        %3823 = vmatprep.subr.mxu0 0.0
        %3824 = vmatpush1.msra.mxu0 0.0
        %3825 = vmatprep.subr.mxu0 0.0
        %3826 = vmatpush1.msra.mxu0 0.0
        %3827 = vmatprep.subr.mxu0 0.0
        %3828 = vmatpush1.msra.mxu0 0.0
        %3829 = vmatprep.subr.mxu0 0.0
        %3830 = vmatpush1.msra.mxu0 0.0
        %3831 = vmatprep.subr.mxu0 0.0
        %3832 = vmatpush1.msra.mxu0 0.0
        %3833 = vmatprep.subr.mxu0 0.0
        %3834 = vmatpush1.msra.mxu0 0.0
        %3835 = vmatprep.subr.mxu0 0.0
        %3836 = vmatpush1.msra.mxu0 0.0
        %3837 = vmatprep.mubr.f32.mxu0 0.0
        %v3838 = vand.u32 %v3460, 4294901760
        %v3839 = vsub.f32 %v3460, %v3838
        %3840 = vmatmul.mubr.f32.gmra.mrb[0].mxu0 %v3839
        %v3841 = vpop.f32.mrb[0].mxu0
        %v3842 = vadd.f32 %v3720, %v3841
        %v3843 = vpop.f32.mrb[0].mxu0
        %3844 = vmatprep.mubr.f32.mxu0 0.0
        %v3845 = vand.u32 %v3463, 4294901760
        %v3846 = vsub.f32 %v3463, %v3845
        %3847 = vmatmul.mubr.f32.gmra.mrb[0].mxu0 %v3846
        %v3848 = vpop.f32.mrb[0].mxu0
        %v3849 = vadd.f32 %v3726, %v3848
        %v3850 = vpop.f32.mrb[0].mxu0
        %3851 = vmatprep.mubr.f32.mxu0 0.0
        %v3852 = vand.u32 %v3466, 4294901760
        %v3853 = vsub.f32 %v3466, %v3852
        %3854 = vmatmul.mubr.f32.gmra.mrb[0].mxu0 %v3853
        %v3855 = vpop.f32.mrb[0].mxu0
        %v3856 = vadd.f32 %v3732, %v3855
        %v3857 = vpop.f32.mrb[0].mxu0
        %3858 = vmatprep.mubr.f32.mxu0 0.0
        %v3859 = vand.u32 %v3469, 4294901760
        %v3860 = vsub.f32 %v3469, %v3859
        %3861 = vmatmul.mubr.f32.gmra.mrb[0].mxu0 %v3860
        %v3862 = vpop.f32.mrb[0].mxu0
        %v3863 = vadd.f32 %v3738, %v3862
        %v3864 = vpop.f32.mrb[0].mxu0
        %3865 = vmatprep.mubr.f32.mxu0 0.0
        %v3866 = vand.u32 %v3472, 4294901760
        %v3867 = vsub.f32 %v3472, %v3866
        %3868 = vmatmul.mubr.f32.gmra.mrb[0].mxu0 %v3867
        %v3869 = vpop.f32.mrb[0].mxu0
        %v3870 = vadd.f32 %v3744, %v3869
        %v3871 = vpop.f32.mrb[0].mxu0
        %3872 = vmatprep.mubr.f32.mxu0 0.0
        %v3873 = vand.u32 %v3475, 4294901760
        %v3874 = vsub.f32 %v3475, %v3873
        %3875 = vmatmul.mubr.f32.gmra.mrb[0].mxu0 %v3874
        %v3876 = vpop.f32.mrb[0].mxu0
        %v3877 = vadd.f32 %v3750, %v3876
        %v3878 = vpop.f32.mrb[0].mxu0
        %3879 = vmatprep.mubr.f32.mxu0 0.0
        %v3880 = vand.u32 %v3478, 4294901760
        %v3881 = vsub.f32 %v3478, %v3880
        %3882 = vmatmul.mubr.f32.gmra.mrb[0].mxu0 %v3881
        %v3883 = vpop.f32.mrb[0].mxu0
        %v3884 = vadd.f32 %v3756, %v3883
        %v3885 = vpop.f32.mrb[0].mxu0
        %3886 = vmatprep.mubr.f32.mxu0 0.0
        %v3887 = vand.u32 %v3481, 4294901760
        %v3888 = vsub.f32 %v3481, %v3887
        %3889 = vmatmul.mubr.f32.gmra.mrb[0].mxu0 %v3888
        %v3890 = vpop.f32.mrb[0].mxu0
        %v3891 = vadd.f32 %v3762, %v3890
        %v3892 = vpop.f32.mrb[0].mxu0
        %3893 = vdwg.mxu0
        %3894 = vmatprep.subr.mxu0 0.0
        %v3895 = vand.u32 %v2317, 4294901760
        %3896 = vmatpush1.msra.mxu0 %v3895
        %3897 = vmatprep.subr.mxu0 0.0
        %v3898 = vand.u32 %v2318, 4294901760
        %3899 = vmatpush1.msra.mxu0 %v3898
        %3900 = vmatprep.subr.mxu0 0.0
        %v3901 = vand.u32 %v2319, 4294901760
        %3902 = vmatpush1.msra.mxu0 %v3901
        %3903 = vmatprep.subr.mxu0 0.0
        %v3904 = vand.u32 %v2320, 4294901760
        %3905 = vmatpush1.msra.mxu0 %v3904
        %3906 = vmatprep.subr.mxu0 0.0
        %3907 = vmatpush1.msra.mxu0 0.0
        %3908 = vmatprep.subr.mxu0 0.0
        %3909 = vmatpush1.msra.mxu0 0.0
        %3910 = vmatprep.subr.mxu0 0.0
        %3911 = vmatpush1.msra.mxu0 0.0
        %3912 = vmatprep.subr.mxu0 0.0
        %3913 = vmatpush1.msra.mxu0 0.0
        %3914 = vmatprep.subr.mxu0 0.0
        %3915 = vmatpush1.msra.mxu0 0.0
        %3916 = vmatprep.subr.mxu0 0.0
        %3917 = vmatpush1.msra.mxu0 0.0
        %3918 = vmatprep.subr.mxu0 0.0
        %3919 = vmatpush1.msra.mxu0 0.0
        %3920 = vmatprep.subr.mxu0 0.0
        %3921 = vmatpush1.msra.mxu0 0.0
        %3922 = vmatprep.subr.mxu0 0.0
        %3923 = vmatpush1.msra.mxu0 0.0
        %3924 = vmatprep.subr.mxu0 0.0
        %3925 = vmatpush1.msra.mxu0 0.0
        %3926 = vmatprep.subr.mxu0 0.0
        %3927 = vmatpush1.msra.mxu0 0.0
        %3928 = vmatprep.subr.mxu0 0.0
        %3929 = vmatpush1.msra.mxu0 0.0
        %3930 = vmatprep.subr.mxu0 0.0
        %3931 = vmatpush1.msra.mxu0 0.0
        %3932 = vmatprep.subr.mxu0 0.0
        %3933 = vmatpush1.msra.mxu0 0.0
        %3934 = vmatprep.subr.mxu0 0.0
        %3935 = vmatpush1.msra.mxu0 0.0
        %3936 = vmatprep.subr.mxu0 0.0
        %3937 = vmatpush1.msra.mxu0 0.0
        %3938 = vmatprep.subr.mxu0 0.0
        %3939 = vmatpush1.msra.mxu0 0.0
        %3940 = vmatprep.subr.mxu0 0.0
        %3941 = vmatpush1.msra.mxu0 0.0
        %3942 = vmatprep.subr.mxu0 0.0
        %3943 = vmatpush1.msra.mxu0 0.0
        %3944 = vmatprep.subr.mxu0 0.0
        %3945 = vmatpush1.msra.mxu0 0.0
        %3946 = vmatprep.subr.mxu0 0.0
        %3947 = vmatpush1.msra.mxu0 0.0
        %3948 = vmatprep.subr.mxu0 0.0
        %3949 = vmatpush1.msra.mxu0 0.0
        %3950 = vmatprep.subr.mxu0 0.0
        %3951 = vmatpush1.msra.mxu0 0.0
        %3952 = vmatprep.subr.mxu0 0.0
        %3953 = vmatpush1.msra.mxu0 0.0
        %3954 = vmatprep.subr.mxu0 0.0
        %3955 = vmatpush1.msra.mxu0 0.0
        %3956 = vmatprep.subr.mxu0 0.0
        %3957 = vmatpush1.msra.mxu0 0.0
        %3958 = vmatprep.subr.mxu0 0.0
        %3959 = vmatpush1.msra.mxu0 0.0
        %3960 = vmatprep.subr.mxu0 0.0
        %3961 = vmatpush1.msra.mxu0 0.0
        %3962 = vmatprep.mubr.f32.mxu0 0.0
        %v3963 = vand.u32 %v3460, 4294901760
        %v3964 = vsub.f32 %v3460, %v3963
        %v3965 = vand.u32 %v3964, 4294901760
        %3966 = vmatmul.mubr.f32.gmra.mrb[0].mxu0 %v3965
        %v3967 = vpop.f32.mrb[0].mxu0
        %v3968 = vadd.f32 %v3842, %v3967
        %v3969 = vpop.f32.mrb[0].mxu0
        %3970 = vmatprep.mubr.f32.mxu0 0.0
        %v3971 = vand.u32 %v3463, 4294901760
        %v3972 = vsub.f32 %v3463, %v3971
        %v3973 = vand.u32 %v3972, 4294901760
        %3974 = vmatmul.mubr.f32.gmra.mrb[0].mxu0 %v3973
        %v3975 = vpop.f32.mrb[0].mxu0
        %v3976 = vadd.f32 %v3849, %v3975
        %v3977 = vpop.f32.mrb[0].mxu0
        %3978 = vmatprep.mubr.f32.mxu0 0.0
        %v3979 = vand.u32 %v3466, 4294901760
        %v3980 = vsub.f32 %v3466, %v3979
        %v3981 = vand.u32 %v3980, 4294901760
        %3982 = vmatmul.mubr.f32.gmra.mrb[0].mxu0 %v3981
        %v3983 = vpop.f32.mrb[0].mxu0
        %v3984 = vadd.f32 %v3856, %v3983
        %v3985 = vpop.f32.mrb[0].mxu0
        %3986 = vmatprep.mubr.f32.mxu0 0.0
        %v3987 = vand.u32 %v3469, 4294901760
        %v3988 = vsub.f32 %v3469, %v3987
        %v3989 = vand.u32 %v3988, 4294901760
        %3990 = vmatmul.mubr.f32.gmra.mrb[0].mxu0 %v3989
        %v3991 = vpop.f32.mrb[0].mxu0
        %v3992 = vadd.f32 %v3863, %v3991
        %v3993 = vpop.f32.mrb[0].mxu0
        %3994 = vmatprep.mubr.f32.mxu0 0.0
        %v3995 = vand.u32 %v3472, 4294901760
        %v3996 = vsub.f32 %v3472, %v3995
        %v3997 = vand.u32 %v3996, 4294901760
        %3998 = vmatmul.mubr.f32.gmra.mrb[0].mxu0 %v3997
        %v3999 = vpop.f32.mrb[0].mxu0
        %v4000 = vadd.f32 %v3870, %v3999
        %v4001 = vpop.f32.mrb[0].mxu0
        %4002 = vmatprep.mubr.f32.mxu0 0.0
        %v4003 = vand.u32 %v3475, 4294901760
        %v4004 = vsub.f32 %v3475, %v4003
        %v4005 = vand.u32 %v4004, 4294901760
        %4006 = vmatmul.mubr.f32.gmra.mrb[0].mxu0 %v4005
        %v4007 = vpop.f32.mrb[0].mxu0
        %v4008 = vadd.f32 %v3877, %v4007
        %v4009 = vpop.f32.mrb[0].mxu0
        %4010 = vmatprep.mubr.f32.mxu0 0.0
        %v4011 = vand.u32 %v3478, 4294901760
        %v4012 = vsub.f32 %v3478, %v4011
        %v4013 = vand.u32 %v4012, 4294901760
        %4014 = vmatmul.mubr.f32.gmra.mrb[0].mxu0 %v4013
        %v4015 = vpop.f32.mrb[0].mxu0
        %v4016 = vadd.f32 %v3884, %v4015
        %v4017 = vpop.f32.mrb[0].mxu0
        %4018 = vmatprep.mubr.f32.mxu0 0.0
        %v4019 = vand.u32 %v3481, 4294901760
        %v4020 = vsub.f32 %v3481, %v4019
        %v4021 = vand.u32 %v4020, 4294901760
        %4022 = vmatmul.mubr.f32.gmra.mrb[0].mxu0 %v4021
        %v4023 = vpop.f32.mrb[0].mxu0
        %v4024 = vadd.f32 %v3891, %v4023
        %v4025 = vpop.f32.mrb[0].mxu0
        %4026 = vdwg.mxu0
        %4027 = vmatprep.subr.mxu0 0.0
        %v4028 = vand.u32 %v2317, 4294901760
        %v4029 = vsub.f32 %v2317, %v4028
        %v4030 = vand.u32 %v4029, 4294901760
        %4031 = vmatpush1.msra.mxu0 %v4030
        %4032 = vmatprep.subr.mxu0 0.0
        %v4033 = vand.u32 %v2318, 4294901760
        %v4034 = vsub.f32 %v2318, %v4033
        %v4035 = vand.u32 %v4034, 4294901760
        %4036 = vmatpush1.msra.mxu0 %v4035
        %4037 = vmatprep.subr.mxu0 0.0
        %v4038 = vand.u32 %v2319, 4294901760
        %v4039 = vsub.f32 %v2319, %v4038
        %v4040 = vand.u32 %v4039, 4294901760
        %4041 = vmatpush1.msra.mxu0 %v4040
        %4042 = vmatprep.subr.mxu0 0.0
        %v4043 = vand.u32 %v2320, 4294901760
        %v4044 = vsub.f32 %v2320, %v4043
        %v4045 = vand.u32 %v4044, 4294901760
        %4046 = vmatpush1.msra.mxu0 %v4045
        %4047 = vmatprep.subr.mxu0 0.0
        %4048 = vmatpush1.msra.mxu0 0.0
        %4049 = vmatprep.subr.mxu0 0.0
        %4050 = vmatpush1.msra.mxu0 0.0
        %4051 = vmatprep.subr.mxu0 0.0
        %4052 = vmatpush1.msra.mxu0 0.0
        %4053 = vmatprep.subr.mxu0 0.0
        %4054 = vmatpush1.msra.mxu0 0.0
        %4055 = vmatprep.subr.mxu0 0.0
        %4056 = vmatpush1.msra.mxu0 0.0
        %4057 = vmatprep.subr.mxu0 0.0
        %4058 = vmatpush1.msra.mxu0 0.0
        %4059 = vmatprep.subr.mxu0 0.0
        %4060 = vmatpush1.msra.mxu0 0.0
        %4061 = vmatprep.subr.mxu0 0.0
        %4062 = vmatpush1.msra.mxu0 0.0
        %4063 = vmatprep.subr.mxu0 0.0
        %4064 = vmatpush1.msra.mxu0 0.0
        %4065 = vmatprep.subr.mxu0 0.0
        %4066 = vmatpush1.msra.mxu0 0.0
        %4067 = vmatprep.subr.mxu0 0.0
        %4068 = vmatpush1.msra.mxu0 0.0
        %4069 = vmatprep.subr.mxu0 0.0
        %4070 = vmatpush1.msra.mxu0 0.0
        %4071 = vmatprep.subr.mxu0 0.0
        %4072 = vmatpush1.msra.mxu0 0.0
        %4073 = vmatprep.subr.mxu0 0.0
        %4074 = vmatpush1.msra.mxu0 0.0
        %4075 = vmatprep.subr.mxu0 0.0
        %4076 = vmatpush1.msra.mxu0 0.0
        %4077 = vmatprep.subr.mxu0 0.0
        %4078 = vmatpush1.msra.mxu0 0.0
        %4079 = vmatprep.subr.mxu0 0.0
        %4080 = vmatpush1.msra.mxu0 0.0
        %4081 = vmatprep.subr.mxu0 0.0
        %4082 = vmatpush1.msra.mxu0 0.0
        %4083 = vmatprep.subr.mxu0 0.0
        %4084 = vmatpush1.msra.mxu0 0.0
        %4085 = vmatprep.subr.mxu0 0.0
        %4086 = vmatpush1.msra.mxu0 0.0
        %4087 = vmatprep.subr.mxu0 0.0
        %4088 = vmatpush1.msra.mxu0 0.0
        %4089 = vmatprep.subr.mxu0 0.0
        %4090 = vmatpush1.msra.mxu0 0.0
        %4091 = vmatprep.subr.mxu0 0.0
        %4092 = vmatpush1.msra.mxu0 0.0
        %4093 = vmatprep.subr.mxu0 0.0
        %4094 = vmatpush1.msra.mxu0 0.0
        %4095 = vmatprep.subr.mxu0 0.0
        %4096 = vmatpush1.msra.mxu0 0.0
        %4097 = vmatprep.subr.mxu0 0.0
        %4098 = vmatpush1.msra.mxu0 0.0
        %4099 = vmatprep.subr.mxu0 0.0
        %4100 = vmatpush1.msra.mxu0 0.0
        %4101 = vmatprep.subr.mxu0 0.0
        %4102 = vmatpush1.msra.mxu0 0.0
        %4103 = vmatprep.mubr.f32.mxu0 0.0
        %v4104 = vand.u32 %v3460, 4294901760
        %4105 = vmatmul.mubr.f32.gmra.mrb[0].mxu0 %v4104
        %v4106 = vpop.f32.mrb[0].mxu0
        %v4107 = vadd.f32 %v3968, %v4106
        %v4108 = vpop.f32.mrb[0].mxu0
        %4109 = vmatprep.mubr.f32.mxu0 0.0
        %v4110 = vand.u32 %v3463, 4294901760
        %4111 = vmatmul.mubr.f32.gmra.mrb[0].mxu0 %v4110
        %v4112 = vpop.f32.mrb[0].mxu0
        %v4113 = vadd.f32 %v3976, %v4112
        %v4114 = vpop.f32.mrb[0].mxu0
        %4115 = vmatprep.mubr.f32.mxu0 0.0
        %v4116 = vand.u32 %v3466, 4294901760
        %4117 = vmatmul.mubr.f32.gmra.mrb[0].mxu0 %v4116
        %v4118 = vpop.f32.mrb[0].mxu0
        %v4119 = vadd.f32 %v3984, %v4118
        %v4120 = vpop.f32.mrb[0].mxu0
        %4121 = vmatprep.mubr.f32.mxu0 0.0
        %v4122 = vand.u32 %v3469, 4294901760
        %4123 = vmatmul.mubr.f32.gmra.mrb[0].mxu0 %v4122
        %v4124 = vpop.f32.mrb[0].mxu0
        %v4125 = vadd.f32 %v3992, %v4124
        %v4126 = vpop.f32.mrb[0].mxu0
        %4127 = vmatprep.mubr.f32.mxu0 0.0
        %v4128 = vand.u32 %v3472, 4294901760
        %4129 = vmatmul.mubr.f32.gmra.mrb[0].mxu0 %v4128
        %v4130 = vpop.f32.mrb[0].mxu0
        %v4131 = vadd.f32 %v4000, %v4130
        %v4132 = vpop.f32.mrb[0].mxu0
        %4133 = vmatprep.mubr.f32.mxu0 0.0
        %v4134 = vand.u32 %v3475, 4294901760
        %4135 = vmatmul.mubr.f32.gmra.mrb[0].mxu0 %v4134
        %v4136 = vpop.f32.mrb[0].mxu0
        %v4137 = vadd.f32 %v4008, %v4136
        %v4138 = vpop.f32.mrb[0].mxu0
        %4139 = vmatprep.mubr.f32.mxu0 0.0
        %v4140 = vand.u32 %v3478, 4294901760
        %4141 = vmatmul.mubr.f32.gmra.mrb[0].mxu0 %v4140
        %v4142 = vpop.f32.mrb[0].mxu0
        %v4143 = vadd.f32 %v4016, %v4142
        %v4144 = vpop.f32.mrb[0].mxu0
        %4145 = vmatprep.mubr.f32.mxu0 0.0
        %v4146 = vand.u32 %v3481, 4294901760
        %4147 = vmatmul.mubr.f32.gmra.mrb[0].mxu0 %v4146
        %v4148 = vpop.f32.mrb[0].mxu0
        %v4149 = vadd.f32 %v4024, %v4148
        %v4150 = vpop.f32.mrb[0].mxu0
        %4151 = vdwg.mxu0
        %4152 = vmatprep.subr.mxu0 0.0
        %v4153 = vand.u32 %v2317, 4294901760
        %4154 = vmatpush1.msra.mxu0 %v4153
        %4155 = vmatprep.subr.mxu0 0.0
        %v4156 = vand.u32 %v2318, 4294901760
        %4157 = vmatpush1.msra.mxu0 %v4156
        %4158 = vmatprep.subr.mxu0 0.0
        %v4159 = vand.u32 %v2319, 4294901760
        %4160 = vmatpush1.msra.mxu0 %v4159
        %4161 = vmatprep.subr.mxu0 0.0
        %v4162 = vand.u32 %v2320, 4294901760
        %4163 = vmatpush1.msra.mxu0 %v4162
        %4164 = vmatprep.subr.mxu0 0.0
        %4165 = vmatpush1.msra.mxu0 0.0
        %4166 = vmatprep.subr.mxu0 0.0
        %4167 = vmatpush1.msra.mxu0 0.0
        %4168 = vmatprep.subr.mxu0 0.0
        %4169 = vmatpush1.msra.mxu0 0.0
        %4170 = vmatprep.subr.mxu0 0.0
        %4171 = vmatpush1.msra.mxu0 0.0
        %4172 = vmatprep.subr.mxu0 0.0
        %4173 = vmatpush1.msra.mxu0 0.0
        %4174 = vmatprep.subr.mxu0 0.0
        %4175 = vmatpush1.msra.mxu0 0.0
        %4176 = vmatprep.subr.mxu0 0.0
        %4177 = vmatpush1.msra.mxu0 0.0
        %4178 = vmatprep.subr.mxu0 0.0
        %4179 = vmatpush1.msra.mxu0 0.0
        %4180 = vmatprep.subr.mxu0 0.0
        %4181 = vmatpush1.msra.mxu0 0.0
        %4182 = vmatprep.subr.mxu0 0.0
        %4183 = vmatpush1.msra.mxu0 0.0
        %4184 = vmatprep.subr.mxu0 0.0
        %4185 = vmatpush1.msra.mxu0 0.0
        %4186 = vmatprep.subr.mxu0 0.0
        %4187 = vmatpush1.msra.mxu0 0.0
        %4188 = vmatprep.subr.mxu0 0.0
        %4189 = vmatpush1.msra.mxu0 0.0
        %4190 = vmatprep.subr.mxu0 0.0
        %4191 = vmatpush1.msra.mxu0 0.0
        %4192 = vmatprep.subr.mxu0 0.0
        %4193 = vmatpush1.msra.mxu0 0.0
        %4194 = vmatprep.subr.mxu0 0.0
        %4195 = vmatpush1.msra.mxu0 0.0
        %4196 = vmatprep.subr.mxu0 0.0
        %4197 = vmatpush1.msra.mxu0 0.0
        %4198 = vmatprep.subr.mxu0 0.0
        %4199 = vmatpush1.msra.mxu0 0.0
        %4200 = vmatprep.subr.mxu0 0.0
        %4201 = vmatpush1.msra.mxu0 0.0
        %4202 = vmatprep.subr.mxu0 0.0
        %4203 = vmatpush1.msra.mxu0 0.0
        %4204 = vmatprep.subr.mxu0 0.0
        %4205 = vmatpush1.msra.mxu0 0.0
        %4206 = vmatprep.subr.mxu0 0.0
        %4207 = vmatpush1.msra.mxu0 0.0
        %4208 = vmatprep.subr.mxu0 0.0
        %4209 = vmatpush1.msra.mxu0 0.0
        %4210 = vmatprep.subr.mxu0 0.0
        %4211 = vmatpush1.msra.mxu0 0.0
        %4212 = vmatprep.subr.mxu0 0.0
        %4213 = vmatpush1.msra.mxu0 0.0
        %4214 = vmatprep.subr.mxu0 0.0
        %4215 = vmatpush1.msra.mxu0 0.0
        %4216 = vmatprep.subr.mxu0 0.0
        %4217 = vmatpush1.msra.mxu0 0.0
        %4218 = vmatprep.subr.mxu0 0.0
        %4219 = vmatpush1.msra.mxu0 0.0
        %4220 = vmatprep.mubr.f32.mxu0 0.0
        %v4221 = vand.u32 %v3460, 4294901760
        %4222 = vmatmul.mubr.f32.gmra.mrb[0].mxu0 %v4221
        %v4223 = vpop.f32.mrb[0].mxu0
        %v4224 = vadd.f32 %v4107, %v4223
        %v4225 = vpop.f32.mrb[0].mxu0
        %4226 = vmatprep.mubr.f32.mxu0 0.0
        %v4227 = vand.u32 %v3463, 4294901760
        %4228 = vmatmul.mubr.f32.gmra.mrb[0].mxu0 %v4227
        %v4229 = vpop.f32.mrb[0].mxu0
        %v4230 = vadd.f32 %v4113, %v4229
        %v4231 = vpop.f32.mrb[0].mxu0
        %4232 = vmatprep.mubr.f32.mxu0 0.0
        %v4233 = vand.u32 %v3466, 4294901760
        %4234 = vmatmul.mubr.f32.gmra.mrb[0].mxu0 %v4233
        %v4235 = vpop.f32.mrb[0].mxu0
        %v4236 = vadd.f32 %v4119, %v4235
        %v4237 = vpop.f32.mrb[0].mxu0
        %4238 = vmatprep.mubr.f32.mxu0 0.0
        %v4239 = vand.u32 %v3469, 4294901760
        %4240 = vmatmul.mubr.f32.gmra.mrb[0].mxu0 %v4239
        %v4241 = vpop.f32.mrb[0].mxu0
        %v4242 = vadd.f32 %v4125, %v4241
        %v4243 = vpop.f32.mrb[0].mxu0
        %4244 = vmatprep.mubr.f32.mxu0 0.0
        %v4245 = vand.u32 %v3472, 4294901760
        %4246 = vmatmul.mubr.f32.gmra.mrb[0].mxu0 %v4245
        %v4247 = vpop.f32.mrb[0].mxu0
        %v4248 = vadd.f32 %v4131, %v4247
        %v4249 = vpop.f32.mrb[0].mxu0
        %4250 = vmatprep.mubr.f32.mxu0 0.0
        %v4251 = vand.u32 %v3475, 4294901760
        %4252 = vmatmul.mubr.f32.gmra.mrb[0].mxu0 %v4251
        %v4253 = vpop.f32.mrb[0].mxu0
        %v4254 = vadd.f32 %v4137, %v4253
        %v4255 = vpop.f32.mrb[0].mxu0
        %4256 = vmatprep.mubr.f32.mxu0 0.0
        %v4257 = vand.u32 %v3478, 4294901760
        %4258 = vmatmul.mubr.f32.gmra.mrb[0].mxu0 %v4257
        %v4259 = vpop.f32.mrb[0].mxu0
        %v4260 = vadd.f32 %v4143, %v4259
        %v4261 = vpop.f32.mrb[0].mxu0
        %4262 = vmatprep.mubr.f32.mxu0 0.0
        %v4263 = vand.u32 %v3481, 4294901760
        %4264 = vmatmul.mubr.f32.gmra.mrb[0].mxu0 %v4263
        %v4265 = vpop.f32.mrb[0].mxu0
        %v4266 = vadd.f32 %v4149, %v4265
        %v4267 = vpop.f32.mrb[0].mxu0
        %4268 = vdwg.mxu0
        %4269 = vst.msk [vmem:[%s327] sm:$0xff] %vm343, %v4224
        %4270 = vst.msk [vmem:[%s327 + $0x8] sm:$0xff] %vm343, %v4230
        %4271 = vst.msk [vmem:[%s327 + $0x10] sm:$0xff] %vm343, %v4236
        %4272 = vst.msk [vmem:[%s327 + $0x18] sm:$0xff] %vm343, %v4242
        %4273 = vst.msk [vmem:[%s327 + $0x20] sm:$0xff] %vm343, %v4248
        %4274 = vst.msk [vmem:[%s327 + $0x28] sm:$0xff] %vm343, %v4254
        %4275 = vst.msk [vmem:[%s327 + $0x30] sm:$0xff] %vm343, %v4260
        %4276 = vst.msk [vmem:[%s327 + $0x38] sm:$0xff] %vm343, %v4266
        %s4277 = sand.u32 %s149, 1
        %s4278 = scalar_lea.sflag [#allocation4], %s4277
        %s4279 = sand.u32 %s149, 1
        %s4280 = smul.addr %s4279, 64
        %s4281 = scalar_lea.vmem [#allocation11], %s4280
        // Predicated region
        $region61: #{tpu_custom_call.1} parent=39 // pred_check
          %p4282 = pneg %p159
        $region62: #{tpu_custom_call.1} parent=39 // pred_check_branch
          %4284 = sbr.rel (%p4282) target = $region64
        $region63: #{tpu_custom_call.1} parent=39 // pred_region
          %s4285 = smul.u32 4, %s26
          %s4287 = ssub.s32 1024, 1024
          %4288 = vsyncadd %s4278, %s4287
          %s4289 = smul.addr %s4285, 2
          %s4290 = smul.addr %s4289, 128
          %s4291 = scalar_lea.hbm %s5, %s4290
          %s4292 = sshll.u32 %s4281, 4
          %s4293 = int_to_ptr.vmem [resolvable:$true] %s4292
          %4298 = dma.vmem_to_hbm [thread:$0]  %s4293, 1024, %s4291, %s4278, 128, 128, 8
        $region64: #{tpu_custom_call.1} parent=39 // pred_fallthru
          _
      $region40: #{tpu_custom_call.1} parent=5 // pred_fallthru
        _
      %p4299 = scmp.le.s32.totalorder 2, %s21
      // Predicated region
      $region65: #{tpu_custom_call.1} parent=5 // pred_check
        %p4300 = pneg %p4299
      $region66: #{tpu_custom_call.1} parent=5 // pred_check_branch
        %4302 = sbr.rel (%p4300) target = $region68
      $region67: #{tpu_custom_call.1} parent=5 // pred_region
        %s4303 = ssub.s32 %s21, 2
        // Predicated region
        $region69: #{tpu_custom_call.1} parent=67 // pred_check
          %p4304 = pneg %p165
        $region70: #{tpu_custom_call.1} parent=67 // pred_check_branch
          %4306 = sbr.rel (%p4304) target = $region72
        $region71: #{tpu_custom_call.1} parent=67 // pred_region
          %s4307 = sand.u32 %s150, 1
          %s4308 = scalar_lea.sflag [#allocation4], %s4307
          %s4309 = sand.u32 %s150, 1
          %s4310 = smul.addr %s4309, 64
          %s4311 = scalar_lea.vmem [#allocation11], %s4310
          %4312 = dma.done %s4308, 1024
        $region72: #{tpu_custom_call.1} parent=67 // pred_fallthru
          _
      $region68: #{tpu_custom_call.1} parent=5 // pred_fallthru
        _
    $region6: #{tpu_custom_call.1} parent=1 // loop_footer
      %s25 = sadd.s32 1, %s21
    $region7: #{tpu_custom_call.1} parent=1 // loop_footer_branch
      %20 = sbr.rel target = $region3
    $region8: #{tpu_custom_call.1} parent=1 // loop_exit
      _
    %4313 = vsyncpa [#allocation3], 1
    %s4314 = scalar_lea.sflag [#allocation3], 1
    %4315 = vsyncpa %s4314, 1
    %4316 = vsyncpa [#allocation6], 1
    %s4317 = scalar_lea.sflag [#allocation6], 1
    %4318 = vsyncpa %s4317, 1
    %4319 = vsyncpa [#allocation9], 1
    %4320 = vsyncpa [#allocation4], 1
    %s4321 = scalar_lea.sflag [#allocation4], 1
    %4322 = vsyncpa %s4321, 1

</llo_original>
